<compile_context>
chip_gen: v7x
topology: tpu7x:2x2x1
jax: 0.10.0
libtpu: 0.0.40
codegen_flags: <defaults>
</compile_context>

<pallas_src>
import functools

import jax
import jax.numpy as jnp
from jax.experimental import pallas as pl
from jax.experimental.pallas import tpu as pltpu


# ----------------------------- generation-aware tiling -----------------------------

@functools.lru_cache(maxsize=None)
def _vmem_capacity_bytes():
    try:
        return int(pltpu.get_tpu_info().vmem_capacity_bytes)
    except Exception:
        return 64 << 20                       # conservative fallback (v7x-sized VMEM)


def _row_tile(M):
    # Full-array block when small (block == full dim is always legal); otherwise a
    # VMEM-capacity-aware multiple-of-8 row tile (v5e/v6e: 512, v7x: 256).
    cap = _vmem_capacity_bytes()
    target = 512 if cap >= (100 << 20) else 256
    return M if M <= target else target


def _compiler_params():
    cap = _vmem_capacity_bytes()
    limit = min(cap * 3 // 4, 96 << 20)       # raise v5e's 16 MiB scoped default
    return pltpu.CompilerParams(dimension_semantics=("parallel",),
                                vmem_limit_bytes=int(limit))


# ----------------------------- Pallas kernel A -----------------------------
# value = src @ Wv + bv (bf16 out) ; q = src + pos
# [attn_logits (k-major) | offsets_scaled] = q @ Wqa + bqa
# attn = segmented per-head softmax(attn_logits)      (one lane-dense store)

def _fused_qproj_kernel(src_ref, pos_ref, wv_ref, bv_ref, wqa_ref, bqa_ref, bseg_ref,
                        val_ref, attn_ref, off_ref, *, n_attn):
    src = src_ref[...]
    q = (src + pos_ref[...]).astype(jnp.bfloat16)            # with_pos_embed fused
    # value projection: bf16 MXU inputs, f32 accumulation, bf16 output stream.
    val = jnp.dot(src.astype(jnp.bfloat16), wv_ref[...],
                  preferred_element_type=jnp.float32) + bv_ref[...]
    val_ref[...] = val.astype(val_ref.dtype)
    # Single fused lane-dense projection: [attn logits | pre-normalized offsets].
    y = jnp.dot(q, wqa_ref[...], preferred_element_type=jnp.float32) + bqa_ref[...]
    # TODO(synk): at production sizes, pad n_attn to a multiple of 128 lanes so this
    # split / the two stores are fully lane-aligned (unmasked vst).
    off_ref[...] = y[:, n_attn:]
    logits = y[:, :n_attn]
    # Segmented softmax: a global per-row max is a valid shift for every head's
    # softmax; per-head denominators via one tiny 0/1 segment matmul; EUP reciprocal.
    m = jnp.max(logits, axis=-1, keepdims=True)
    e = jnp.exp(logits - m)
    denom = jnp.dot(e, bseg_ref[...], preferred_element_type=jnp.float32)
    attn_ref[...] = e * pl.reciprocal(denom, approx=True)


def fused_query_projection(src2d, pos2d, w_value, b_value, w_qa, b_qa, bseg,
                           n_heads, n_lp):
    M, C = src2d.shape
    NQA = w_qa.shape[1]
    n_attn = n_heads * n_lp
    n_off = NQA - n_attn
    TM = _row_tile(M)
    flops = 2 * M * C * (C + NQA) + 2 * M * n_attn * n_attn + 4 * M * n_attn
    bytes_accessed = (8 * M * C                      # src + pos (f32 in)
                      + 2 * M * C                    # value (bf16 out)
                      + 4 * M * (n_attn + n_off)     # attn + offsets (f32 out)
                      + 2 * C * (C + NQA)            # bf16 weights
                      + 4 * (C + NQA + n_attn * n_attn))
    return pl.pallas_call(
        functools.partial(_fused_qproj_kernel, n_attn=n_attn),
        out_shape=(jax.ShapeDtypeStruct((M, C), jnp.bfloat16),
                   jax.ShapeDtypeStruct((M, n_attn), jnp.float32),
                   jax.ShapeDtypeStruct((M, n_off), jnp.float32)),
        grid=(pl.cdiv(M, TM),),
        in_specs=[
            pl.BlockSpec((TM, C), lambda i: (i, 0)),
            pl.BlockSpec((TM, C), lambda i: (i, 0)),
            pl.BlockSpec((C, C), lambda i: (0, 0)),
            pl.BlockSpec((1, C), lambda i: (0, 0)),
            pl.BlockSpec((C, NQA), lambda i: (0, 0)),
            pl.BlockSpec((1, NQA), lambda i: (0, 0)),
            pl.BlockSpec((n_attn, n_attn), lambda i: (0, 0)),
        ],
        out_specs=(pl.BlockSpec((TM, C), lambda i: (i, 0)),
                   pl.BlockSpec((TM, n_attn), lambda i: (i, 0)),
                   pl.BlockSpec((TM, n_off), lambda i: (i, 0))),
        compiler_params=_compiler_params(),
        cost_estimate=pl.CostEstimate(flops=flops, transcendentals=M * n_attn,
                                      bytes_accessed=bytes_accessed),
    )(src2d, pos2d, w_value, b_value.reshape(1, C), w_qa, b_qa.reshape(1, NQA), bseg)


# ----------------------------- Pallas kernel B -----------------------------
# acc = sum_k (attn_k @ Ehead) * v_k        (chunked; only (TM,C) temporaries live)
# attn_out = acc @ w_out + b_out            (single CxC projection)
# x = LN1(src + attn_out) ; x = LN2(x + FFN(x))      (dropout = identity, eval mode)

def _fused_attn_ffn_kernel(v_ref, attn_ref, src_ref, ehead_ref, wout_ref, bout_ref,
                           g1_ref, bn1_ref, w1_ref, bf1_ref, w2_ref, bf2_ref,
                           g2_ref, bn2_ref, out_ref, *, n_heads, n_k, d_model, eps):
    attn = attn_ref[...].astype(jnp.bfloat16)                 # (TM, nH*K), k-major
    ehead = ehead_ref[...]                                    # (nH, C), 0/1 bf16
    acc = jnp.zeros((attn.shape[0], d_model), jnp.float32)
    for k in range(n_k):                                      # static unroll, K small
        a_exp = jnp.dot(attn[:, k * n_heads:(k + 1) * n_heads], ehead,
                        preferred_element_type=jnp.float32)   # (TM, C)
        v_k = v_ref[:, k * d_model:(k + 1) * d_model]         # bf16 chunk load
        acc = acc + a_exp * v_k.astype(jnp.float32)
    attn_out = jnp.dot(acc.astype(jnp.bfloat16), wout_ref[...],
                       preferred_element_type=jnp.float32) + bout_ref[...]
    # residual + LayerNorm1
    x = src_ref[...] + attn_out
    mu = jnp.mean(x, axis=-1, keepdims=True)
    var = jnp.mean((x - mu) ** 2, axis=-1, keepdims=True)
    x = (x - mu) * jax.lax.rsqrt(var + eps) * g1_ref[...] + bn1_ref[...]
    # FFN (linear -> relu -> linear); intermediate h never leaves VMEM.
    h = jnp.dot(x.astype(jnp.bfloat16), w1_ref[...],
                preferred_element_type=jnp.float32) + bf1_ref[...]
    h = jnp.maximum(h, 0.0)
    y = jnp.dot(h.astype(jnp.bfloat16), w2_ref[...],
                preferred_element_type=jnp.float32) + bf2_ref[...]
    # residual + LayerNorm2
    x = x + y
    mu = jnp.mean(x, axis=-1, keepdims=True)
    var = jnp.mean((x - mu) ** 2, axis=-1, keepdims=True)
    out_ref[...] = ((x - mu) * jax.lax.rsqrt(var + eps) * g2_ref[...] + bn2_ref[...]
                    ).astype(out_ref.dtype)


def fused_attn_out_ffn(v_flat, attn, src2d, ehead, w_out, b_out,
                       g1, b1, w_ffn1, b_ffn1, w_ffn2, b_ffn2, g2, b2, eps=1e-5):
    M, KC = v_flat.shape
    n_attn = attn.shape[1]
    C = src2d.shape[1]
    d_ffn = w_ffn1.shape[1]
    n_heads = ehead.shape[0]
    n_k = KC // C
    TM = _row_tile(M)
    flops = (2 * M * (n_attn * C + C * C + C * d_ffn + d_ffn * C)
             + 2 * M * KC + 10 * M * (3 * C + d_ffn))
    bytes_accessed = (2 * M * KC                              # v_flat (bf16 in)
                      + 4 * M * (n_attn + 2 * C)              # attn, src in; out
                      + 2 * (n_heads * C + C * C + 2 * C * d_ffn)   # bf16 weights
                      + 4 * (8 * C + d_ffn))
    return pl.pallas_call(
        functools.partial(_fused_attn_ffn_kernel, n_heads=n_heads, n_k=n_k,
                          d_model=C, eps=eps),
        out_shape=jax.ShapeDtypeStruct((M, C), jnp.float32),
        grid=(pl.cdiv(M, TM),),
        in_specs=[
            pl.BlockSpec((TM, KC), lambda i: (i, 0)),
            pl.BlockSpec((TM, n_attn), lambda i: (i, 0)),
            pl.BlockSpec((TM, C), lambda i: (i, 0)),
            pl.BlockSpec((n_heads, C), lambda i: (0, 0)),
            pl.BlockSpec((C, C), lambda i: (0, 0)),
            pl.BlockSpec((1, C), lambda i: (0, 0)),
            pl.BlockSpec((1, C), lambda i: (0, 0)),
            pl.BlockSpec((1, C), lambda i: (0, 0)),
            pl.BlockSpec((C, d_ffn), lambda i: (0, 0)),
            pl.BlockSpec((1, d_ffn), lambda i: (0, 0)),
            pl.BlockSpec((d_ffn, C), lambda i: (0, 0)),
            pl.BlockSpec((1, C), lambda i: (0, 0)),
            pl.BlockSpec((1, C), lambda i: (0, 0)),
            pl.BlockSpec((1, C), lambda i: (0, 0)),
        ],
        out_specs=pl.BlockSpec((TM, C), lambda i: (i, 0)),
        compiler_params=_compiler_params(),
        cost_estimate=pl.CostEstimate(flops=flops, transcendentals=2 * M,
                                      bytes_accessed=bytes_accessed),
    )(v_flat, attn, src2d, ehead, w_out, b_out.reshape(1, C),
      g1.reshape(1, C), b1.reshape(1, C), w_ffn1, b_ffn1.reshape(1, d_ffn),
      w_ffn2, b_ffn2.reshape(1, C), g2.reshape(1, C), b2.reshape(1, C))


# ----------------------------- plain-JAX glue -----------------------------

def get_reference_points(spatial_shapes_list, valid_ratios):
    # One-time per forward; plain JAX (lane-width-3 tensor, not on the per-layer path).
    refs = []
    for lvl, (D_, H_, W_) in enumerate(spatial_shapes_list):
        z = jnp.linspace(0.5, D_ - 0.5, D_, dtype=jnp.float32)
        y = jnp.linspace(0.5, H_ - 0.5, H_, dtype=jnp.float32)
        x = jnp.linspace(0.5, W_ - 0.5, W_, dtype=jnp.float32)
        Zg, Yg, Xg = jnp.meshgrid(z, y, x, indexing="ij")
        rz = Zg.reshape(-1)[None] / (valid_ratios[:, None, lvl, 2] * D_)
        ry = Yg.reshape(-1)[None] / (valid_ratios[:, None, lvl, 1] * H_)
        rx = Xg.reshape(-1)[None] / (valid_ratios[:, None, lvl, 0] * W_)
        refs.append(jnp.stack((rx, ry, rz), -1))               # (B, S_l, 3)
    ref = jnp.concatenate(refs, axis=1)                        # (B, S, 3)
    return ref[:, :, None, :] * valid_ratios[:, None]          # (B, S, L, 3)


def _trilinear_sample(value_l, loc, D, H, W):
    """grid_sample equivalent (trilinear, zeros padding, align_corners=False).

    value_l: (B, S_l, nH, Dh) bf16, flat index z*H*W + y*W + x
    loc:     (B, S, nH, P, 3) normalized [0,1] in (x, y, z) order
    returns  (B, S, P, nH, Dh) f32 -- already in the layout kernel B consumes.
    """
    B, S_l, nH, Dh = value_l.shape
    _, S, _, P, _ = loc.shape
    loc_t = jnp.transpose(loc, (0, 1, 3, 2, 4))                # (B, S, P, nH, 3)
    ux = loc_t[..., 0] * W - 0.5
    uy = loc_t[..., 1] * H - 0.5
    uz = loc_t[..., 2] * D - 0.5
    x0f, y0f, z0f = jnp.floor(ux), jnp.floor(uy), jnp.floor(uz)
    fx, fy, fz = ux - x0f, uy - y0f, uz - z0f
    x0, y0, z0 = x0f.astype(jnp.int32), y0f.astype(jnp.int32), z0f.astype(jnp.int32)

    # TODO(synk): this data-dependent 8-corner gather is the remaining plain-JAX
    # bottleneck at production sizes; next step is a Pallas kernel with
    # memory_space=pl.ANY on value + manual per-level double-buffered DMA.
    out = jnp.zeros((B, S, P, nH, Dh), jnp.float32)
    for dz in (0, 1):
        wz = fz if dz == 1 else 1.0 - fz
        zi = z0 + dz
        for dy in (0, 1):
            wy = fy if dy == 1 else 1.0 - fy
            yi = y0 + dy
            for dx in (0, 1):
                wx = fx if dx == 1 else 1.0 - fx
                xi = x0 + dx
                w = wx * wy * wz                               # (B, S, P, nH) f32
                valid = ((xi >= 0) & (xi < W) & (yi >= 0) & (yi < H)
                         & (zi >= 0) & (zi < D)).astype(jnp.float32)
                xc = jnp.clip(xi, 0, W - 1)
                yc = jnp.clip(yi, 0, H - 1)
                zc = jnp.clip(zi, 0, D - 1)
                flat = (zc * H + yc) * W + xc                  # (B, S, P, nH)
                idx = flat.reshape(B, S * P, nH, 1)
                g = jnp.take_along_axis(value_l, idx, axis=1)  # (B, S*P, nH, Dh) bf16
                g = g.reshape(B, S, P, nH, Dh)
                out = out + (w * valid)[..., None] * g
    return out


# ----------------------------- parameter prep (hoisted, one-time) -----------------------------

def prepare_layer_params(p, spatial_shapes_list, n_heads, n_levels, n_points):
    """One-time (parameter-load-time) preparation, hoisted off the forward path.

    * attention-weight columns permuted to k-major (k = l*P + p) so the segmented
      softmax (kernel A) and chunked aggregation (kernel B) stay contiguous,
    * per-level offset normalizer (1/W, 1/H, 1/D) folded into the offset columns
      (exact: the projection is linear),
    * attention + offset projections concatenated into one fused matmul,
    * all weight matrices pre-cast to bf16 once (biases / LN params stay f32).
    """
    C = p["w_value"].shape[0]
    Dh = C // n_heads
    K = n_levels * n_points
    n_attn = n_heads * K
    ss = jnp.asarray(spatial_shapes_list, jnp.float32)              # (L,3) = (D,H,W)
    inv_norm = 1.0 / jnp.stack([ss[:, 2], ss[:, 1], ss[:, 0]], -1)  # (1/W, 1/H, 1/D)
    inv_cols = jnp.broadcast_to(inv_norm[None, :, None, :],
                                (n_heads, n_levels, n_points, 3)).reshape(-1)
    # head-major (h*K + k) -> k-major (k*nH + h)
    w_attn_km = p["w_attn"].reshape(C, n_heads, K).transpose(0, 2, 1).reshape(C, n_attn)
    b_attn_km = p["b_attn"].reshape(n_heads, K).T.reshape(-1)
    w_qa = jnp.concatenate([w_attn_km, p["w_offset"] * inv_cols[None, :]], axis=1)
    b_qa = jnp.concatenate([b_attn_km, p["b_offset"] * inv_cols], axis=0)
    # Per-head broadcast matrix: ehead[h, h*Dh + d] = 1 (0/1 entries exact in bf16).
    ehead = (jnp.arange(C)[None, :] // Dh == jnp.arange(n_heads)[:, None]
             ).astype(jnp.bfloat16)
    # Segment matrix for the per-head softmax denominators (k-major layout).
    bseg = (jnp.arange(n_attn)[:, None] % n_heads
            == jnp.arange(n_attn)[None, :] % n_heads).astype(jnp.float32)
    return {
        "w_value": p["w_value"].astype(jnp.bfloat16), "b_value": p["b_value"],
        "w_qa": w_qa.astype(jnp.bfloat16), "b_qa": b_qa,
        "bseg": bseg, "ehead": ehead,
        "w_out": p["w_out"].astype(jnp.bfloat16), "b_out": p["b_out"],
        "w_ffn1": p["w_ffn1"].astype(jnp.bfloat16), "b_ffn1": p["b_ffn1"],
        "w_ffn2": p["w_ffn2"].astype(jnp.bfloat16), "b_ffn2": p["b_ffn2"],
        "norm1_g": p["norm1_g"], "norm1_b": p["norm1_b"],
        "norm2_g": p["norm2_g"], "norm2_b": p["norm2_b"],
    }


# ----------------------------- layer / encoder forward -----------------------------

def encoder_layer_forward(pp, src, pos, reference_points, spatial_shapes_list,
                          level_start_index, n_heads, n_levels, n_points):
    B, S, C = src.shape
    Dh = C // n_heads
    K = n_levels * n_points
    M = B * S

    src2d = src.reshape(M, C)
    pos2d = pos.reshape(M, C)
    value, attn, offs = fused_query_projection(
        src2d, pos2d, pp["w_value"], pp["b_value"], pp["w_qa"], pp["b_qa"],
        pp["bseg"], n_heads, K)
    value = value.reshape(B, S, n_heads, Dh)                   # bf16
    # TODO(synk): padding_mask is None in this configuration; masking of padded value
    # tokens before sampling is skipped.

    offs = offs.reshape(B, S, n_heads, n_levels, n_points, 3)  # already / (W,H,D)
    sampling_locations = reference_points[:, :, None, :, None, :] + offs

    sampled_levels = []
    for lvl, (D_, H_, W_) in enumerate(spatial_shapes_list):
        start = level_start_index[lvl]
        S_l = D_ * H_ * W_
        value_l = value[:, start:start + S_l]                  # (B, S_l, nH, Dh) bf16
        loc_l = sampling_locations[:, :, :, lvl]               # (B, S, nH, P, 3)
        sampled_levels.append(_trilinear_sample(value_l, loc_l, D_, H_, W_))
    # (B, S, L, P, nH, Dh) -> (M, K*C): lands directly in the layout kernel B consumes
    # (k = l*P + p, c = h*Dh + d); bf16 halves the dominant v_flat stream.
    sampled = jnp.stack(sampled_levels, axis=2)
    v_flat = sampled.reshape(M, K * C).astype(jnp.bfloat16)

    out2d = fused_attn_out_ffn(v_flat, attn, src2d, pp["ehead"], pp["w_out"],
                               pp["b_out"], pp["norm1_g"], pp["norm1_b"],
                               pp["w_ffn1"], pp["b_ffn1"], pp["w_ffn2"], pp["b_ffn2"],
                               pp["norm2_g"], pp["norm2_b"])
    return out2d.reshape(B, S, C)


def deformable_transformer_encoder_forward(prepared_layers, src, valid_ratios, pos, *,
                                           spatial_shapes_list, level_start_index,
                                           n_heads, n_points):
    n_levels = len(spatial_shapes_list)
    reference_points = get_reference_points(spatial_shapes_list, valid_ratios)
    output = src
    for pp in prepared_layers:
        output = encoder_layer_forward(pp, output, pos, reference_points,
                                       spatial_shapes_list, level_start_index,
                                       n_heads, n_levels, n_points)
    return output


# ----------------------------- parameter init -----------------------------

def init_layer_params(key, C, n_heads, n_levels, n_points, d_ffn):
    # TODO(synk): MSDeformAttn's specialized init (grid-pattern offset bias, xavier) is
    # not replicated; random init is used for this perf/correctness-of-shape test.
    ks = jax.random.split(key, 6)
    s = 0.02
    return {
        "w_value": jax.random.normal(ks[0], (C, C), jnp.float32) * s,
        "b_value": jnp.zeros((C,), jnp.float32),
        "w_offset": jax.random.normal(ks[1], (C, n_heads * n_levels * n_points * 3),
                                      jnp.float32) * s,
        "b_offset": jnp.zeros((n_heads * n_levels * n_points * 3,), jnp.float32),
        "w_attn": jax.random.normal(ks[2], (C, n_heads * n_levels * n_points),
                                    jnp.float32) * s,
        "b_attn": jnp.zeros((n_heads * n_levels * n_points,), jnp.float32),
        "w_out": jax.random.normal(ks[3], (C, C), jnp.float32) * s,
        "b_out": jnp.zeros((C,), jnp.float32),
        "w_ffn1": jax.random.normal(ks[4], (C, d_ffn), jnp.float32) * s,
        "b_ffn1": jnp.zeros((d_ffn,), jnp.float32),
        "w_ffn2": jax.random.normal(ks[5], (d_ffn, C), jnp.float32) * s,
        "b_ffn2": jnp.zeros((C,), jnp.float32),
        "norm1_g": jnp.ones((C,), jnp.float32),
        "norm1_b": jnp.zeros((C,), jnp.float32),
        "norm2_g": jnp.ones((C,), jnp.float32),
        "norm2_b": jnp.zeros((C,), jnp.float32),
    }


# ----------------------------- main -----------------------------

if __name__ == "__main__":
    B = 2
    C = 32          # d_model
    n_heads = 4
    n_points = 4
    d_ffn = 64
    num_layers = 2
    spatial_shapes_list = [(2, 4, 4), (1, 2, 2)]     # (D, H, W) per level
    n_levels = len(spatial_shapes_list)
    level_start_index = [0]
    for (D_, H_, W_) in spatial_shapes_list[:-1]:
        level_start_index.append(level_start_index[-1] + D_ * H_ * W_)
    S = sum(D_ * H_ * W_ for (D_, H_, W_) in spatial_shapes_list)   # 36

    key = jax.random.PRNGKey(0)
    k_src, k_pos, k_vr, k_par = jax.random.split(key, 4)
    src = jax.random.normal(k_src, (B, S, C), jnp.float32)
    pos = jax.random.normal(k_pos, (B, S, C), jnp.float32)
    valid_ratios = jax.random.uniform(k_vr, (B, n_levels, 3), jnp.float32,
                                      minval=0.7, maxval=1.0)

    layer_keys = jax.random.split(k_par, num_layers)
    layer_params = [init_layer_params(k, C, n_heads, n_levels, n_points, d_ffn)
                    for k in layer_keys]
    # Hoisted one-time prep (weight concat / normalizer fold / bf16 casts).
    prepared_layers = [prepare_layer_params(p, spatial_shapes_list,
                                            n_heads, n_levels, n_points)
                       for p in layer_params]

    forward = jax.jit(functools.partial(
        deformable_transformer_encoder_forward,
        spatial_shapes_list=tuple(spatial_shapes_list),
        level_start_index=tuple(level_start_index),
        n_heads=n_heads, n_points=n_points))

    out = forward(prepared_layers, src, valid_ratios, pos)
    jax.block_until_ready(out)
    assert out.shape == (B, S, C) and out.dtype == jnp.float32
    assert bool(jnp.all(jnp.isfinite(out)))
    print("KERNEL_OK")
</pallas_src>

<mosaic_0001>
module attributes {stable_mosaic.version = 11 : i64} {
  func.func @_fused_qproj_kernel(%arg0: i32, %arg1: memref<72x32xf32, #tpu.memory_space<vmem>>, %arg2: memref<72x32xf32, #tpu.memory_space<vmem>>, %arg3: memref<32x32xbf16, #tpu.memory_space<vmem>>, %arg4: memref<1x32xf32, #tpu.memory_space<vmem>>, %arg5: memref<32x128xbf16, #tpu.memory_space<vmem>>, %arg6: memref<1x128xf32, #tpu.memory_space<vmem>>, %arg7: memref<32x32xf32, #tpu.memory_space<vmem>>, %arg8: memref<72x32xbf16, #tpu.memory_space<vmem>>, %arg9: memref<72x32xf32, #tpu.memory_space<vmem>>, %arg10: memref<72x96xf32, #tpu.memory_space<vmem>>) attributes {dimension_semantics = [#tpu.dimension_semantics<parallel>], iteration_bounds = array<i64: 1>, scalar_prefetch = 0 : i64, scratch_operands = 0 : i64, tpu.core_type = #tpu.core_type<tc>, window_params = [{transform_indices = @transform_0, window_bounds = array<i64: 72, 32>}, {transform_indices = @transform_1, window_bounds = array<i64: 72, 32>}, {pipeline_mode = #tpu.pipeline_mode<synchronous>, transform_indices = @transform_2, window_bounds = array<i64: 32, 32>}, {pipeline_mode = #tpu.pipeline_mode<synchronous>, transform_indices = @transform_3, window_bounds = array<i64: 1, 32>}, {pipeline_mode = #tpu.pipeline_mode<synchronous>, transform_indices = @transform_4, window_bounds = array<i64: 32, 128>}, {pipeline_mode = #tpu.pipeline_mode<synchronous>, transform_indices = @transform_5, window_bounds = array<i64: 1, 128>}, {pipeline_mode = #tpu.pipeline_mode<synchronous>, transform_indices = @transform_6, window_bounds = array<i64: 32, 32>}, {transform_indices = @transform_7, window_bounds = array<i64: 72, 32>}, {transform_indices = @transform_8, window_bounds = array<i64: 72, 32>}, {transform_indices = @transform_9, window_bounds = array<i64: 72, 96>}]} {
    %c0 = arith.constant 0 : index
    %c0_0 = arith.constant 0 : index
    %0 = vector.load %arg1[%c0, %c0_0] : memref<72x32xf32, #tpu.memory_space<vmem>>, vector<72x32xf32>
    %c0_1 = arith.constant 0 : index
    %c0_2 = arith.constant 0 : index
    %1 = vector.load %arg2[%c0_1, %c0_2] : memref<72x32xf32, #tpu.memory_space<vmem>>, vector<72x32xf32>
    %2 = arith.addf %0, %1 : vector<72x32xf32>
    %3 = arith.truncf %2 : vector<72x32xf32> to vector<72x32xbf16>
    %4 = arith.truncf %0 : vector<72x32xf32> to vector<72x32xbf16>
    %c0_3 = arith.constant 0 : index
    %c0_4 = arith.constant 0 : index
    %5 = vector.load %arg3[%c0_3, %c0_4] : memref<32x32xbf16, #tpu.memory_space<vmem>>, vector<32x32xbf16>
    %cst = arith.constant dense<0.000000e+00> : vector<72x32xf32>
    %6 = tpu.matmul %4, %5, %cst {dimension_numbers = #tpu.dot_dimension_numbers<[1], [0], [0], [1], [0, 0, 1, 1], [], []>} : vector<72x32xbf16>, vector<32x32xbf16>, vector<72x32xf32> -> vector<72x32xf32>
    %c0_5 = arith.constant 0 : index
    %c0_6 = arith.constant 0 : index
    %7 = vector.load %arg4[%c0_5, %c0_6] : memref<1x32xf32, #tpu.memory_space<vmem>>, vector<1x32xf32>
    %8 = vector.broadcast %7 : vector<1x32xf32> to vector<72x32xf32>
    %9 = arith.addf %6, %8 : vector<72x32xf32>
    %10 = arith.truncf %9 : vector<72x32xf32> to vector<72x32xbf16>
    %c0_7 = arith.constant 0 : index
    %c0_8 = arith.constant 0 : index
    %11 = vector.load %arg8[%c0_7, %c0_8] : memref<72x32xbf16, #tpu.memory_space<vmem>>, vector<72x32xbf16>
    tpu.vector_store %arg8[%c0_7, %c0_8], %10 {strides = array<i32>} : memref<72x32xbf16, #tpu.memory_space<vmem>>, vector<72x32xbf16>,
    %c0_9 = arith.constant 0 : index
    %c0_10 = arith.constant 0 : index
    %12 = vector.load %arg5[%c0_9, %c0_10] : memref<32x128xbf16, #tpu.memory_space<vmem>>, vector<32x128xbf16>
    %cst_11 = arith.constant dense<0.000000e+00> : vector<72x128xf32>
    %13 = tpu.matmul %3, %12, %cst_11 {dimension_numbers = #tpu.dot_dimension_numbers<[1], [0], [0], [1], [0, 0, 1, 1], [], []>} : vector<72x32xbf16>, vector<32x128xbf16>, vector<72x128xf32> -> vector<72x128xf32>
    %c0_12 = arith.constant 0 : index
    %c0_13 = arith.constant 0 : index
    %14 = vector.load %arg6[%c0_12, %c0_13] : memref<1x128xf32, #tpu.memory_space<vmem>>, vector<1x128xf32>
    %15 = vector.broadcast %14 : vector<1x128xf32> to vector<72x128xf32>
    %16 = arith.addf %13, %15 : vector<72x128xf32>
    %17 = vector.extract_strided_slice %16 {offsets = [0, 32], sizes = [72, 96], strides = [1, 1]} : vector<72x128xf32> to vector<72x96xf32>
    %c0_14 = arith.constant 0 : index
    %c0_15 = arith.constant 0 : index
    %18 = vector.load %arg10[%c0_14, %c0_15] : memref<72x96xf32, #tpu.memory_space<vmem>>, vector<72x96xf32>
    tpu.vector_store %arg10[%c0_14, %c0_15], %17 {strides = array<i32>} : memref<72x96xf32, #tpu.memory_space<vmem>>, vector<72x96xf32>,
    %19 = vector.extract_strided_slice %16 {offsets = [0, 0], sizes = [72, 32], strides = [1, 1]} : vector<72x128xf32> to vector<72x32xf32>
    %cst_16 = arith.constant dense<0xFF800000> : vector<72xf32>
    %20 = vector.multi_reduction <maximumf>, %19, %cst_16 [1] : vector<72x32xf32> to vector<72xf32>
    %21 = vector.shape_cast %20 : vector<72xf32> to vector<72x1xf32>
    %22 = vector.broadcast %21 : vector<72x1xf32> to vector<72x32xf32>
    %23 = arith.subf %19, %22 : vector<72x32xf32>
    %24 = math.exp %23 : vector<72x32xf32>
    %c0_17 = arith.constant 0 : index
    %c0_18 = arith.constant 0 : index
    %25 = vector.load %arg7[%c0_17, %c0_18] : memref<32x32xf32, #tpu.memory_space<vmem>>, vector<32x32xf32>
    %cst_19 = arith.constant dense<0.000000e+00> : vector<72x32xf32>
    %26 = tpu.matmul %24, %25, %cst_19 {dimension_numbers = #tpu.dot_dimension_numbers<[1], [0], [0], [1], [0, 0, 1, 1], [], []>} : vector<72x32xf32>, vector<32x32xf32>, vector<72x32xf32> -> vector<72x32xf32>
    %27 = tpu.reciprocal %26 {approx = true} : vector<72x32xf32> -> vector<72x32xf32>
    %28 = arith.mulf %24, %27 : vector<72x32xf32>
    %c0_20 = arith.constant 0 : index
    %c0_21 = arith.constant 0 : index
    %29 = vector.load %arg9[%c0_20, %c0_21] : memref<72x32xf32, #tpu.memory_space<vmem>>, vector<72x32xf32>
    tpu.vector_store %arg9[%c0_20, %c0_21], %28 {strides = array<i32>} : memref<72x32xf32, #tpu.memory_space<vmem>>, vector<72x32xf32>,
    return
  }
  func.func @transform_0(%arg0: i32) -> (i32, i32) {
    %c0_i32 = arith.constant 0 : i32
    %c0_i32_0 = arith.constant 0 : i32
    return %arg0, %c0_i32 : i32, i32
  }
  func.func @transform_1(%arg0: i32) -> (i32, i32) {
    %c0_i32 = arith.constant 0 : i32
    %c0_i32_0 = arith.constant 0 : i32
    return %arg0, %c0_i32 : i32, i32
  }
  func.func @transform_2(%arg0: i32) -> (i32, i32) {
    %c0_i32 = arith.constant 0 : i32
    %c0_i32_0 = arith.constant 0 : i32
    %c0_i32_1 = arith.constant 0 : i32
    return %c0_i32, %c0_i32_0 : i32, i32
  }
  func.func @transform_3(%arg0: i32) -> (i32, i32) {
    %c0_i32 = arith.constant 0 : i32
    %c0_i32_0 = arith.constant 0 : i32
    %c0_i32_1 = arith.constant 0 : i32
    return %c0_i32, %c0_i32_0 : i32, i32
  }
  func.func @transform_4(%arg0: i32) -> (i32, i32) {
    %c0_i32 = arith.constant 0 : i32
    %c0_i32_0 = arith.constant 0 : i32
    %c0_i32_1 = arith.constant 0 : i32
    return %c0_i32, %c0_i32_0 : i32, i32
  }
  func.func @transform_5(%arg0: i32) -> (i32, i32) {
    %c0_i32 = arith.constant 0 : i32
    %c0_i32_0 = arith.constant 0 : i32
    %c0_i32_1 = arith.constant 0 : i32
    return %c0_i32, %c0_i32_0 : i32, i32
  }
  func.func @transform_6(%arg0: i32) -> (i32, i32) {
    %c0_i32 = arith.constant 0 : i32
    %c0_i32_0 = arith.constant 0 : i32
    %c0_i32_1 = arith.constant 0 : i32
    return %c0_i32, %c0_i32_0 : i32, i32
  }
  func.func @transform_7(%arg0: i32) -> (i32, i32) {
    %c0_i32 = arith.constant 0 : i32
    %c0_i32_0 = arith.constant 0 : i32
    return %arg0, %c0_i32 : i32, i32
  }
  func.func @transform_8(%arg0: i32) -> (i32, i32) {
    %c0_i32 = arith.constant 0 : i32
    %c0_i32_0 = arith.constant 0 : i32
    return %arg0, %c0_i32 : i32, i32
  }
  func.func @transform_9(%arg0: i32) -> (i32, i32) {
    %c0_i32 = arith.constant 0 : i32
    %c0_i32_0 = arith.constant 0 : i32
    return %arg0, %c0_i32 : i32, i32
  }
}

module attributes {stable_mosaic.version = 11 : i64} {
  func.func @_fused_attn_ffn_kernel(%arg0: i32, %arg1: memref<72x256xbf16, #tpu.memory_space<vmem>>, %arg2: memref<72x32xf32, #tpu.memory_space<vmem>>, %arg3: memref<72x32xf32, #tpu.memory_space<vmem>>, %arg4: memref<4x32xbf16, #tpu.memory_space<vmem>>, %arg5: memref<32x32xbf16, #tpu.memory_space<vmem>>, %arg6: memref<1x32xf32, #tpu.memory_space<vmem>>, %arg7: memref<1x32xf32, #tpu.memory_space<vmem>>, %arg8: memref<1x32xf32, #tpu.memory_space<vmem>>, %arg9: memref<32x64xbf16, #tpu.memory_space<vmem>>, %arg10: memref<1x64xf32, #tpu.memory_space<vmem>>, %arg11: memref<64x32xbf16, #tpu.memory_space<vmem>>, %arg12: memref<1x32xf32, #tpu.memory_space<vmem>>, %arg13: memref<1x32xf32, #tpu.memory_space<vmem>>, %arg14: memref<1x32xf32, #tpu.memory_space<vmem>>, %arg15: memref<72x32xf32, #tpu.memory_space<vmem>>) attributes {dimension_semantics = [#tpu.dimension_semantics<parallel>], iteration_bounds = array<i64: 1>, scalar_prefetch = 0 : i64, scratch_operands = 0 : i64, tpu.core_type = #tpu.core_type<tc>, window_params = [{transform_indices = @transform_0, window_bounds = array<i64: 72, 256>}, {transform_indices = @transform_1, window_bounds = array<i64: 72, 32>}, {transform_indices = @transform_2, window_bounds = array<i64: 72, 32>}, {pipeline_mode = #tpu.pipeline_mode<synchronous>, transform_indices = @transform_3, window_bounds = array<i64: 4, 32>}, {pipeline_mode = #tpu.pipeline_mode<synchronous>, transform_indices = @transform_4, window_bounds = array<i64: 32, 32>}, {pipeline_mode = #tpu.pipeline_mode<synchronous>, transform_indices = @transform_5, window_bounds = array<i64: 1, 32>}, {pipeline_mode = #tpu.pipeline_mode<synchronous>, transform_indices = @transform_6, window_bounds = array<i64: 1, 32>}, {pipeline_mode = #tpu.pipeline_mode<synchronous>, transform_indices = @transform_7, window_bounds = array<i64: 1, 32>}, {pipeline_mode = #tpu.pipeline_mode<synchronous>, transform_indices = @transform_8, window_bounds = array<i64: 32, 64>}, {pipeline_mode = #tpu.pipeline_mode<synchronous>, transform_indices = @transform_9, window_bounds = array<i64: 1, 64>}, {pipeline_mode = #tpu.pipeline_mode<synchronous>, transform_indices = @transform_10, window_bounds = array<i64: 64, 32>}, {pipeline_mode = #tpu.pipeline_mode<synchronous>, transform_indices = @transform_11, window_bounds = array<i64: 1, 32>}, {pipeline_mode = #tpu.pipeline_mode<synchronous>, transform_indices = @transform_12, window_bounds = array<i64: 1, 32>}, {pipeline_mode = #tpu.pipeline_mode<synchronous>, transform_indices = @transform_13, window_bounds = array<i64: 1, 32>}, {transform_indices = @transform_14, window_bounds = array<i64: 72, 32>}]} {
    %c0 = arith.constant 0 : index
    %c0_0 = arith.constant 0 : index
    %0 = vector.load %arg2[%c0, %c0_0] : memref<72x32xf32, #tpu.memory_space<vmem>>, vector<72x32xf32>
    %1 = arith.truncf %0 : vector<72x32xf32> to vector<72x32xbf16>
    %c0_1 = arith.constant 0 : index
    %c0_2 = arith.constant 0 : index
    %2 = vector.load %arg4[%c0_1, %c0_2] : memref<4x32xbf16, #tpu.memory_space<vmem>>, vector<4x32xbf16>
    %cst = arith.constant 0.000000e+00 : f32
    %3 = vector.broadcast %cst : f32 to vector<72x32xf32>
    %4 = vector.extract_strided_slice %1 {offsets = [0, 0], sizes = [72, 4], strides = [1, 1]} : vector<72x32xbf16> to vector<72x4xbf16>
    %cst_3 = arith.constant dense<0.000000e+00> : vector<72x32xf32>
    %5 = tpu.matmul %4, %2, %cst_3 {dimension_numbers = #tpu.dot_dimension_numbers<[1], [0], [0], [1], [0, 0, 1, 1], [], []>} : vector<72x4xbf16>, vector<4x32xbf16>, vector<72x32xf32> -> vector<72x32xf32>
    %c0_4 = arith.constant 0 : index
    %c0_5 = arith.constant 0 : index
    %6 = vector.load %arg1[%c0_4, %c0_5] : memref<72x256xbf16, #tpu.memory_space<vmem>>, vector<72x32xbf16>
    %7 = arith.extf %6 : vector<72x32xbf16> to vector<72x32xf32>
    %8 = arith.mulf %5, %7 : vector<72x32xf32>
    %9 = arith.addf %3, %8 : vector<72x32xf32>
    %10 = vector.extract_strided_slice %1 {offsets = [0, 4], sizes = [72, 4], strides = [1, 1]} : vector<72x32xbf16> to vector<72x4xbf16>
    %cst_6 = arith.constant dense<0.000000e+00> : vector<72x32xf32>
    %11 = tpu.matmul %10, %2, %cst_6 {dimension_numbers = #tpu.dot_dimension_numbers<[1], [0], [0], [1], [0, 0, 1, 1], [], []>} : vector<72x4xbf16>, vector<4x32xbf16>, vector<72x32xf32> -> vector<72x32xf32>
    %c0_7 = arith.constant 0 : index
    %c32 = arith.constant 32 : index
    %12 = vector.load %arg1[%c0_7, %c32] : memref<72x256xbf16, #tpu.memory_space<vmem>>, vector<72x32xbf16>
    %13 = arith.extf %12 : vector<72x32xbf16> to vector<72x32xf32>
    %14 = arith.mulf %11, %13 : vector<72x32xf32>
    %15 = arith.addf %9, %14 : vector<72x32xf32>
    %16 = vector.extract_strided_slice %1 {offsets = [0, 8], sizes = [72, 4], strides = [1, 1]} : vector<72x32xbf16> to vector<72x4xbf16>
    %cst_8 = arith.constant dense<0.000000e+00> : vector<72x32xf32>
    %17 = tpu.matmul %16, %2, %cst_8 {dimension_numbers = #tpu.dot_dimension_numbers<[1], [0], [0], [1], [0, 0, 1, 1], [], []>} : vector<72x4xbf16>, vector<4x32xbf16>, vector<72x32xf32> -> vector<72x32xf32>
    %c0_9 = arith.constant 0 : index
    %c64 = arith.constant 64 : index
    %18 = vector.load %arg1[%c0_9, %c64] : memref<72x256xbf16, #tpu.memory_space<vmem>>, vector<72x32xbf16>
    %19 = arith.extf %18 : vector<72x32xbf16> to vector<72x32xf32>
    %20 = arith.mulf %17, %19 : vector<72x32xf32>
    %21 = arith.addf %15, %20 : vector<72x32xf32>
    %22 = vector.extract_strided_slice %1 {offsets = [0, 12], sizes = [72, 4], strides = [1, 1]} : vector<72x32xbf16> to vector<72x4xbf16>
    %cst_10 = arith.constant dense<0.000000e+00> : vector<72x32xf32>
    %23 = tpu.matmul %22, %2, %cst_10 {dimension_numbers = #tpu.dot_dimension_numbers<[1], [0], [0], [1], [0, 0, 1, 1], [], []>} : vector<72x4xbf16>, vector<4x32xbf16>, vector<72x32xf32> -> vector<72x32xf32>
    %c0_11 = arith.constant 0 : index
    %c96 = arith.constant 96 : index
    %24 = vector.load %arg1[%c0_11, %c96] : memref<72x256xbf16, #tpu.memory_space<vmem>>, vector<72x32xbf16>
    %25 = arith.extf %24 : vector<72x32xbf16> to vector<72x32xf32>
    %26 = arith.mulf %23, %25 : vector<72x32xf32>
    %27 = arith.addf %21, %26 : vector<72x32xf32>
    %28 = vector.extract_strided_slice %1 {offsets = [0, 16], sizes = [72, 4], strides = [1, 1]} : vector<72x32xbf16> to vector<72x4xbf16>
    %cst_12 = arith.constant dense<0.000000e+00> : vector<72x32xf32>
    %29 = tpu.matmul %28, %2, %cst_12 {dimension_numbers = #tpu.dot_dimension_numbers<[1], [0], [0], [1], [0, 0, 1, 1], [], []>} : vector<72x4xbf16>, vector<4x32xbf16>, vector<72x32xf32> -> vector<72x32xf32>
    %c0_13 = arith.constant 0 : index
    %c128 = arith.constant 128 : index
    %30 = vector.load %arg1[%c0_13, %c128] : memref<72x256xbf16, #tpu.memory_space<vmem>>, vector<72x32xbf16>
    %31 = arith.extf %30 : vector<72x32xbf16> to vector<72x32xf32>
    %32 = arith.mulf %29, %31 : vector<72x32xf32>
    %33 = arith.addf %27, %32 : vector<72x32xf32>
    %34 = vector.extract_strided_slice %1 {offsets = [0, 20], sizes = [72, 4], strides = [1, 1]} : vector<72x32xbf16> to vector<72x4xbf16>
    %cst_14 = arith.constant dense<0.000000e+00> : vector<72x32xf32>
    %35 = tpu.matmul %34, %2, %cst_14 {dimension_numbers = #tpu.dot_dimension_numbers<[1], [0], [0], [1], [0, 0, 1, 1], [], []>} : vector<72x4xbf16>, vector<4x32xbf16>, vector<72x32xf32> -> vector<72x32xf32>
    %c0_15 = arith.constant 0 : index
    %c160 = arith.constant 160 : index
    %36 = vector.load %arg1[%c0_15, %c160] : memref<72x256xbf16, #tpu.memory_space<vmem>>, vector<72x32xbf16>
    %37 = arith.extf %36 : vector<72x32xbf16> to vector<72x32xf32>
    %38 = arith.mulf %35, %37 : vector<72x32xf32>
    %39 = arith.addf %33, %38 : vector<72x32xf32>
    %40 = vector.extract_strided_slice %1 {offsets = [0, 24], sizes = [72, 4], strides = [1, 1]} : vector<72x32xbf16> to vector<72x4xbf16>
    %cst_16 = arith.constant dense<0.000000e+00> : vector<72x32xf32>
    %41 = tpu.matmul %40, %2, %cst_16 {dimension_numbers = #tpu.dot_dimension_numbers<[1], [0], [0], [1], [0, 0, 1, 1], [], []>} : vector<72x4xbf16>, vector<4x32xbf16>, vector<72x32xf32> -> vector<72x32xf32>
    %c0_17 = arith.constant 0 : index
    %c192 = arith.constant 192 : index
    %42 = vector.load %arg1[%c0_17, %c192] : memref<72x256xbf16, #tpu.memory_space<vmem>>, vector<72x32xbf16>
    %43 = arith.extf %42 : vector<72x32xbf16> to vector<72x32xf32>
    %44 = arith.mulf %41, %43 : vector<72x32xf32>
    %45 = arith.addf %39, %44 : vector<72x32xf32>
    %46 = vector.extract_strided_slice %1 {offsets = [0, 28], sizes = [72, 4], strides = [1, 1]} : vector<72x32xbf16> to vector<72x4xbf16>
    %cst_18 = arith.constant dense<0.000000e+00> : vector<72x32xf32>
    %47 = tpu.matmul %46, %2, %cst_18 {dimension_numbers = #tpu.dot_dimension_numbers<[1], [0], [0], [1], [0, 0, 1, 1], [], []>} : vector<72x4xbf16>, vector<4x32xbf16>, vector<72x32xf32> -> vector<72x32xf32>
    %c0_19 = arith.constant 0 : index
    %c224 = arith.constant 224 : index
    %48 = vector.load %arg1[%c0_19, %c224] : memref<72x256xbf16, #tpu.memory_space<vmem>>, vector<72x32xbf16>
    %49 = arith.extf %48 : vector<72x32xbf16> to vector<72x32xf32>
    %50 = arith.mulf %47, %49 : vector<72x32xf32>
    %51 = arith.addf %45, %50 : vector<72x32xf32>
    %52 = arith.truncf %51 : vector<72x32xf32> to vector<72x32xbf16>
    %c0_20 = arith.constant 0 : index
    %c0_21 = arith.constant 0 : index
    %53 = vector.load %arg5[%c0_20, %c0_21] : memref<32x32xbf16, #tpu.memory_space<vmem>>, vector<32x32xbf16>
    %cst_22 = arith.constant dense<0.000000e+00> : vector<72x32xf32>
    %54 = tpu.matmul %52, %53, %cst_22 {dimension_numbers = #tpu.dot_dimension_numbers<[1], [0], [0], [1], [0, 0, 1, 1], [], []>} : vector<72x32xbf16>, vector<32x32xbf16>, vector<72x32xf32> -> vector<72x32xf32>
    %c0_23 = arith.constant 0 : index
    %c0_24 = arith.constant 0 : index
    %55 = vector.load %arg6[%c0_23, %c0_24] : memref<1x32xf32, #tpu.memory_space<vmem>>, vector<1x32xf32>
    %56 = vector.broadcast %55 : vector<1x32xf32> to vector<72x32xf32>
    %57 = arith.addf %54, %56 : vector<72x32xf32>
    %c0_25 = arith.constant 0 : index
    %c0_26 = arith.constant 0 : index
    %58 = vector.load %arg3[%c0_25, %c0_26] : memref<72x32xf32, #tpu.memory_space<vmem>>, vector<72x32xf32>
    %59 = arith.addf %58, %57 : vector<72x32xf32>
    %cst_27 = arith.constant dense<0.000000e+00> : vector<72xf32>
    %60 = vector.multi_reduction <add>, %59, %cst_27 [1] : vector<72x32xf32> to vector<72xf32>
    %61 = vector.shape_cast %60 : vector<72xf32> to vector<72x1xf32>
    %cst_28 = arith.constant 3.200000e+01 : f32
    %62 = vector.broadcast %cst_28 : f32 to vector<72x1xf32>
    %63 = arith.divf %61, %62 : vector<72x1xf32>
    %64 = vector.broadcast %63 : vector<72x1xf32> to vector<72x32xf32>
    %65 = arith.subf %59, %64 : vector<72x32xf32>
    %66 = arith.mulf %65, %65 : vector<72x32xf32>
    %cst_29 = arith.constant dense<0.000000e+00> : vector<72xf32>
    %67 = vector.multi_reduction <add>, %66, %cst_29 [1] : vector<72x32xf32> to vector<72xf32>
    %68 = vector.shape_cast %67 : vector<72xf32> to vector<72x1xf32>
    %cst_30 = arith.constant 3.200000e+01 : f32
    %69 = vector.broadcast %cst_30 : f32 to vector<72x1xf32>
    %70 = arith.divf %68, %69 : vector<72x1xf32>
    %71 = vector.broadcast %63 : vector<72x1xf32> to vector<72x32xf32>
    %72 = arith.subf %59, %71 : vector<72x32xf32>
    %cst_31 = arith.constant 9.99999974E-6 : f32
    %73 = vector.broadcast %cst_31 : f32 to vector<72x1xf32>
    %74 = arith.addf %70, %73 : vector<72x1xf32>
    %75 = math.rsqrt %74 : vector<72x1xf32>
    %76 = vector.broadcast %75 : vector<72x1xf32> to vector<72x32xf32>
    %77 = arith.mulf %72, %76 : vector<72x32xf32>
    %c0_32 = arith.constant 0 : index
    %c0_33 = arith.constant 0 : index
    %78 = vector.load %arg7[%c0_32, %c0_33] : memref<1x32xf32, #tpu.memory_space<vmem>>, vector<1x32xf32>
    %79 = vector.broadcast %78 : vector<1x32xf32> to vector<72x32xf32>
    %80 = arith.mulf %77, %79 : vector<72x32xf32>
    %c0_34 = arith.constant 0 : index
    %c0_35 = arith.constant 0 : index
    %81 = vector.load %arg8[%c0_34, %c0_35] : memref<1x32xf32, #tpu.memory_space<vmem>>, vector<1x32xf32>
    %82 = vector.broadcast %81 : vector<1x32xf32> to vector<72x32xf32>
    %83 = arith.addf %80, %82 : vector<72x32xf32>
    %84 = arith.truncf %83 : vector<72x32xf32> to vector<72x32xbf16>
    %c0_36 = arith.constant 0 : index
    %c0_37 = arith.constant 0 : index
    %85 = vector.load %arg9[%c0_36, %c0_37] : memref<32x64xbf16, #tpu.memory_space<vmem>>, vector<32x64xbf16>
    %cst_38 = arith.constant dense<0.000000e+00> : vector<72x64xf32>
    %86 = tpu.matmul %84, %85, %cst_38 {dimension_numbers = #tpu.dot_dimension_numbers<[1], [0], [0], [1], [0, 0, 1, 1], [], []>} : vector<72x32xbf16>, vector<32x64xbf16>, vector<72x64xf32> -> vector<72x64xf32>
    %c0_39 = arith.constant 0 : index
    %c0_40 = arith.constant 0 : index
    %87 = vector.load %arg10[%c0_39, %c0_40] : memref<1x64xf32, #tpu.memory_space<vmem>>, vector<1x64xf32>
    %88 = vector.broadcast %87 : vector<1x64xf32> to vector<72x64xf32>
    %89 = arith.addf %86, %88 : vector<72x64xf32>
    %cst_41 = arith.constant 0.000000e+00 : f32
    %90 = vector.broadcast %cst_41 : f32 to vector<72x64xf32>
    %91 = arith.maximumf %89, %90 : vector<72x64xf32>
    %92 = arith.truncf %91 : vector<72x64xf32> to vector<72x64xbf16>
    %c0_42 = arith.constant 0 : index
    %c0_43 = arith.constant 0 : index
    %93 = vector.load %arg11[%c0_42, %c0_43] : memref<64x32xbf16, #tpu.memory_space<vmem>>, vector<64x32xbf16>
    %cst_44 = arith.constant dense<0.000000e+00> : vector<72x32xf32>
    %94 = tpu.matmul %92, %93, %cst_44 {dimension_numbers = #tpu.dot_dimension_numbers<[1], [0], [0], [1], [0, 0, 1, 1], [], []>} : vector<72x64xbf16>, vector<64x32xbf16>, vector<72x32xf32> -> vector<72x32xf32>
    %c0_45 = arith.constant 0 : index
    %c0_46 = arith.constant 0 : index
    %95 = vector.load %arg12[%c0_45, %c0_46] : memref<1x32xf32, #tpu.memory_space<vmem>>, vector<1x32xf32>
    %96 = vector.broadcast %95 : vector<1x32xf32> to vector<72x32xf32>
    %97 = arith.addf %94, %96 : vector<72x32xf32>
    %98 = arith.addf %83, %97 : vector<72x32xf32>
    %cst_47 = arith.constant dense<0.000000e+00> : vector<72xf32>
    %99 = vector.multi_reduction <add>, %98, %cst_47 [1] : vector<72x32xf32> to vector<72xf32>
    %100 = vector.shape_cast %99 : vector<72xf32> to vector<72x1xf32>
    %cst_48 = arith.constant 3.200000e+01 : f32
    %101 = vector.broadcast %cst_48 : f32 to vector<72x1xf32>
    %102 = arith.divf %100, %101 : vector<72x1xf32>
    %103 = vector.broadcast %102 : vector<72x1xf32> to vector<72x32xf32>
    %104 = arith.subf %98, %103 : vector<72x32xf32>
    %105 = arith.mulf %104, %104 : vector<72x32xf32>
    %cst_49 = arith.constant dense<0.000000e+00> : vector<72xf32>
    %106 = vector.multi_reduction <add>, %105, %cst_49 [1] : vector<72x32xf32> to vector<72xf32>
    %107 = vector.shape_cast %106 : vector<72xf32> to vector<72x1xf32>
    %cst_50 = arith.constant 3.200000e+01 : f32
    %108 = vector.broadcast %cst_50 : f32 to vector<72x1xf32>
    %109 = arith.divf %107, %108 : vector<72x1xf32>
    %110 = vector.broadcast %102 : vector<72x1xf32> to vector<72x32xf32>
    %111 = arith.subf %98, %110 : vector<72x32xf32>
    %cst_51 = arith.constant 9.99999974E-6 : f32
    %112 = vector.broadcast %cst_51 : f32 to vector<72x1xf32>
    %113 = arith.addf %109, %112 : vector<72x1xf32>
    %114 = math.rsqrt %113 : vector<72x1xf32>
    %115 = vector.broadcast %114 : vector<72x1xf32> to vector<72x32xf32>
    %116 = arith.mulf %111, %115 : vector<72x32xf32>
    %c0_52 = arith.constant 0 : index
    %c0_53 = arith.constant 0 : index
    %117 = vector.load %arg13[%c0_52, %c0_53] : memref<1x32xf32, #tpu.memory_space<vmem>>, vector<1x32xf32>
    %118 = vector.broadcast %117 : vector<1x32xf32> to vector<72x32xf32>
    %119 = arith.mulf %116, %118 : vector<72x32xf32>
    %c0_54 = arith.constant 0 : index
    %c0_55 = arith.constant 0 : index
    %120 = vector.load %arg14[%c0_54, %c0_55] : memref<1x32xf32, #tpu.memory_space<vmem>>, vector<1x32xf32>
    %121 = vector.broadcast %120 : vector<1x32xf32> to vector<72x32xf32>
    %122 = arith.addf %119, %121 : vector<72x32xf32>
    %c0_56 = arith.constant 0 : index
    %c0_57 = arith.constant 0 : index
    %123 = vector.load %arg15[%c0_56, %c0_57] : memref<72x32xf32, #tpu.memory_space<vmem>>, vector<72x32xf32>
    tpu.vector_store %arg15[%c0_56, %c0_57], %122 {strides = array<i32>} : memref<72x32xf32, #tpu.memory_space<vmem>>, vector<72x32xf32>,
    return
  }
  func.func @transform_0(%arg0: i32) -> (i32, i32) {
    %c0_i32 = arith.constant 0 : i32
    %c0_i32_0 = arith.constant 0 : i32
    return %arg0, %c0_i32 : i32, i32
  }
  func.func @transform_1(%arg0: i32) -> (i32, i32) {
    %c0_i32 = arith.constant 0 : i32
    %c0_i32_0 = arith.constant 0 : i32
    return %arg0, %c0_i32 : i32, i32
  }
  func.func @transform_2(%arg0: i32) -> (i32, i32) {
    %c0_i32 = arith.constant 0 : i32
    %c0_i32_0 = arith.constant 0 : i32
    return %arg0, %c0_i32 : i32, i32
  }
  func.func @transform_3(%arg0: i32) -> (i32, i32) {
    %c0_i32 = arith.constant 0 : i32
    %c0_i32_0 = arith.constant 0 : i32
    %c0_i32_1 = arith.constant 0 : i32
    return %c0_i32, %c0_i32_0 : i32, i32
  }
  func.func @transform_4(%arg0: i32) -> (i32, i32) {
    %c0_i32 = arith.constant 0 : i32
    %c0_i32_0 = arith.constant 0 : i32
    %c0_i32_1 = arith.constant 0 : i32
    return %c0_i32, %c0_i32_0 : i32, i32
  }
  func.func @transform_5(%arg0: i32) -> (i32, i32) {
    %c0_i32 = arith.constant 0 : i32
    %c0_i32_0 = arith.constant 0 : i32
    %c0_i32_1 = arith.constant 0 : i32
    return %c0_i32, %c0_i32_0 : i32, i32
  }
  func.func @transform_6(%arg0: i32) -> (i32, i32) {
    %c0_i32 = arith.constant 0 : i32
    %c0_i32_0 = arith.constant 0 : i32
    %c0_i32_1 = arith.constant 0 : i32
    return %c0_i32, %c0_i32_0 : i32, i32
  }
  func.func @transform_7(%arg0: i32) -> (i32, i32) {
    %c0_i32 = arith.constant 0 : i32
    %c0_i32_0 = arith.constant 0 : i32
    %c0_i32_1 = arith.constant 0 : i32
    return %c0_i32, %c0_i32_0 : i32, i32
  }
  func.func @transform_8(%arg0: i32) -> (i32, i32) {
    %c0_i32 = arith.constant 0 : i32
    %c0_i32_0 = arith.constant 0 : i32
    %c0_i32_1 = arith.constant 0 : i32
    return %c0_i32, %c0_i32_0 : i32, i32
  }
  func.func @transform_9(%arg0: i32) -> (i32, i32) {
    %c0_i32 = arith.constant 0 : i32
    %c0_i32_0 = arith.constant 0 : i32
    %c0_i32_1 = arith.constant 0 : i32
    return %c0_i32, %c0_i32_0 : i32, i32
  }
  func.func @transform_10(%arg0: i32) -> (i32, i32) {
    %c0_i32 = arith.constant 0 : i32
    %c0_i32_0 = arith.constant 0 : i32
    %c0_i32_1 = arith.constant 0 : i32
    return %c0_i32, %c0_i32_0 : i32, i32
  }
  func.func @transform_11(%arg0: i32) -> (i32, i32) {
    %c0_i32 = arith.constant 0 : i32
    %c0_i32_0 = arith.constant 0 : i32
    %c0_i32_1 = arith.constant 0 : i32
    return %c0_i32, %c0_i32_0 : i32, i32
  }
  func.func @transform_12(%arg0: i32) -> (i32, i32) {
    %c0_i32 = arith.constant 0 : i32
    %c0_i32_0 = arith.constant 0 : i32
    %c0_i32_1 = arith.constant 0 : i32
    return %c0_i32, %c0_i32_0 : i32, i32
  }
  func.func @transform_13(%arg0: i32) -> (i32, i32) {
    %c0_i32 = arith.constant 0 : i32
    %c0_i32_0 = arith.constant 0 : i32
    %c0_i32_1 = arith.constant 0 : i32
    return %c0_i32, %c0_i32_0 : i32, i32
  }
  func.func @transform_14(%arg0: i32) -> (i32, i32) {
    %c0_i32 = arith.constant 0 : i32
    %c0_i32_0 = arith.constant 0 : i32
    return %arg0, %c0_i32 : i32, i32
  }
}

</mosaic_0001>

<llo_original>
// kernel: deformable_transformer_encoder_forward.4
$region0: #{deformable_transformer_encoder_forward.4}
  #allocation0 [shape = 'u32[]', space=smem, size = 0x4, offset = 0x4, fixed_abs, tag = 'smem constant byte address 0x4 - core index']
  #allocation1 [shape = 'u32[144,128]{1,0:T(1,128)}', space=vmem, size = 0x12000, scoped, tag = 'internal scratch']
  %s0 = inlined_call_operand.vmem [shape: f32[72,32], index: 0, kind: input, shape index: {}]
  %s1 = inlined_call_operand.vmem [shape: f32[72,32], index: 1, kind: input, shape index: {}]
  %s2 = inlined_call_operand.vmem [shape: bf16[32,32], index: 2, kind: input, shape index: {}]
  %s3 = inlined_call_operand.vmem [shape: f32[1,32], index: 3, kind: input, shape index: {}]
  %s4 = inlined_call_operand.vmem [shape: bf16[32,128], index: 4, kind: input, shape index: {}]
  %s5 = inlined_call_operand.vmem [shape: f32[1,128], index: 5, kind: input, shape index: {}]
  %s6 = inlined_call_operand.vmem [shape: f32[32,32], index: 6, kind: input, shape index: {}]
  %s7 = inlined_call_operand.vmem [shape: bf16[72,32], index: 7, kind: output, shape index: {0}]
  %s8 = inlined_call_operand.vmem [shape: f32[72,32], index: 8, kind: output, shape index: {1}]
  %s9 = inlined_call_operand.vmem [shape: f32[72,96], index: 9, kind: output, shape index: {2}]
  %10 = xla_tuple %s7, %s8, %s9
  %s11 = sld [smem:[#allocation0]]
  $region54: #{deformable_transformer_encoder_forward.4} parent=0
    _
  %s13 = ssub.s32 1, %s11
  %s14 = scalar_select 0, %s13, %s11
  // Predicated region
  $region2: #{deformable_transformer_encoder_forward.4} parent=0 // pred_check
    _
  $region3: #{deformable_transformer_encoder_forward.4} parent=0 // pred_check_branch
    %16 = sbr.rel (0) target = $region5
  $region4: #{deformable_transformer_encoder_forward.4} parent=0 // pred_region
    _
  $region5: #{deformable_transformer_encoder_forward.4} parent=0 // pred_fallthru
    _
  // Predicated region
  $region6: #{deformable_transformer_encoder_forward.4} parent=0 // pred_check
    _
  $region7: #{deformable_transformer_encoder_forward.4} parent=0 // pred_check_branch
    %18 = sbr.rel (0) target = $region9
  $region8: #{deformable_transformer_encoder_forward.4} parent=0 // pred_region
    _
  $region9: #{deformable_transformer_encoder_forward.4} parent=0 // pred_fallthru
    _
  // Predicated region
  $region10: #{deformable_transformer_encoder_forward.4} parent=0 // pred_check
    _
  $region11: #{deformable_transformer_encoder_forward.4} parent=0 // pred_check_branch
    %20 = sbr.rel (0) target = $region13
  $region12: #{deformable_transformer_encoder_forward.4} parent=0 // pred_region
    _
  $region13: #{deformable_transformer_encoder_forward.4} parent=0 // pred_fallthru
    _
  // Predicated region
  $region14: #{deformable_transformer_encoder_forward.4} parent=0 // pred_check
    _
  $region15: #{deformable_transformer_encoder_forward.4} parent=0 // pred_check_branch
    %22 = sbr.rel (0) target = $region17
  $region16: #{deformable_transformer_encoder_forward.4} parent=0 // pred_region
    _
  $region17: #{deformable_transformer_encoder_forward.4} parent=0 // pred_fallthru
    _
  // Predicated region
  $region18: #{deformable_transformer_encoder_forward.4} parent=0 // pred_check
    _
  $region19: #{deformable_transformer_encoder_forward.4} parent=0 // pred_check_branch
    %24 = sbr.rel (0) target = $region21
  $region20: #{deformable_transformer_encoder_forward.4} parent=0 // pred_region
    _
  $region21: #{deformable_transformer_encoder_forward.4} parent=0 // pred_fallthru
    _
  // Predicated region
  $region22: #{deformable_transformer_encoder_forward.4} parent=0 // pred_check
    _
  $region23: #{deformable_transformer_encoder_forward.4} parent=0 // pred_check_branch
    %26 = sbr.rel (0) target = $region25
  $region24: #{deformable_transformer_encoder_forward.4} parent=0 // pred_region
    _
  $region25: #{deformable_transformer_encoder_forward.4} parent=0 // pred_fallthru
    _
  // Predicated region
  $region26: #{deformable_transformer_encoder_forward.4} parent=0 // pred_check
    _
  $region27: #{deformable_transformer_encoder_forward.4} parent=0 // pred_check_branch
    %28 = sbr.rel (0) target = $region29
  $region28: #{deformable_transformer_encoder_forward.4} parent=0 // pred_region
    _
  $region29: #{deformable_transformer_encoder_forward.4} parent=0 // pred_fallthru
    _
  %v30 = vld [vmem:[%s0] sm:$0xff]
  %v31 = vld [vmem:[%s0 + $0x8] sm:$0xff]
  %v32 = vld [vmem:[%s0 + $0x10] sm:$0xff]
  %v33 = vld [vmem:[%s0 + $0x18] sm:$0xff]
  %v34 = vld [vmem:[%s0 + $0x20] sm:$0xff]
  %v35 = vld [vmem:[%s0 + $0x28] sm:$0xff]
  %v36 = vld [vmem:[%s0 + $0x30] sm:$0xff]
  %v37 = vld [vmem:[%s0 + $0x38] sm:$0xff]
  %v38 = vld [vmem:[%s0 + $0x40] sm:$0xff]
  %v39 = vld [vmem:[%s1] sm:$0xff]
  %v40 = vld [vmem:[%s1 + $0x8] sm:$0xff]
  %v41 = vld [vmem:[%s1 + $0x10] sm:$0xff]
  %v42 = vld [vmem:[%s1 + $0x18] sm:$0xff]
  %v43 = vld [vmem:[%s1 + $0x20] sm:$0xff]
  %v44 = vld [vmem:[%s1 + $0x28] sm:$0xff]
  %v45 = vld [vmem:[%s1 + $0x30] sm:$0xff]
  %v46 = vld [vmem:[%s1 + $0x38] sm:$0xff]
  %v47 = vld [vmem:[%s1 + $0x40] sm:$0xff]
  %v48 = vadd.f32 %v30, %v39
  %v49 = vadd.f32 %v31, %v40
  %v50 = vadd.f32 %v32, %v41
  %v51 = vadd.f32 %v33, %v42
  %v52 = vadd.f32 %v34, %v43
  %v53 = vadd.f32 %v35, %v44
  %v54 = vadd.f32 %v36, %v45
  %v55 = vadd.f32 %v37, %v46
  %v56 = vadd.f32 %v38, %v47
  %v57 = vpack.c.bf16 %v49, %v48
  %v58 = vpack.c.bf16 %v51, %v50
  %v59 = vpack.c.bf16 %v53, %v52
  %v60 = vpack.c.bf16 %v55, %v54
  %v61 = vpack.c.bf16 %v56, %v56
  %v62 = vpack.c.bf16 %v31, %v30
  %v63 = vpack.c.bf16 %v33, %v32
  %v64 = vpack.c.bf16 %v35, %v34
  %v65 = vpack.c.bf16 %v37, %v36
  %v66 = vpack.c.bf16 %v38, %v38
  %v67 = vld [vmem:[%s2] sm:$0xf]
  %v68 = vld [vmem:[%s2 + $0x4] sm:$0xf]
  %v69 = vld [vmem:[%s2 + $0x8] sm:$0xf]
  %v70 = vld [vmem:[%s2 + $0xc] sm:$0xf]
  %v71 = vld [vmem:[%s3] sm:$0x1]
  %v73 = vlaneseq
  %v74 = vshrl.u32 %v73, 7
  %v75 = vsub.s32 0, %v74
  %v76 = vrot.slane %v71, %v75
  %v82 = vunpack.c.l.b16 %v67
  %v83 = vunpack.c.l.b16 %v68
  %v84 = vunpack.c.l.b16 %v69
  %v85 = vunpack.c.l.b16 %v70
  %v86 = vpack.c.b16 %v83, %v82
  %v87 = vpack.c.b16 %v85, %v84
  %vm90 = vcmask 261120
  %v92 = vsel %vm90, %v62, 0
  %v95 = vsel %vm90, %v63, 0
  %v98 = vsel %vm90, %v64, 0
  %v101 = vsel %vm90, %v65, 0
  %v104 = vsel %vm90, %v66, 0
  %106 = vmatprep.subr.bf16.mxu0 0
  %107 = vmatpush1.bf16.msra.mxu0 %v86
  %108 = vmatprep.subr.bf16.mxu0 0
  %109 = vmatpush1.bf16.msra.mxu0 %v87
  %110 = vmatprep.subr.bf16.mxu0 0
  %111 = vmatpush1.bf16.msra.mxu0 0
  %112 = vmatprep.subr.bf16.mxu0 0
  %113 = vmatpush1.bf16.msra.mxu0 0
  %114 = vmatprep.subr.bf16.mxu0 0
  %115 = vmatpush1.bf16.msra.mxu0 0
  %116 = vmatprep.subr.bf16.mxu0 0
  %117 = vmatpush1.bf16.msra.mxu0 0
  %118 = vmatprep.subr.bf16.mxu0 0
  %119 = vmatpush1.bf16.msra.mxu0 0
  %120 = vmatprep.subr.bf16.mxu0 0
  %121 = vmatpush1.bf16.msra.mxu0 0
  %122 = vmatprep.subr.bf16.mxu0 0
  %123 = vmatpush1.bf16.msra.mxu0 0
  %124 = vmatprep.subr.bf16.mxu0 0
  %125 = vmatpush1.bf16.msra.mxu0 0
  %126 = vmatprep.subr.bf16.mxu0 0
  %127 = vmatpush1.bf16.msra.mxu0 0
  %128 = vmatprep.subr.bf16.mxu0 0
  %129 = vmatpush1.bf16.msra.mxu0 0
  %130 = vmatprep.subr.bf16.mxu0 0
  %131 = vmatpush1.bf16.msra.mxu0 0
  %132 = vmatprep.subr.bf16.mxu0 0
  %133 = vmatpush1.bf16.msra.mxu0 0
  %134 = vmatprep.subr.bf16.mxu0 0
  %135 = vmatpush1.bf16.msra.mxu0 0
  %136 = vmatprep.subr.bf16.mxu0 0
  %137 = vmatpush1.bf16.msra.mxu0 0
  %138 = vmatprep.mubr.bf16.mxu0 0
  %139 = vmatmul.mubr.bf16.gmra.mrb[0].mxu0 %v92
  %v140 = vpop.f32.mrb[0].mxu0
  %v141 = vadd.f32 %v76, %v140
  %v142 = vpop.f32.mrb[0].mxu0
  %v143 = vpop.f32.mrb[0].mxu0
  %v144 = vadd.f32 %v76, %v143
  %v145 = vpop.f32.mrb[0].mxu0
  %146 = vmatprep.mubr.bf16.mxu0 0
  %147 = vmatmul.mubr.bf16.gmra.mrb[0].mxu0 %v95
  %v148 = vpop.f32.mrb[0].mxu0
  %v149 = vadd.f32 %v76, %v148
  %v150 = vpop.f32.mrb[0].mxu0
  %v151 = vpop.f32.mrb[0].mxu0
  %v152 = vadd.f32 %v76, %v151
  %v153 = vpop.f32.mrb[0].mxu0
  %154 = vmatprep.mubr.bf16.mxu0 0
  %155 = vmatmul.mubr.bf16.gmra.mrb[0].mxu0 %v98
  %v156 = vpop.f32.mrb[0].mxu0
  %v157 = vadd.f32 %v76, %v156
  %v158 = vpop.f32.mrb[0].mxu0
  %v159 = vpop.f32.mrb[0].mxu0
  %v160 = vadd.f32 %v76, %v159
  %v161 = vpop.f32.mrb[0].mxu0
  %162 = vmatprep.mubr.bf16.mxu0 0
  %163 = vmatmul.mubr.bf16.gmra.mrb[0].mxu0 %v101
  %v164 = vpop.f32.mrb[0].mxu0
  %v165 = vadd.f32 %v76, %v164
  %v166 = vpop.f32.mrb[0].mxu0
  %v167 = vpop.f32.mrb[0].mxu0
  %v168 = vadd.f32 %v76, %v167
  %v169 = vpop.f32.mrb[0].mxu0
  %170 = vmatprep.mubr.bf16.mxu0 0
  %171 = vmatmul.mubr.bf16.gmra.mrb[0].mxu0 %v104
  %v172 = vpop.f32.mrb[0].mxu0
  %v173 = vadd.f32 %v76, %v172
  %v174 = vpop.f32.mrb[0].mxu0
  %v175 = vpop.f32.mrb[0].mxu0
  %v176 = vpop.f32.mrb[0].mxu0
  %177 = vdwg.mxu0
  %v178 = vpack.c.bf16 %v144, %v141
  %v179 = vpack.c.bf16 %v152, %v149
  %v180 = vpack.c.bf16 %v160, %v157
  %v181 = vpack.c.bf16 %v168, %v165
  %v182 = vpack.c.bf16 %v173, %v173
  %v188 = vunpack.c.l.b16 %v178
  %v189 = vunpack.c.h.b16 %v178
  %v190 = vunpack.c.l.b16 %v179
  %v191 = vunpack.c.h.b16 %v179
  %v192 = vunpack.c.l.b16 %v180
  %v193 = vunpack.c.h.b16 %v180
  %v194 = vunpack.c.l.b16 %v181
  %v195 = vunpack.c.h.b16 %v181
  %v196 = vunpack.c.l.b16 %v182
  %v197 = vpack.c.b16 %v188, %v188
  %v198 = vpack.c.b16 %v189, %v189
  %v199 = vpack.c.b16 %v190, %v190
  %v200 = vpack.c.b16 %v191, %v191
  %v201 = vpack.c.b16 %v192, %v192
  %v202 = vpack.c.b16 %v193, %v193
  %v203 = vpack.c.b16 %v194, %v194
  %v204 = vpack.c.b16 %v195, %v195
  %v205 = vpack.c.b16 %v196, %v196
  %vm215 = vcmask 257024
  %216 = vst.msk [vmem:[%s7] sm:$0xf] %vm215, %v197
  %217 = vst.msk [vmem:[%s7 + $0x4] sm:$0xf] %vm215, %v198
  %218 = vst.msk [vmem:[%s7 + $0x8] sm:$0xf] %vm215, %v199
  %219 = vst.msk [vmem:[%s7 + $0xc] sm:$0xf] %vm215, %v200
  %220 = vst.msk [vmem:[%s7 + $0x10] sm:$0xf] %vm215, %v201
  %221 = vst.msk [vmem:[%s7 + $0x14] sm:$0xf] %vm215, %v202
  %222 = vst.msk [vmem:[%s7 + $0x18] sm:$0xf] %vm215, %v203
  %223 = vst.msk [vmem:[%s7 + $0x1c] sm:$0xf] %vm215, %v204
  %224 = vst.msk [vmem:[%s7 + $0x20] sm:$0xf] %vm215, %v205
  %v225 = vld [vmem:[%s4] sm:$0xf]
  %v226 = vld [vmem:[%s4 + $0x4] sm:$0xf]
  %v227 = vld [vmem:[%s4 + $0x8] sm:$0xf]
  %v228 = vld [vmem:[%s4 + $0xc] sm:$0xf]
  %v229 = vld [vmem:[%s5] sm:$0x1]
  %v231 = vlaneseq
  %v232 = vshrl.u32 %v231, 7
  %v233 = vsub.s32 0, %v232
  %v234 = vrot.slane %v229, %v233
  %v240 = vunpack.c.l.b16 %v225
  %v241 = vunpack.c.l.b16 %v226
  %v242 = vunpack.c.l.b16 %v227
  %v243 = vunpack.c.l.b16 %v228
  %v244 = vpack.c.b16 %v241, %v240
  %v245 = vpack.c.b16 %v243, %v242
  %v249 = vsel %vm90, %v57, 0
  %v252 = vsel %vm90, %v58, 0
  %v255 = vsel %vm90, %v59, 0
  %v258 = vsel %vm90, %v60, 0
  %v261 = vsel %vm90, %v61, 0
  %263 = vmatprep.subr.bf16.mxu0 0
  %264 = vmatpush1.bf16.msra.mxu0 %v244
  %265 = vmatprep.subr.bf16.mxu0 0
  %266 = vmatpush1.bf16.msra.mxu0 %v245
  %267 = vmatprep.subr.bf16.mxu0 0
  %268 = vmatpush1.bf16.msra.mxu0 0
  %269 = vmatprep.subr.bf16.mxu0 0
  %270 = vmatpush1.bf16.msra.mxu0 0
  %271 = vmatprep.subr.bf16.mxu0 0
  %272 = vmatpush1.bf16.msra.mxu0 0
  %273 = vmatprep.subr.bf16.mxu0 0
  %274 = vmatpush1.bf16.msra.mxu0 0
  %275 = vmatprep.subr.bf16.mxu0 0
  %276 = vmatpush1.bf16.msra.mxu0 0
  %277 = vmatprep.subr.bf16.mxu0 0
  %278 = vmatpush1.bf16.msra.mxu0 0
  %279 = vmatprep.subr.bf16.mxu0 0
  %280 = vmatpush1.bf16.msra.mxu0 0
  %281 = vmatprep.subr.bf16.mxu0 0
  %282 = vmatpush1.bf16.msra.mxu0 0
  %283 = vmatprep.subr.bf16.mxu0 0
  %284 = vmatpush1.bf16.msra.mxu0 0
  %285 = vmatprep.subr.bf16.mxu0 0
  %286 = vmatpush1.bf16.msra.mxu0 0
  %287 = vmatprep.subr.bf16.mxu0 0
  %288 = vmatpush1.bf16.msra.mxu0 0
  %289 = vmatprep.subr.bf16.mxu0 0
  %290 = vmatpush1.bf16.msra.mxu0 0
  %291 = vmatprep.subr.bf16.mxu0 0
  %292 = vmatpush1.bf16.msra.mxu0 0
  %293 = vmatprep.subr.bf16.mxu0 0
  %294 = vmatpush1.bf16.msra.mxu0 0
  %295 = vmatprep.mubr.bf16.mxu0 0
  %296 = vmatmul.mubr.bf16.gmra.mrb[0].mxu0 %v249
  %v297 = vpop.f32.mrb[0].mxu0
  %v298 = vadd.f32 %v234, %v297
  %v299 = vpop.f32.mrb[0].mxu0
  %v300 = vpop.f32.mrb[0].mxu0
  %v301 = vadd.f32 %v234, %v300
  %v302 = vpop.f32.mrb[0].mxu0
  %303 = vmatprep.mubr.bf16.mxu0 0
  %304 = vmatmul.mubr.bf16.gmra.mrb[0].mxu0 %v252
  %v305 = vpop.f32.mrb[0].mxu0
  %v306 = vadd.f32 %v234, %v305
  %v307 = vpop.f32.mrb[0].mxu0
  %v308 = vpop.f32.mrb[0].mxu0
  %v309 = vadd.f32 %v234, %v308
  %v310 = vpop.f32.mrb[0].mxu0
  %311 = vmatprep.mubr.bf16.mxu0 0
  %312 = vmatmul.mubr.bf16.gmra.mrb[0].mxu0 %v255
  %v313 = vpop.f32.mrb[0].mxu0
  %v314 = vadd.f32 %v234, %v313
  %v315 = vpop.f32.mrb[0].mxu0
  %v316 = vpop.f32.mrb[0].mxu0
  %v317 = vadd.f32 %v234, %v316
  %v318 = vpop.f32.mrb[0].mxu0
  %319 = vmatprep.mubr.bf16.mxu0 0
  %320 = vmatmul.mubr.bf16.gmra.mrb[0].mxu0 %v258
  %v321 = vpop.f32.mrb[0].mxu0
  %v322 = vadd.f32 %v234, %v321
  %v323 = vpop.f32.mrb[0].mxu0
  %v324 = vpop.f32.mrb[0].mxu0
  %v325 = vadd.f32 %v234, %v324
  %v326 = vpop.f32.mrb[0].mxu0
  %327 = vmatprep.mubr.bf16.mxu0 0
  %328 = vmatmul.mubr.bf16.gmra.mrb[0].mxu0 %v261
  %v329 = vpop.f32.mrb[0].mxu0
  %v330 = vadd.f32 %v234, %v329
  %v331 = vpop.f32.mrb[0].mxu0
  %v332 = vpop.f32.mrb[0].mxu0
  %v333 = vpop.f32.mrb[0].mxu0
  %334 = vdwg.mxu0
  %344 = vrot.lane.b32.xlu0 %v298, 96
  %v345 = vpop.permute.xlu0 %344
  %346 = vrot.lane.b32.xlu0 %v301, 96
  %v347 = vpop.permute.xlu0 %346
  %348 = vrot.lane.b32.xlu0 %v306, 96
  %v349 = vpop.permute.xlu0 %348
  %350 = vrot.lane.b32.xlu0 %v309, 96
  %v351 = vpop.permute.xlu0 %350
  %352 = vrot.lane.b32.xlu0 %v314, 96
  %v353 = vpop.permute.xlu0 %352
  %354 = vrot.lane.b32.xlu0 %v317, 96
  %v355 = vpop.permute.xlu0 %354
  %356 = vrot.lane.b32.xlu0 %v322, 96
  %v357 = vpop.permute.xlu0 %356
  %358 = vrot.lane.b32.xlu0 %v325, 96
  %v359 = vpop.permute.xlu0 %358
  %360 = vrot.lane.b32.xlu0 %v330, 96
  %v361 = vpop.permute.xlu0 %360
  %vm371 = vcmask 785408
  %372 = vst.msk [vmem:[%s9] sm:$0xff] %vm371, %v345
  %373 = vst.msk [vmem:[%s9 + $0x8] sm:$0xff] %vm371, %v347
  %374 = vst.msk [vmem:[%s9 + $0x10] sm:$0xff] %vm371, %v349
  %375 = vst.msk [vmem:[%s9 + $0x18] sm:$0xff] %vm371, %v351
  %376 = vst.msk [vmem:[%s9 + $0x20] sm:$0xff] %vm371, %v353
  %377 = vst.msk [vmem:[%s9 + $0x28] sm:$0xff] %vm371, %v355
  %378 = vst.msk [vmem:[%s9 + $0x30] sm:$0xff] %vm371, %v357
  %379 = vst.msk [vmem:[%s9 + $0x38] sm:$0xff] %vm371, %v359
  %380 = vst.msk [vmem:[%s9 + $0x40] sm:$0xff] %vm371, %v361
  %v381 = vsel %vm90, %v298, -inf
  %382 = vmax.xlane.f32.xlu0 %v381
  %v383 = vpop.xlane.xlu0 %382
  %v384 = vsel %vm90, %v301, -inf
  %385 = vmax.xlane.f32.xlu0 %v384
  %v386 = vpop.xlane.xlu0 %385
  %v387 = vsel %vm90, %v306, -inf
  %388 = vmax.xlane.f32.xlu0 %v387
  %v389 = vpop.xlane.xlu0 %388
  %v390 = vsel %vm90, %v309, -inf
  %391 = vmax.xlane.f32.xlu0 %v390
  %v392 = vpop.xlane.xlu0 %391
  %v393 = vsel %vm90, %v314, -inf
  %394 = vmax.xlane.f32.xlu0 %v393
  %v395 = vpop.xlane.xlu0 %394
  %v396 = vsel %vm90, %v317, -inf
  %397 = vmax.xlane.f32.xlu0 %v396
  %v398 = vpop.xlane.xlu0 %397
  %v399 = vsel %vm90, %v322, -inf
  %400 = vmax.xlane.f32.xlu0 %v399
  %v401 = vpop.xlane.xlu0 %400
  %v402 = vsel %vm90, %v325, -inf
  %403 = vmax.xlane.f32.xlu0 %v402
  %v404 = vpop.xlane.xlu0 %403
  %v405 = vsel %vm90, %v330, -inf
  %406 = vmax.xlane.f32.xlu0 %v405
  %v407 = vpop.xlane.xlu0 %406
  %v408 = vsub.f32 %v298, %v383
  %v409 = vsub.f32 %v301, %v386
  %v410 = vsub.f32 %v306, %v389
  %v411 = vsub.f32 %v309, %v392
  %v412 = vsub.f32 %v314, %v395
  %v413 = vsub.f32 %v317, %v398
  %v414 = vsub.f32 %v322, %v401
  %v415 = vsub.f32 %v325, %v404
  %v416 = vsub.f32 %v330, %v407
  %v417 = vmul.f32 %v408, 1.442695
  %v418 = vpow.pop %v417
  %v419 = vmul.f32 %v409, 1.442695
  %v420 = vpow.pop %v419
  %v421 = vmul.f32 %v410, 1.442695
  %v422 = vpow.pop %v421
  %v423 = vmul.f32 %v411, 1.442695
  %v424 = vpow.pop %v423
  %v425 = vmul.f32 %v412, 1.442695
  %v426 = vpow.pop %v425
  %v427 = vmul.f32 %v413, 1.442695
  %v428 = vpow.pop %v427
  %v429 = vmul.f32 %v414, 1.442695
  %v430 = vpow.pop %v429
  %v431 = vmul.f32 %v415, 1.442695
  %v432 = vpow.pop %v431
  %v433 = vmul.f32 %v416, 1.442695
  %v434 = vpow.pop %v433
  %v435 = vld [vmem:[%s6] sm:$0xff]
  %v436 = vld [vmem:[%s6 + $0x8] sm:$0xff]
  %v437 = vld [vmem:[%s6 + $0x10] sm:$0xff]
  %v438 = vld [vmem:[%s6 + $0x18] sm:$0xff]
  %v440 = vsel %vm90, %v418, 0
  %v443 = vsel %vm90, %v420, 0
  %v446 = vsel %vm90, %v422, 0
  %v449 = vsel %vm90, %v424, 0
  %v452 = vsel %vm90, %v426, 0
  %v455 = vsel %vm90, %v428, 0
  %v458 = vsel %vm90, %v430, 0
  %v461 = vsel %vm90, %v432, 0
  %v464 = vsel %vm90, %v434, 0
  %466 = vmatprep.subr.mxu0 0.0
  %467 = vmatpush1.msra.mxu0 %v435
  %468 = vmatprep.subr.mxu0 0.0
  %469 = vmatpush1.msra.mxu0 %v436
  %470 = vmatprep.subr.mxu0 0.0
  %471 = vmatpush1.msra.mxu0 %v437
  %472 = vmatprep.subr.mxu0 0.0
  %473 = vmatpush1.msra.mxu0 %v438
  %474 = vmatprep.subr.mxu0 0.0
  %475 = vmatpush1.msra.mxu0 0.0
  %476 = vmatprep.subr.mxu0 0.0
  %477 = vmatpush1.msra.mxu0 0.0
  %478 = vmatprep.subr.mxu0 0.0
  %479 = vmatpush1.msra.mxu0 0.0
  %480 = vmatprep.subr.mxu0 0.0
  %481 = vmatpush1.msra.mxu0 0.0
  %482 = vmatprep.subr.mxu0 0.0
  %483 = vmatpush1.msra.mxu0 0.0
  %484 = vmatprep.subr.mxu0 0.0
  %485 = vmatpush1.msra.mxu0 0.0
  %486 = vmatprep.subr.mxu0 0.0
  %487 = vmatpush1.msra.mxu0 0.0
  %488 = vmatprep.subr.mxu0 0.0
  %489 = vmatpush1.msra.mxu0 0.0
  %490 = vmatprep.subr.mxu0 0.0
  %491 = vmatpush1.msra.mxu0 0.0
  %492 = vmatprep.subr.mxu0 0.0
  %493 = vmatpush1.msra.mxu0 0.0
  %494 = vmatprep.subr.mxu0 0.0
  %495 = vmatpush1.msra.mxu0 0.0
  %496 = vmatprep.subr.mxu0 0.0
  %497 = vmatpush1.msra.mxu0 0.0
  %498 = vmatprep.subr.mxu0 0.0
  %499 = vmatpush1.msra.mxu0 0.0
  %500 = vmatprep.subr.mxu0 0.0
  %501 = vmatpush1.msra.mxu0 0.0
  %502 = vmatprep.subr.mxu0 0.0
  %503 = vmatpush1.msra.mxu0 0.0
  %504 = vmatprep.subr.mxu0 0.0
  %505 = vmatpush1.msra.mxu0 0.0
  %506 = vmatprep.subr.mxu0 0.0
  %507 = vmatpush1.msra.mxu0 0.0
  %508 = vmatprep.subr.mxu0 0.0
  %509 = vmatpush1.msra.mxu0 0.0
  %510 = vmatprep.subr.mxu0 0.0
  %511 = vmatpush1.msra.mxu0 0.0
  %512 = vmatprep.subr.mxu0 0.0
  %513 = vmatpush1.msra.mxu0 0.0
  %514 = vmatprep.subr.mxu0 0.0
  %515 = vmatpush1.msra.mxu0 0.0
  %516 = vmatprep.subr.mxu0 0.0
  %517 = vmatpush1.msra.mxu0 0.0
  %518 = vmatprep.subr.mxu0 0.0
  %519 = vmatpush1.msra.mxu0 0.0
  %520 = vmatprep.subr.mxu0 0.0
  %521 = vmatpush1.msra.mxu0 0.0
  %522 = vmatprep.subr.mxu0 0.0
  %523 = vmatpush1.msra.mxu0 0.0
  %524 = vmatprep.subr.mxu0 0.0
  %525 = vmatpush1.msra.mxu0 0.0
  %526 = vmatprep.subr.mxu0 0.0
  %527 = vmatpush1.msra.mxu0 0.0
  %528 = vmatprep.subr.mxu0 0.0
  %529 = vmatpush1.msra.mxu0 0.0
  %530 = vmatprep.mubr.f32.mxu0 0.0
  %531 = vmatmul.mubr.f32.gmra.mrb[0].mxu0 %v440
  %v532 = vpop.f32.mrb[0].mxu0
  %v533 = vadd.f32 0.0, %v532
  %v534 = vpop.f32.mrb[0].mxu0
  %535 = vmatprep.mubr.f32.mxu0 0.0
  %536 = vmatmul.mubr.f32.gmra.mrb[0].mxu0 %v443
  %v537 = vpop.f32.mrb[0].mxu0
  %v538 = vadd.f32 0.0, %v537
  %v539 = vpop.f32.mrb[0].mxu0
  %540 = vmatprep.mubr.f32.mxu0 0.0
  %541 = vmatmul.mubr.f32.gmra.mrb[0].mxu0 %v446
  %v542 = vpop.f32.mrb[0].mxu0
  %v543 = vadd.f32 0.0, %v542
  %v544 = vpop.f32.mrb[0].mxu0
  %545 = vmatprep.mubr.f32.mxu0 0.0
  %546 = vmatmul.mubr.f32.gmra.mrb[0].mxu0 %v449
  %v547 = vpop.f32.mrb[0].mxu0
  %v548 = vadd.f32 0.0, %v547
  %v549 = vpop.f32.mrb[0].mxu0
  %550 = vmatprep.mubr.f32.mxu0 0.0
  %551 = vmatmul.mubr.f32.gmra.mrb[0].mxu0 %v452
  %v552 = vpop.f32.mrb[0].mxu0
  %v553 = vadd.f32 0.0, %v552
  %v554 = vpop.f32.mrb[0].mxu0
  %555 = vmatprep.mubr.f32.mxu0 0.0
  %556 = vmatmul.mubr.f32.gmra.mrb[0].mxu0 %v455
  %v557 = vpop.f32.mrb[0].mxu0
  %v558 = vadd.f32 0.0, %v557
  %v559 = vpop.f32.mrb[0].mxu0
  %560 = vmatprep.mubr.f32.mxu0 0.0
  %561 = vmatmul.mubr.f32.gmra.mrb[0].mxu0 %v458
  %v562 = vpop.f32.mrb[0].mxu0
  %v563 = vadd.f32 0.0, %v562
  %v564 = vpop.f32.mrb[0].mxu0
  %565 = vmatprep.mubr.f32.mxu0 0.0
  %566 = vmatmul.mubr.f32.gmra.mrb[0].mxu0 %v461
  %v567 = vpop.f32.mrb[0].mxu0
  %v568 = vadd.f32 0.0, %v567
  %v569 = vpop.f32.mrb[0].mxu0
  %570 = vmatprep.mubr.f32.mxu0 0.0
  %571 = vmatmul.mubr.f32.gmra.mrb[0].mxu0 %v464
  %v572 = vpop.f32.mrb[0].mxu0
  %v573 = vadd.f32 0.0, %v572
  %v574 = vpop.f32.mrb[0].mxu0
  %575 = vdwg.mxu0
  %v576 = vrcp.pop %v533
  %v577 = vrcp.pop %v538
  %v578 = vrcp.pop %v543
  %v579 = vrcp.pop %v548
  %v580 = vrcp.pop %v553
  %v581 = vrcp.pop %v558
  %v582 = vrcp.pop %v563
  %v583 = vrcp.pop %v568
  %v584 = vrcp.pop %v573
  %v585 = vmul.f32 %v418, %v576
  %v586 = vmul.f32 %v420, %v577
  %v587 = vmul.f32 %v422, %v578
  %v588 = vmul.f32 %v424, %v579
  %v589 = vmul.f32 %v426, %v580
  %v590 = vmul.f32 %v428, %v581
  %v591 = vmul.f32 %v430, %v582
  %v592 = vmul.f32 %v432, %v583
  %v593 = vmul.f32 %v434, %v584
  %594 = vst.msk [vmem:[%s8] sm:$0xff] %vm90, %v585
  %595 = vst.msk [vmem:[%s8 + $0x8] sm:$0xff] %vm90, %v586
  %596 = vst.msk [vmem:[%s8 + $0x10] sm:$0xff] %vm90, %v587
  %597 = vst.msk [vmem:[%s8 + $0x18] sm:$0xff] %vm90, %v588
  %598 = vst.msk [vmem:[%s8 + $0x20] sm:$0xff] %vm90, %v589
  %599 = vst.msk [vmem:[%s8 + $0x28] sm:$0xff] %vm90, %v590
  %600 = vst.msk [vmem:[%s8 + $0x30] sm:$0xff] %vm90, %v591
  %601 = vst.msk [vmem:[%s8 + $0x38] sm:$0xff] %vm90, %v592
  %602 = vst.msk [vmem:[%s8 + $0x40] sm:$0xff] %vm90, %v593
  // Predicated region
  $region30: #{deformable_transformer_encoder_forward.4} parent=0 // pred_check
    _
  $region31: #{deformable_transformer_encoder_forward.4} parent=0 // pred_check_branch
    %604 = sbr.rel (0) target = $region33
  $region32: #{deformable_transformer_encoder_forward.4} parent=0 // pred_region
    _
  $region33: #{deformable_transformer_encoder_forward.4} parent=0 // pred_fallthru
    _
  // Predicated region
  $region34: #{deformable_transformer_encoder_forward.4} parent=0 // pred_check
    _
  $region35: #{deformable_transformer_encoder_forward.4} parent=0 // pred_check_branch
    %606 = sbr.rel (0) target = $region37
  $region36: #{deformable_transformer_encoder_forward.4} parent=0 // pred_region
    _
  $region37: #{deformable_transformer_encoder_forward.4} parent=0 // pred_fallthru
    _
  // Predicated region
  $region38: #{deformable_transformer_encoder_forward.4} parent=0 // pred_check
    _
  $region39: #{deformable_transformer_encoder_forward.4} parent=0 // pred_check_branch
    %608 = sbr.rel (0) target = $region41
  $region40: #{deformable_transformer_encoder_forward.4} parent=0 // pred_region
    _
  $region41: #{deformable_transformer_encoder_forward.4} parent=0 // pred_fallthru
    _
  // Predicated region
  $region42: #{deformable_transformer_encoder_forward.4} parent=0 // pred_check
    _
  $region43: #{deformable_transformer_encoder_forward.4} parent=0 // pred_check_branch
    %610 = sbr.rel (0) target = $region45
  $region44: #{deformable_transformer_encoder_forward.4} parent=0 // pred_region
    _
  $region45: #{deformable_transformer_encoder_forward.4} parent=0 // pred_fallthru
    _
  // Predicated region
  $region46: #{deformable_transformer_encoder_forward.4} parent=0 // pred_check
    _
  $region47: #{deformable_transformer_encoder_forward.4} parent=0 // pred_check_branch
    %612 = sbr.rel (0) target = $region49
  $region48: #{deformable_transformer_encoder_forward.4} parent=0 // pred_region
    _
  $region49: #{deformable_transformer_encoder_forward.4} parent=0 // pred_fallthru
    _
  // Predicated region
  $region50: #{deformable_transformer_encoder_forward.4} parent=0 // pred_check
    _
  $region51: #{deformable_transformer_encoder_forward.4} parent=0 // pred_check_branch
    %614 = sbr.rel (0) target = $region53
  $region52: #{deformable_transformer_encoder_forward.4} parent=0 // pred_region
    _
  $region53: #{deformable_transformer_encoder_forward.4} parent=0 // pred_fallthru
    _

// kernel: deformable_transformer_encoder_forward.5
$region0: #{deformable_transformer_encoder_forward.5}
  #allocation0 [shape = 'u32[]', space=smem, size = 0x4, offset = 0x4, fixed_abs, tag = 'smem constant byte address 0x4 - core index']
  #allocation1 [shape = 'u32[144,128]{1,0:T(1,128)}', space=vmem, size = 0x12000, scoped, tag = 'internal scratch']
  %s0 = inlined_call_operand.vmem [shape: bf16[72,256], index: 0, kind: input, shape index: {}]
  %s1 = inlined_call_operand.vmem [shape: f32[72,32], index: 1, kind: input, shape index: {}]
  %s2 = inlined_call_operand.vmem [shape: f32[72,32], index: 2, kind: input, shape index: {}]
  %s3 = inlined_call_operand.vmem [shape: bf16[4,32], index: 3, kind: input, shape index: {}]
  %s4 = inlined_call_operand.vmem [shape: bf16[32,32], index: 4, kind: input, shape index: {}]
  %s5 = inlined_call_operand.vmem [shape: f32[1,32], index: 5, kind: input, shape index: {}]
  %s6 = inlined_call_operand.vmem [shape: f32[1,32], index: 6, kind: input, shape index: {}]
  %s7 = inlined_call_operand.vmem [shape: f32[1,32], index: 7, kind: input, shape index: {}]
  %s8 = inlined_call_operand.vmem [shape: bf16[32,64], index: 8, kind: input, shape index: {}]
  %s9 = inlined_call_operand.vmem [shape: f32[1,64], index: 9, kind: input, shape index: {}]
  %s10 = inlined_call_operand.vmem [shape: bf16[64,32], index: 10, kind: input, shape index: {}]
  %s11 = inlined_call_operand.vmem [shape: f32[1,32], index: 11, kind: input, shape index: {}]
  %s12 = inlined_call_operand.vmem [shape: f32[1,32], index: 12, kind: input, shape index: {}]
  %s13 = inlined_call_operand.vmem [shape: f32[1,32], index: 13, kind: input, shape index: {}]
  %s14 = inlined_call_operand.vmem [shape: f32[72,32], index: 14, kind: output, shape index: {}]
  %s15 = sld [smem:[#allocation0]]
  $region66: #{deformable_transformer_encoder_forward.5} parent=0
    _
  %s17 = ssub.s32 1, %s15
  %s18 = scalar_select 0, %s17, %s15
  // Predicated region
  $region2: #{deformable_transformer_encoder_forward.5} parent=0 // pred_check
    _
  $region3: #{deformable_transformer_encoder_forward.5} parent=0 // pred_check_branch
    %20 = sbr.rel (0) target = $region5
  $region4: #{deformable_transformer_encoder_forward.5} parent=0 // pred_region
    _
  $region5: #{deformable_transformer_encoder_forward.5} parent=0 // pred_fallthru
    _
  // Predicated region
  $region6: #{deformable_transformer_encoder_forward.5} parent=0 // pred_check
    _
  $region7: #{deformable_transformer_encoder_forward.5} parent=0 // pred_check_branch
    %22 = sbr.rel (0) target = $region9
  $region8: #{deformable_transformer_encoder_forward.5} parent=0 // pred_region
    _
  $region9: #{deformable_transformer_encoder_forward.5} parent=0 // pred_fallthru
    _
  // Predicated region
  $region10: #{deformable_transformer_encoder_forward.5} parent=0 // pred_check
    _
  $region11: #{deformable_transformer_encoder_forward.5} parent=0 // pred_check_branch
    %24 = sbr.rel (0) target = $region13
  $region12: #{deformable_transformer_encoder_forward.5} parent=0 // pred_region
    _
  $region13: #{deformable_transformer_encoder_forward.5} parent=0 // pred_fallthru
    _
  // Predicated region
  $region14: #{deformable_transformer_encoder_forward.5} parent=0 // pred_check
    _
  $region15: #{deformable_transformer_encoder_forward.5} parent=0 // pred_check_branch
    %26 = sbr.rel (0) target = $region17
  $region16: #{deformable_transformer_encoder_forward.5} parent=0 // pred_region
    _
  $region17: #{deformable_transformer_encoder_forward.5} parent=0 // pred_fallthru
    _
  // Predicated region
  $region18: #{deformable_transformer_encoder_forward.5} parent=0 // pred_check
    _
  $region19: #{deformable_transformer_encoder_forward.5} parent=0 // pred_check_branch
    %28 = sbr.rel (0) target = $region21
  $region20: #{deformable_transformer_encoder_forward.5} parent=0 // pred_region
    _
  $region21: #{deformable_transformer_encoder_forward.5} parent=0 // pred_fallthru
    _
  // Predicated region
  $region22: #{deformable_transformer_encoder_forward.5} parent=0 // pred_check
    _
  $region23: #{deformable_transformer_encoder_forward.5} parent=0 // pred_check_branch
    %30 = sbr.rel (0) target = $region25
  $region24: #{deformable_transformer_encoder_forward.5} parent=0 // pred_region
    _
  $region25: #{deformable_transformer_encoder_forward.5} parent=0 // pred_fallthru
    _
  // Predicated region
  $region26: #{deformable_transformer_encoder_forward.5} parent=0 // pred_check
    _
  $region27: #{deformable_transformer_encoder_forward.5} parent=0 // pred_check_branch
    %32 = sbr.rel (0) target = $region29
  $region28: #{deformable_transformer_encoder_forward.5} parent=0 // pred_region
    _
  $region29: #{deformable_transformer_encoder_forward.5} parent=0 // pred_fallthru
    _
  // Predicated region
  $region30: #{deformable_transformer_encoder_forward.5} parent=0 // pred_check
    _
  $region31: #{deformable_transformer_encoder_forward.5} parent=0 // pred_check_branch
    %34 = sbr.rel (0) target = $region33
  $region32: #{deformable_transformer_encoder_forward.5} parent=0 // pred_region
    _
  $region33: #{deformable_transformer_encoder_forward.5} parent=0 // pred_fallthru
    _
  // Predicated region
  $region34: #{deformable_transformer_encoder_forward.5} parent=0 // pred_check
    _
  $region35: #{deformable_transformer_encoder_forward.5} parent=0 // pred_check_branch
    %36 = sbr.rel (0) target = $region37
  $region36: #{deformable_transformer_encoder_forward.5} parent=0 // pred_region
    _
  $region37: #{deformable_transformer_encoder_forward.5} parent=0 // pred_fallthru
    _
  // Predicated region
  $region38: #{deformable_transformer_encoder_forward.5} parent=0 // pred_check
    _
  $region39: #{deformable_transformer_encoder_forward.5} parent=0 // pred_check_branch
    %38 = sbr.rel (0) target = $region41
  $region40: #{deformable_transformer_encoder_forward.5} parent=0 // pred_region
    _
  $region41: #{deformable_transformer_encoder_forward.5} parent=0 // pred_fallthru
    _
  // Predicated region
  $region42: #{deformable_transformer_encoder_forward.5} parent=0 // pred_check
    _
  $region43: #{deformable_transformer_encoder_forward.5} parent=0 // pred_check_branch
    %40 = sbr.rel (0) target = $region45
  $region44: #{deformable_transformer_encoder_forward.5} parent=0 // pred_region
    _
  $region45: #{deformable_transformer_encoder_forward.5} parent=0 // pred_fallthru
    _
  // Predicated region
  $region46: #{deformable_transformer_encoder_forward.5} parent=0 // pred_check
    _
  $region47: #{deformable_transformer_encoder_forward.5} parent=0 // pred_check_branch
    %42 = sbr.rel (0) target = $region49
  $region48: #{deformable_transformer_encoder_forward.5} parent=0 // pred_region
    _
  $region49: #{deformable_transformer_encoder_forward.5} parent=0 // pred_fallthru
    _
  // Predicated region
  $region50: #{deformable_transformer_encoder_forward.5} parent=0 // pred_check
    _
  $region51: #{deformable_transformer_encoder_forward.5} parent=0 // pred_check_branch
    %44 = sbr.rel (0) target = $region53
  $region52: #{deformable_transformer_encoder_forward.5} parent=0 // pred_region
    _
  $region53: #{deformable_transformer_encoder_forward.5} parent=0 // pred_fallthru
    _
  // Predicated region
  $region54: #{deformable_transformer_encoder_forward.5} parent=0 // pred_check
    _
  $region55: #{deformable_transformer_encoder_forward.5} parent=0 // pred_check_branch
    %46 = sbr.rel (0) target = $region57
  $region56: #{deformable_transformer_encoder_forward.5} parent=0 // pred_region
    _
  $region57: #{deformable_transformer_encoder_forward.5} parent=0 // pred_fallthru
    _
  %v48 = vld [vmem:[%s1] sm:$0xff]
  %v49 = vld [vmem:[%s1 + $0x8] sm:$0xff]
  %v50 = vld [vmem:[%s1 + $0x10] sm:$0xff]
  %v51 = vld [vmem:[%s1 + $0x18] sm:$0xff]
  %v52 = vld [vmem:[%s1 + $0x20] sm:$0xff]
  %v53 = vld [vmem:[%s1 + $0x28] sm:$0xff]
  %v54 = vld [vmem:[%s1 + $0x30] sm:$0xff]
  %v55 = vld [vmem:[%s1 + $0x38] sm:$0xff]
  %v56 = vld [vmem:[%s1 + $0x40] sm:$0xff]
  %v57 = vpack.c.bf16 %v49, %v48
  %v58 = vpack.c.bf16 %v51, %v50
  %v59 = vpack.c.bf16 %v53, %v52
  %v60 = vpack.c.bf16 %v55, %v54
  %v61 = vpack.c.bf16 %v56, %v56
  %v62 = vld [vmem:[%s3] sm:$0x3]
  %vm63 = vcmask 31744
  %v65 = vsel %vm63, %v57, 0
  %v68 = vsel %vm63, %v58, 0
  %v71 = vsel %vm63, %v59, 0
  %v74 = vsel %vm63, %v60, 0
  %v77 = vsel %vm63, %v61, 0
  %vm79 = vcmask 1041408
  %v81 = vsel %vm79, %v62, 0
  %83 = vmatprep.subr.bf16.mxu0 0
  %84 = vmatpush1.bf16.msra.mxu0 %v81
  %85 = vmatprep.subr.bf16.mxu0 0
  %86 = vmatpush1.bf16.msra.mxu0 0
  %87 = vmatprep.subr.bf16.mxu0 0
  %88 = vmatpush1.bf16.msra.mxu0 0
  %89 = vmatprep.subr.bf16.mxu0 0
  %90 = vmatpush1.bf16.msra.mxu0 0
  %91 = vmatprep.subr.bf16.mxu0 0
  %92 = vmatpush1.bf16.msra.mxu0 0
  %93 = vmatprep.subr.bf16.mxu0 0
  %94 = vmatpush1.bf16.msra.mxu0 0
  %95 = vmatprep.subr.bf16.mxu0 0
  %96 = vmatpush1.bf16.msra.mxu0 0
  %97 = vmatprep.subr.bf16.mxu0 0
  %98 = vmatpush1.bf16.msra.mxu0 0
  %99 = vmatprep.subr.bf16.mxu0 0
  %100 = vmatpush1.bf16.msra.mxu0 0
  %101 = vmatprep.subr.bf16.mxu0 0
  %102 = vmatpush1.bf16.msra.mxu0 0
  %103 = vmatprep.subr.bf16.mxu0 0
  %104 = vmatpush1.bf16.msra.mxu0 0
  %105 = vmatprep.subr.bf16.mxu0 0
  %106 = vmatpush1.bf16.msra.mxu0 0
  %107 = vmatprep.subr.bf16.mxu0 0
  %108 = vmatpush1.bf16.msra.mxu0 0
  %109 = vmatprep.subr.bf16.mxu0 0
  %110 = vmatpush1.bf16.msra.mxu0 0
  %111 = vmatprep.subr.bf16.mxu0 0
  %112 = vmatpush1.bf16.msra.mxu0 0
  %113 = vmatprep.subr.bf16.mxu0 0
  %114 = vmatpush1.bf16.msra.mxu0 0
  %115 = vmatprep.mubr.bf16.mxu0 0
  %116 = vmatmul.mubr.bf16.gmra.mrb[0].mxu0 %v65
  %v117 = vpop.f32.mrb[0].mxu0
  %v118 = vadd.f32 0.0, %v117
  %v119 = vpop.f32.mrb[0].mxu0
  %v120 = vpop.f32.mrb[0].mxu0
  %v121 = vadd.f32 0.0, %v120
  %v122 = vpop.f32.mrb[0].mxu0
  %123 = vmatprep.mubr.bf16.mxu0 0
  %124 = vmatmul.mubr.bf16.gmra.mrb[0].mxu0 %v68
  %v125 = vpop.f32.mrb[0].mxu0
  %v126 = vadd.f32 0.0, %v125
  %v127 = vpop.f32.mrb[0].mxu0
  %v128 = vpop.f32.mrb[0].mxu0
  %v129 = vadd.f32 0.0, %v128
  %v130 = vpop.f32.mrb[0].mxu0
  %131 = vmatprep.mubr.bf16.mxu0 0
  %132 = vmatmul.mubr.bf16.gmra.mrb[0].mxu0 %v71
  %v133 = vpop.f32.mrb[0].mxu0
  %v134 = vadd.f32 0.0, %v133
  %v135 = vpop.f32.mrb[0].mxu0
  %v136 = vpop.f32.mrb[0].mxu0
  %v137 = vadd.f32 0.0, %v136
  %v138 = vpop.f32.mrb[0].mxu0
  %139 = vmatprep.mubr.bf16.mxu0 0
  %140 = vmatmul.mubr.bf16.gmra.mrb[0].mxu0 %v74
  %v141 = vpop.f32.mrb[0].mxu0
  %v142 = vadd.f32 0.0, %v141
  %v143 = vpop.f32.mrb[0].mxu0
  %v144 = vpop.f32.mrb[0].mxu0
  %v145 = vadd.f32 0.0, %v144
  %v146 = vpop.f32.mrb[0].mxu0
  %147 = vmatprep.mubr.bf16.mxu0 0
  %148 = vmatmul.mubr.bf16.gmra.mrb[0].mxu0 %v77
  %v149 = vpop.f32.mrb[0].mxu0
  %v150 = vadd.f32 0.0, %v149
  %v151 = vpop.f32.mrb[0].mxu0
  %v152 = vpop.f32.mrb[0].mxu0
  %v153 = vpop.f32.mrb[0].mxu0
  %154 = vdwg.mxu0
  %v155 = vld [vmem:[%s0] sm:$0xf]
  %v156 = vld [vmem:[%s0 + $0x8] sm:$0xf]
  %v157 = vld [vmem:[%s0 + $0x10] sm:$0xf]
  %v158 = vld [vmem:[%s0 + $0x18] sm:$0xf]
  %v159 = vld [vmem:[%s0 + $0x20] sm:$0xf]
  %v160 = vld [vmem:[%s0 + $0x28] sm:$0xf]
  %v161 = vld [vmem:[%s0 + $0x30] sm:$0xf]
  %v162 = vld [vmem:[%s0 + $0x38] sm:$0xf]
  %v163 = vld [vmem:[%s0 + $0x40] sm:$0xf]
  %v164 = vunpack.c.l.bf16 %v155
  %v165 = vunpack.c.l.bf16 %v156
  %v166 = vunpack.c.l.bf16 %v157
  %v167 = vunpack.c.l.bf16 %v158
  %v168 = vunpack.c.l.bf16 %v159
  %v169 = vunpack.c.l.bf16 %v160
  %v170 = vunpack.c.l.bf16 %v161
  %v171 = vunpack.c.l.bf16 %v162
  %v172 = vunpack.c.l.bf16 %v163
  %v173 = vmul.f32 %v118, %v164
  %v174 = vmul.f32 %v121, %v165
  %v175 = vmul.f32 %v126, %v166
  %v176 = vmul.f32 %v129, %v167
  %v177 = vmul.f32 %v134, %v168
  %v178 = vmul.f32 %v137, %v169
  %v179 = vmul.f32 %v142, %v170
  %v180 = vmul.f32 %v145, %v171
  %v181 = vmul.f32 %v150, %v172
  %v182 = vadd.f32 %v173, 0.0
  %v183 = vadd.f32 %v174, 0.0
  %v184 = vadd.f32 %v175, 0.0
  %v185 = vadd.f32 %v176, 0.0
  %v186 = vadd.f32 %v177, 0.0
  %v187 = vadd.f32 %v178, 0.0
  %v188 = vadd.f32 %v179, 0.0
  %v189 = vadd.f32 %v180, 0.0
  %v190 = vadd.f32 %v181, 0.0
  %196 = vrot.lane.b32.xlu0 %v57, 124
  %v197 = vpop.permute.xlu0 %196
  %198 = vrot.lane.b32.xlu0 %v58, 124
  %v199 = vpop.permute.xlu0 %198
  %200 = vrot.lane.b32.xlu0 %v59, 124
  %v201 = vpop.permute.xlu0 %200
  %202 = vrot.lane.b32.xlu0 %v60, 124
  %v203 = vpop.permute.xlu0 %202
  %204 = vrot.lane.b32.xlu0 %v61, 124
  %v205 = vpop.permute.xlu0 %204
  %v207 = vsel %vm63, %v197, 0
  %v210 = vsel %vm63, %v199, 0
  %v213 = vsel %vm63, %v201, 0
  %v216 = vsel %vm63, %v203, 0
  %v219 = vsel %vm63, %v205, 0
  %221 = vmatprep.subr.bf16.mxu0 0
  %222 = vmatpush1.bf16.msra.mxu0 %v81
  %223 = vmatprep.subr.bf16.mxu0 0
  %224 = vmatpush1.bf16.msra.mxu0 0
  %225 = vmatprep.subr.bf16.mxu0 0
  %226 = vmatpush1.bf16.msra.mxu0 0
  %227 = vmatprep.subr.bf16.mxu0 0
  %228 = vmatpush1.bf16.msra.mxu0 0
  %229 = vmatprep.subr.bf16.mxu0 0
  %230 = vmatpush1.bf16.msra.mxu0 0
  %231 = vmatprep.subr.bf16.mxu0 0
  %232 = vmatpush1.bf16.msra.mxu0 0
  %233 = vmatprep.subr.bf16.mxu0 0
  %234 = vmatpush1.bf16.msra.mxu0 0
  %235 = vmatprep.subr.bf16.mxu0 0
  %236 = vmatpush1.bf16.msra.mxu0 0
  %237 = vmatprep.subr.bf16.mxu0 0
  %238 = vmatpush1.bf16.msra.mxu0 0
  %239 = vmatprep.subr.bf16.mxu0 0
  %240 = vmatpush1.bf16.msra.mxu0 0
  %241 = vmatprep.subr.bf16.mxu0 0
  %242 = vmatpush1.bf16.msra.mxu0 0
  %243 = vmatprep.subr.bf16.mxu0 0
  %244 = vmatpush1.bf16.msra.mxu0 0
  %245 = vmatprep.subr.bf16.mxu0 0
  %246 = vmatpush1.bf16.msra.mxu0 0
  %247 = vmatprep.subr.bf16.mxu0 0
  %248 = vmatpush1.bf16.msra.mxu0 0
  %249 = vmatprep.subr.bf16.mxu0 0
  %250 = vmatpush1.bf16.msra.mxu0 0
  %251 = vmatprep.subr.bf16.mxu0 0
  %252 = vmatpush1.bf16.msra.mxu0 0
  %253 = vmatprep.mubr.bf16.mxu0 0
  %254 = vmatmul.mubr.bf16.gmra.mrb[0].mxu0 %v207
  %v255 = vpop.f32.mrb[0].mxu0
  %v256 = vadd.f32 0.0, %v255
  %v257 = vpop.f32.mrb[0].mxu0
  %v258 = vpop.f32.mrb[0].mxu0
  %v259 = vadd.f32 0.0, %v258
  %v260 = vpop.f32.mrb[0].mxu0
  %261 = vmatprep.mubr.bf16.mxu0 0
  %262 = vmatmul.mubr.bf16.gmra.mrb[0].mxu0 %v210
  %v263 = vpop.f32.mrb[0].mxu0
  %v264 = vadd.f32 0.0, %v263
  %v265 = vpop.f32.mrb[0].mxu0
  %v266 = vpop.f32.mrb[0].mxu0
  %v267 = vadd.f32 0.0, %v266
  %v268 = vpop.f32.mrb[0].mxu0
  %269 = vmatprep.mubr.bf16.mxu0 0
  %270 = vmatmul.mubr.bf16.gmra.mrb[0].mxu0 %v213
  %v271 = vpop.f32.mrb[0].mxu0
  %v272 = vadd.f32 0.0, %v271
  %v273 = vpop.f32.mrb[0].mxu0
  %v274 = vpop.f32.mrb[0].mxu0
  %v275 = vadd.f32 0.0, %v274
  %v276 = vpop.f32.mrb[0].mxu0
  %277 = vmatprep.mubr.bf16.mxu0 0
  %278 = vmatmul.mubr.bf16.gmra.mrb[0].mxu0 %v216
  %v279 = vpop.f32.mrb[0].mxu0
  %v280 = vadd.f32 0.0, %v279
  %v281 = vpop.f32.mrb[0].mxu0
  %v282 = vpop.f32.mrb[0].mxu0
  %v283 = vadd.f32 0.0, %v282
  %v284 = vpop.f32.mrb[0].mxu0
  %285 = vmatprep.mubr.bf16.mxu0 0
  %286 = vmatmul.mubr.bf16.gmra.mrb[0].mxu0 %v219
  %v287 = vpop.f32.mrb[0].mxu0
  %v288 = vadd.f32 0.0, %v287
  %v289 = vpop.f32.mrb[0].mxu0
  %v290 = vpop.f32.mrb[0].mxu0
  %v291 = vpop.f32.mrb[0].mxu0
  %292 = vdwg.mxu0
  %302 = vrot.lane.b32.xlu0 %v164, 96
  %v303 = vpop.permute.xlu0 %302
  %304 = vrot.lane.b32.xlu0 %v165, 96
  %v305 = vpop.permute.xlu0 %304
  %306 = vrot.lane.b32.xlu0 %v166, 96
  %v307 = vpop.permute.xlu0 %306
  %308 = vrot.lane.b32.xlu0 %v167, 96
  %v309 = vpop.permute.xlu0 %308
  %310 = vrot.lane.b32.xlu0 %v168, 96
  %v311 = vpop.permute.xlu0 %310
  %312 = vrot.lane.b32.xlu0 %v169, 96
  %v313 = vpop.permute.xlu0 %312
  %314 = vrot.lane.b32.xlu0 %v170, 96
  %v315 = vpop.permute.xlu0 %314
  %316 = vrot.lane.b32.xlu0 %v171, 96
  %v317 = vpop.permute.xlu0 %316
  %318 = vrot.lane.b32.xlu0 %v172, 96
  %v319 = vpop.permute.xlu0 %318
  %v329 = vmul.f32 %v256, %v303
  %v330 = vmul.f32 %v259, %v305
  %v331 = vmul.f32 %v264, %v307
  %v332 = vmul.f32 %v267, %v309
  %v333 = vmul.f32 %v272, %v311
  %v334 = vmul.f32 %v275, %v313
  %v335 = vmul.f32 %v280, %v315
  %v336 = vmul.f32 %v283, %v317
  %v337 = vmul.f32 %v288, %v319
  %v338 = vadd.f32 %v182, %v329
  %v339 = vadd.f32 %v183, %v330
  %v340 = vadd.f32 %v184, %v331
  %v341 = vadd.f32 %v185, %v332
  %v342 = vadd.f32 %v186, %v333
  %v343 = vadd.f32 %v187, %v334
  %v344 = vadd.f32 %v188, %v335
  %v345 = vadd.f32 %v189, %v336
  %v346 = vadd.f32 %v190, %v337
  %347 = vrot.lane.b32.xlu0 %v57, 120
  %v348 = vpop.permute.xlu0 %347
  %349 = vrot.lane.b32.xlu0 %v58, 120
  %v350 = vpop.permute.xlu0 %349
  %351 = vrot.lane.b32.xlu0 %v59, 120
  %v352 = vpop.permute.xlu0 %351
  %353 = vrot.lane.b32.xlu0 %v60, 120
  %v354 = vpop.permute.xlu0 %353
  %355 = vrot.lane.b32.xlu0 %v61, 120
  %v356 = vpop.permute.xlu0 %355
  %v358 = vsel %vm63, %v348, 0
  %v361 = vsel %vm63, %v350, 0
  %v364 = vsel %vm63, %v352, 0
  %v367 = vsel %vm63, %v354, 0
  %v370 = vsel %vm63, %v356, 0
  %372 = vmatprep.subr.bf16.mxu0 0
  %373 = vmatpush1.bf16.msra.mxu0 %v81
  %374 = vmatprep.subr.bf16.mxu0 0
  %375 = vmatpush1.bf16.msra.mxu0 0
  %376 = vmatprep.subr.bf16.mxu0 0
  %377 = vmatpush1.bf16.msra.mxu0 0
  %378 = vmatprep.subr.bf16.mxu0 0
  %379 = vmatpush1.bf16.msra.mxu0 0
  %380 = vmatprep.subr.bf16.mxu0 0
  %381 = vmatpush1.bf16.msra.mxu0 0
  %382 = vmatprep.subr.bf16.mxu0 0
  %383 = vmatpush1.bf16.msra.mxu0 0
  %384 = vmatprep.subr.bf16.mxu0 0
  %385 = vmatpush1.bf16.msra.mxu0 0
  %386 = vmatprep.subr.bf16.mxu0 0
  %387 = vmatpush1.bf16.msra.mxu0 0
  %388 = vmatprep.subr.bf16.mxu0 0
  %389 = vmatpush1.bf16.msra.mxu0 0
  %390 = vmatprep.subr.bf16.mxu0 0
  %391 = vmatpush1.bf16.msra.mxu0 0
  %392 = vmatprep.subr.bf16.mxu0 0
  %393 = vmatpush1.bf16.msra.mxu0 0
  %394 = vmatprep.subr.bf16.mxu0 0
  %395 = vmatpush1.bf16.msra.mxu0 0
  %396 = vmatprep.subr.bf16.mxu0 0
  %397 = vmatpush1.bf16.msra.mxu0 0
  %398 = vmatprep.subr.bf16.mxu0 0
  %399 = vmatpush1.bf16.msra.mxu0 0
  %400 = vmatprep.subr.bf16.mxu0 0
  %401 = vmatpush1.bf16.msra.mxu0 0
  %402 = vmatprep.subr.bf16.mxu0 0
  %403 = vmatpush1.bf16.msra.mxu0 0
  %404 = vmatprep.mubr.bf16.mxu0 0
  %405 = vmatmul.mubr.bf16.gmra.mrb[0].mxu0 %v358
  %v406 = vpop.f32.mrb[0].mxu0
  %v407 = vadd.f32 0.0, %v406
  %v408 = vpop.f32.mrb[0].mxu0
  %v409 = vpop.f32.mrb[0].mxu0
  %v410 = vadd.f32 0.0, %v409
  %v411 = vpop.f32.mrb[0].mxu0
  %412 = vmatprep.mubr.bf16.mxu0 0
  %413 = vmatmul.mubr.bf16.gmra.mrb[0].mxu0 %v361
  %v414 = vpop.f32.mrb[0].mxu0
  %v415 = vadd.f32 0.0, %v414
  %v416 = vpop.f32.mrb[0].mxu0
  %v417 = vpop.f32.mrb[0].mxu0
  %v418 = vadd.f32 0.0, %v417
  %v419 = vpop.f32.mrb[0].mxu0
  %420 = vmatprep.mubr.bf16.mxu0 0
  %421 = vmatmul.mubr.bf16.gmra.mrb[0].mxu0 %v364
  %v422 = vpop.f32.mrb[0].mxu0
  %v423 = vadd.f32 0.0, %v422
  %v424 = vpop.f32.mrb[0].mxu0
  %v425 = vpop.f32.mrb[0].mxu0
  %v426 = vadd.f32 0.0, %v425
  %v427 = vpop.f32.mrb[0].mxu0
  %428 = vmatprep.mubr.bf16.mxu0 0
  %429 = vmatmul.mubr.bf16.gmra.mrb[0].mxu0 %v367
  %v430 = vpop.f32.mrb[0].mxu0
  %v431 = vadd.f32 0.0, %v430
  %v432 = vpop.f32.mrb[0].mxu0
  %v433 = vpop.f32.mrb[0].mxu0
  %v434 = vadd.f32 0.0, %v433
  %v435 = vpop.f32.mrb[0].mxu0
  %436 = vmatprep.mubr.bf16.mxu0 0
  %437 = vmatmul.mubr.bf16.gmra.mrb[0].mxu0 %v370
  %v438 = vpop.f32.mrb[0].mxu0
  %v439 = vadd.f32 0.0, %v438
  %v440 = vpop.f32.mrb[0].mxu0
  %v441 = vpop.f32.mrb[0].mxu0
  %v442 = vpop.f32.mrb[0].mxu0
  %443 = vdwg.mxu0
  %444 = vrot.lane.b32.xlu0 %v164, 64
  %v445 = vpop.permute.xlu0 %444
  %446 = vrot.lane.b32.xlu0 %v165, 64
  %v447 = vpop.permute.xlu0 %446
  %448 = vrot.lane.b32.xlu0 %v166, 64
  %v449 = vpop.permute.xlu0 %448
  %450 = vrot.lane.b32.xlu0 %v167, 64
  %v451 = vpop.permute.xlu0 %450
  %452 = vrot.lane.b32.xlu0 %v168, 64
  %v453 = vpop.permute.xlu0 %452
  %454 = vrot.lane.b32.xlu0 %v169, 64
  %v455 = vpop.permute.xlu0 %454
  %456 = vrot.lane.b32.xlu0 %v170, 64
  %v457 = vpop.permute.xlu0 %456
  %458 = vrot.lane.b32.xlu0 %v171, 64
  %v459 = vpop.permute.xlu0 %458
  %460 = vrot.lane.b32.xlu0 %v172, 64
  %v461 = vpop.permute.xlu0 %460
  %v471 = vmul.f32 %v407, %v445
  %v472 = vmul.f32 %v410, %v447
  %v473 = vmul.f32 %v415, %v449
  %v474 = vmul.f32 %v418, %v451
  %v475 = vmul.f32 %v423, %v453
  %v476 = vmul.f32 %v426, %v455
  %v477 = vmul.f32 %v431, %v457
  %v478 = vmul.f32 %v434, %v459
  %v479 = vmul.f32 %v439, %v461
  %v480 = vadd.f32 %v338, %v471
  %v481 = vadd.f32 %v339, %v472
  %v482 = vadd.f32 %v340, %v473
  %v483 = vadd.f32 %v341, %v474
  %v484 = vadd.f32 %v342, %v475
  %v485 = vadd.f32 %v343, %v476
  %v486 = vadd.f32 %v344, %v477
  %v487 = vadd.f32 %v345, %v478
  %v488 = vadd.f32 %v346, %v479
  %489 = vrot.lane.b32.xlu0 %v57, 116
  %v490 = vpop.permute.xlu0 %489
  %491 = vrot.lane.b32.xlu0 %v58, 116
  %v492 = vpop.permute.xlu0 %491
  %493 = vrot.lane.b32.xlu0 %v59, 116
  %v494 = vpop.permute.xlu0 %493
  %495 = vrot.lane.b32.xlu0 %v60, 116
  %v496 = vpop.permute.xlu0 %495
  %497 = vrot.lane.b32.xlu0 %v61, 116
  %v498 = vpop.permute.xlu0 %497
  %v500 = vsel %vm63, %v490, 0
  %v503 = vsel %vm63, %v492, 0
  %v506 = vsel %vm63, %v494, 0
  %v509 = vsel %vm63, %v496, 0
  %v512 = vsel %vm63, %v498, 0
  %514 = vmatprep.subr.bf16.mxu0 0
  %515 = vmatpush1.bf16.msra.mxu0 %v81
  %516 = vmatprep.subr.bf16.mxu0 0
  %517 = vmatpush1.bf16.msra.mxu0 0
  %518 = vmatprep.subr.bf16.mxu0 0
  %519 = vmatpush1.bf16.msra.mxu0 0
  %520 = vmatprep.subr.bf16.mxu0 0
  %521 = vmatpush1.bf16.msra.mxu0 0
  %522 = vmatprep.subr.bf16.mxu0 0
  %523 = vmatpush1.bf16.msra.mxu0 0
  %524 = vmatprep.subr.bf16.mxu0 0
  %525 = vmatpush1.bf16.msra.mxu0 0
  %526 = vmatprep.subr.bf16.mxu0 0
  %527 = vmatpush1.bf16.msra.mxu0 0
  %528 = vmatprep.subr.bf16.mxu0 0
  %529 = vmatpush1.bf16.msra.mxu0 0
  %530 = vmatprep.subr.bf16.mxu0 0
  %531 = vmatpush1.bf16.msra.mxu0 0
  %532 = vmatprep.subr.bf16.mxu0 0
  %533 = vmatpush1.bf16.msra.mxu0 0
  %534 = vmatprep.subr.bf16.mxu0 0
  %535 = vmatpush1.bf16.msra.mxu0 0
  %536 = vmatprep.subr.bf16.mxu0 0
  %537 = vmatpush1.bf16.msra.mxu0 0
  %538 = vmatprep.subr.bf16.mxu0 0
  %539 = vmatpush1.bf16.msra.mxu0 0
  %540 = vmatprep.subr.bf16.mxu0 0
  %541 = vmatpush1.bf16.msra.mxu0 0
  %542 = vmatprep.subr.bf16.mxu0 0
  %543 = vmatpush1.bf16.msra.mxu0 0
  %544 = vmatprep.subr.bf16.mxu0 0
  %545 = vmatpush1.bf16.msra.mxu0 0
  %546 = vmatprep.mubr.bf16.mxu0 0
  %547 = vmatmul.mubr.bf16.gmra.mrb[0].mxu0 %v500
  %v548 = vpop.f32.mrb[0].mxu0
  %v549 = vadd.f32 0.0, %v548
  %v550 = vpop.f32.mrb[0].mxu0
  %v551 = vpop.f32.mrb[0].mxu0
  %v552 = vadd.f32 0.0, %v551
  %v553 = vpop.f32.mrb[0].mxu0
  %554 = vmatprep.mubr.bf16.mxu0 0
  %555 = vmatmul.mubr.bf16.gmra.mrb[0].mxu0 %v503
  %v556 = vpop.f32.mrb[0].mxu0
  %v557 = vadd.f32 0.0, %v556
  %v558 = vpop.f32.mrb[0].mxu0
  %v559 = vpop.f32.mrb[0].mxu0
  %v560 = vadd.f32 0.0, %v559
  %v561 = vpop.f32.mrb[0].mxu0
  %562 = vmatprep.mubr.bf16.mxu0 0
  %563 = vmatmul.mubr.bf16.gmra.mrb[0].mxu0 %v506
  %v564 = vpop.f32.mrb[0].mxu0
  %v565 = vadd.f32 0.0, %v564
  %v566 = vpop.f32.mrb[0].mxu0
  %v567 = vpop.f32.mrb[0].mxu0
  %v568 = vadd.f32 0.0, %v567
  %v569 = vpop.f32.mrb[0].mxu0
  %570 = vmatprep.mubr.bf16.mxu0 0
  %571 = vmatmul.mubr.bf16.gmra.mrb[0].mxu0 %v509
  %v572 = vpop.f32.mrb[0].mxu0
  %v573 = vadd.f32 0.0, %v572
  %v574 = vpop.f32.mrb[0].mxu0
  %v575 = vpop.f32.mrb[0].mxu0
  %v576 = vadd.f32 0.0, %v575
  %v577 = vpop.f32.mrb[0].mxu0
  %578 = vmatprep.mubr.bf16.mxu0 0
  %579 = vmatmul.mubr.bf16.gmra.mrb[0].mxu0 %v512
  %v580 = vpop.f32.mrb[0].mxu0
  %v581 = vadd.f32 0.0, %v580
  %v582 = vpop.f32.mrb[0].mxu0
  %v583 = vpop.f32.mrb[0].mxu0
  %v584 = vpop.f32.mrb[0].mxu0
  %585 = vdwg.mxu0
  %586 = vrot.lane.b32.xlu0 %v164, 32
  %v587 = vpop.permute.xlu0 %586
  %588 = vrot.lane.b32.xlu0 %v165, 32
  %v589 = vpop.permute.xlu0 %588
  %590 = vrot.lane.b32.xlu0 %v166, 32
  %v591 = vpop.permute.xlu0 %590
  %592 = vrot.lane.b32.xlu0 %v167, 32
  %v593 = vpop.permute.xlu0 %592
  %594 = vrot.lane.b32.xlu0 %v168, 32
  %v595 = vpop.permute.xlu0 %594
  %596 = vrot.lane.b32.xlu0 %v169, 32
  %v597 = vpop.permute.xlu0 %596
  %598 = vrot.lane.b32.xlu0 %v170, 32
  %v599 = vpop.permute.xlu0 %598
  %600 = vrot.lane.b32.xlu0 %v171, 32
  %v601 = vpop.permute.xlu0 %600
  %602 = vrot.lane.b32.xlu0 %v172, 32
  %v603 = vpop.permute.xlu0 %602
  %v613 = vmul.f32 %v549, %v587
  %v614 = vmul.f32 %v552, %v589
  %v615 = vmul.f32 %v557, %v591
  %v616 = vmul.f32 %v560, %v593
  %v617 = vmul.f32 %v565, %v595
  %v618 = vmul.f32 %v568, %v597
  %v619 = vmul.f32 %v573, %v599
  %v620 = vmul.f32 %v576, %v601
  %v621 = vmul.f32 %v581, %v603
  %v622 = vadd.f32 %v480, %v613
  %v623 = vadd.f32 %v481, %v614
  %v624 = vadd.f32 %v482, %v615
  %v625 = vadd.f32 %v483, %v616
  %v626 = vadd.f32 %v484, %v617
  %v627 = vadd.f32 %v485, %v618
  %v628 = vadd.f32 %v486, %v619
  %v629 = vadd.f32 %v487, %v620
  %v630 = vadd.f32 %v488, %v621
  %631 = vrot.lane.b32.xlu0 %v57, 112
  %v632 = vpop.permute.xlu0 %631
  %633 = vrot.lane.b32.xlu0 %v58, 112
  %v634 = vpop.permute.xlu0 %633
  %635 = vrot.lane.b32.xlu0 %v59, 112
  %v636 = vpop.permute.xlu0 %635
  %637 = vrot.lane.b32.xlu0 %v60, 112
  %v638 = vpop.permute.xlu0 %637
  %639 = vrot.lane.b32.xlu0 %v61, 112
  %v640 = vpop.permute.xlu0 %639
  %v642 = vsel %vm63, %v632, 0
  %v645 = vsel %vm63, %v634, 0
  %v648 = vsel %vm63, %v636, 0
  %v651 = vsel %vm63, %v638, 0
  %v654 = vsel %vm63, %v640, 0
  %656 = vmatprep.subr.bf16.mxu0 0
  %657 = vmatpush1.bf16.msra.mxu0 %v81
  %658 = vmatprep.subr.bf16.mxu0 0
  %659 = vmatpush1.bf16.msra.mxu0 0
  %660 = vmatprep.subr.bf16.mxu0 0
  %661 = vmatpush1.bf16.msra.mxu0 0
  %662 = vmatprep.subr.bf16.mxu0 0
  %663 = vmatpush1.bf16.msra.mxu0 0
  %664 = vmatprep.subr.bf16.mxu0 0
  %665 = vmatpush1.bf16.msra.mxu0 0
  %666 = vmatprep.subr.bf16.mxu0 0
  %667 = vmatpush1.bf16.msra.mxu0 0
  %668 = vmatprep.subr.bf16.mxu0 0
  %669 = vmatpush1.bf16.msra.mxu0 0
  %670 = vmatprep.subr.bf16.mxu0 0
  %671 = vmatpush1.bf16.msra.mxu0 0
  %672 = vmatprep.subr.bf16.mxu0 0
  %673 = vmatpush1.bf16.msra.mxu0 0
  %674 = vmatprep.subr.bf16.mxu0 0
  %675 = vmatpush1.bf16.msra.mxu0 0
  %676 = vmatprep.subr.bf16.mxu0 0
  %677 = vmatpush1.bf16.msra.mxu0 0
  %678 = vmatprep.subr.bf16.mxu0 0
  %679 = vmatpush1.bf16.msra.mxu0 0
  %680 = vmatprep.subr.bf16.mxu0 0
  %681 = vmatpush1.bf16.msra.mxu0 0
  %682 = vmatprep.subr.bf16.mxu0 0
  %683 = vmatpush1.bf16.msra.mxu0 0
  %684 = vmatprep.subr.bf16.mxu0 0
  %685 = vmatpush1.bf16.msra.mxu0 0
  %686 = vmatprep.subr.bf16.mxu0 0
  %687 = vmatpush1.bf16.msra.mxu0 0
  %688 = vmatprep.mubr.bf16.mxu0 0
  %689 = vmatmul.mubr.bf16.gmra.mrb[0].mxu0 %v642
  %v690 = vpop.f32.mrb[0].mxu0
  %v691 = vadd.f32 0.0, %v690
  %v692 = vpop.f32.mrb[0].mxu0
  %v693 = vpop.f32.mrb[0].mxu0
  %v694 = vadd.f32 0.0, %v693
  %v695 = vpop.f32.mrb[0].mxu0
  %696 = vmatprep.mubr.bf16.mxu0 0
  %697 = vmatmul.mubr.bf16.gmra.mrb[0].mxu0 %v645
  %v698 = vpop.f32.mrb[0].mxu0
  %v699 = vadd.f32 0.0, %v698
  %v700 = vpop.f32.mrb[0].mxu0
  %v701 = vpop.f32.mrb[0].mxu0
  %v702 = vadd.f32 0.0, %v701
  %v703 = vpop.f32.mrb[0].mxu0
  %704 = vmatprep.mubr.bf16.mxu0 0
  %705 = vmatmul.mubr.bf16.gmra.mrb[0].mxu0 %v648
  %v706 = vpop.f32.mrb[0].mxu0
  %v707 = vadd.f32 0.0, %v706
  %v708 = vpop.f32.mrb[0].mxu0
  %v709 = vpop.f32.mrb[0].mxu0
  %v710 = vadd.f32 0.0, %v709
  %v711 = vpop.f32.mrb[0].mxu0
  %712 = vmatprep.mubr.bf16.mxu0 0
  %713 = vmatmul.mubr.bf16.gmra.mrb[0].mxu0 %v651
  %v714 = vpop.f32.mrb[0].mxu0
  %v715 = vadd.f32 0.0, %v714
  %v716 = vpop.f32.mrb[0].mxu0
  %v717 = vpop.f32.mrb[0].mxu0
  %v718 = vadd.f32 0.0, %v717
  %v719 = vpop.f32.mrb[0].mxu0
  %720 = vmatprep.mubr.bf16.mxu0 0
  %721 = vmatmul.mubr.bf16.gmra.mrb[0].mxu0 %v654
  %v722 = vpop.f32.mrb[0].mxu0
  %v723 = vadd.f32 0.0, %v722
  %v724 = vpop.f32.mrb[0].mxu0
  %v725 = vpop.f32.mrb[0].mxu0
  %v726 = vpop.f32.mrb[0].mxu0
  %727 = vdwg.mxu0
  %v728 = vld [vmem:[%s0 + $0x4] sm:$0xf]
  %v729 = vld [vmem:[%s0 + $0xc] sm:$0xf]
  %v730 = vld [vmem:[%s0 + $0x14] sm:$0xf]
  %v731 = vld [vmem:[%s0 + $0x1c] sm:$0xf]
  %v732 = vld [vmem:[%s0 + $0x24] sm:$0xf]
  %v733 = vld [vmem:[%s0 + $0x2c] sm:$0xf]
  %v734 = vld [vmem:[%s0 + $0x34] sm:$0xf]
  %v735 = vld [vmem:[%s0 + $0x3c] sm:$0xf]
  %v736 = vld [vmem:[%s0 + $0x44] sm:$0xf]
  %v737 = vunpack.c.l.bf16 %v728
  %v738 = vunpack.c.l.bf16 %v729
  %v739 = vunpack.c.l.bf16 %v730
  %v740 = vunpack.c.l.bf16 %v731
  %v741 = vunpack.c.l.bf16 %v732
  %v742 = vunpack.c.l.bf16 %v733
  %v743 = vunpack.c.l.bf16 %v734
  %v744 = vunpack.c.l.bf16 %v735
  %v745 = vunpack.c.l.bf16 %v736
  %v746 = vmul.f32 %v691, %v737
  %v747 = vmul.f32 %v694, %v738
  %v748 = vmul.f32 %v699, %v739
  %v749 = vmul.f32 %v702, %v740
  %v750 = vmul.f32 %v707, %v741
  %v751 = vmul.f32 %v710, %v742
  %v752 = vmul.f32 %v715, %v743
  %v753 = vmul.f32 %v718, %v744
  %v754 = vmul.f32 %v723, %v745
  %v755 = vadd.f32 %v622, %v746
  %v756 = vadd.f32 %v623, %v747
  %v757 = vadd.f32 %v624, %v748
  %v758 = vadd.f32 %v625, %v749
  %v759 = vadd.f32 %v626, %v750
  %v760 = vadd.f32 %v627, %v751
  %v761 = vadd.f32 %v628, %v752
  %v762 = vadd.f32 %v629, %v753
  %v763 = vadd.f32 %v630, %v754
  %764 = vrot.lane.b32.xlu0 %v57, 108
  %v765 = vpop.permute.xlu0 %764
  %766 = vrot.lane.b32.xlu0 %v58, 108
  %v767 = vpop.permute.xlu0 %766
  %768 = vrot.lane.b32.xlu0 %v59, 108
  %v769 = vpop.permute.xlu0 %768
  %770 = vrot.lane.b32.xlu0 %v60, 108
  %v771 = vpop.permute.xlu0 %770
  %772 = vrot.lane.b32.xlu0 %v61, 108
  %v773 = vpop.permute.xlu0 %772
  %v775 = vsel %vm63, %v765, 0
  %v778 = vsel %vm63, %v767, 0
  %v781 = vsel %vm63, %v769, 0
  %v784 = vsel %vm63, %v771, 0
  %v787 = vsel %vm63, %v773, 0
  %789 = vmatprep.subr.bf16.mxu0 0
  %790 = vmatpush1.bf16.msra.mxu0 %v81
  %791 = vmatprep.subr.bf16.mxu0 0
  %792 = vmatpush1.bf16.msra.mxu0 0
  %793 = vmatprep.subr.bf16.mxu0 0
  %794 = vmatpush1.bf16.msra.mxu0 0
  %795 = vmatprep.subr.bf16.mxu0 0
  %796 = vmatpush1.bf16.msra.mxu0 0
  %797 = vmatprep.subr.bf16.mxu0 0
  %798 = vmatpush1.bf16.msra.mxu0 0
  %799 = vmatprep.subr.bf16.mxu0 0
  %800 = vmatpush1.bf16.msra.mxu0 0
  %801 = vmatprep.subr.bf16.mxu0 0
  %802 = vmatpush1.bf16.msra.mxu0 0
  %803 = vmatprep.subr.bf16.mxu0 0
  %804 = vmatpush1.bf16.msra.mxu0 0
  %805 = vmatprep.subr.bf16.mxu0 0
  %806 = vmatpush1.bf16.msra.mxu0 0
  %807 = vmatprep.subr.bf16.mxu0 0
  %808 = vmatpush1.bf16.msra.mxu0 0
  %809 = vmatprep.subr.bf16.mxu0 0
  %810 = vmatpush1.bf16.msra.mxu0 0
  %811 = vmatprep.subr.bf16.mxu0 0
  %812 = vmatpush1.bf16.msra.mxu0 0
  %813 = vmatprep.subr.bf16.mxu0 0
  %814 = vmatpush1.bf16.msra.mxu0 0
  %815 = vmatprep.subr.bf16.mxu0 0
  %816 = vmatpush1.bf16.msra.mxu0 0
  %817 = vmatprep.subr.bf16.mxu0 0
  %818 = vmatpush1.bf16.msra.mxu0 0
  %819 = vmatprep.subr.bf16.mxu0 0
  %820 = vmatpush1.bf16.msra.mxu0 0
  %821 = vmatprep.mubr.bf16.mxu0 0
  %822 = vmatmul.mubr.bf16.gmra.mrb[0].mxu0 %v775
  %v823 = vpop.f32.mrb[0].mxu0
  %v824 = vadd.f32 0.0, %v823
  %v825 = vpop.f32.mrb[0].mxu0
  %v826 = vpop.f32.mrb[0].mxu0
  %v827 = vadd.f32 0.0, %v826
  %v828 = vpop.f32.mrb[0].mxu0
  %829 = vmatprep.mubr.bf16.mxu0 0
  %830 = vmatmul.mubr.bf16.gmra.mrb[0].mxu0 %v778
  %v831 = vpop.f32.mrb[0].mxu0
  %v832 = vadd.f32 0.0, %v831
  %v833 = vpop.f32.mrb[0].mxu0
  %v834 = vpop.f32.mrb[0].mxu0
  %v835 = vadd.f32 0.0, %v834
  %v836 = vpop.f32.mrb[0].mxu0
  %837 = vmatprep.mubr.bf16.mxu0 0
  %838 = vmatmul.mubr.bf16.gmra.mrb[0].mxu0 %v781
  %v839 = vpop.f32.mrb[0].mxu0
  %v840 = vadd.f32 0.0, %v839
  %v841 = vpop.f32.mrb[0].mxu0
  %v842 = vpop.f32.mrb[0].mxu0
  %v843 = vadd.f32 0.0, %v842
  %v844 = vpop.f32.mrb[0].mxu0
  %845 = vmatprep.mubr.bf16.mxu0 0
  %846 = vmatmul.mubr.bf16.gmra.mrb[0].mxu0 %v784
  %v847 = vpop.f32.mrb[0].mxu0
  %v848 = vadd.f32 0.0, %v847
  %v849 = vpop.f32.mrb[0].mxu0
  %v850 = vpop.f32.mrb[0].mxu0
  %v851 = vadd.f32 0.0, %v850
  %v852 = vpop.f32.mrb[0].mxu0
  %853 = vmatprep.mubr.bf16.mxu0 0
  %854 = vmatmul.mubr.bf16.gmra.mrb[0].mxu0 %v787
  %v855 = vpop.f32.mrb[0].mxu0
  %v856 = vadd.f32 0.0, %v855
  %v857 = vpop.f32.mrb[0].mxu0
  %v858 = vpop.f32.mrb[0].mxu0
  %v859 = vpop.f32.mrb[0].mxu0
  %860 = vdwg.mxu0
  %870 = vrot.lane.b32.xlu0 %v737, 96
  %v871 = vpop.permute.xlu0 %870
  %872 = vrot.lane.b32.xlu0 %v738, 96
  %v873 = vpop.permute.xlu0 %872
  %874 = vrot.lane.b32.xlu0 %v739, 96
  %v875 = vpop.permute.xlu0 %874
  %876 = vrot.lane.b32.xlu0 %v740, 96
  %v877 = vpop.permute.xlu0 %876
  %878 = vrot.lane.b32.xlu0 %v741, 96
  %v879 = vpop.permute.xlu0 %878
  %880 = vrot.lane.b32.xlu0 %v742, 96
  %v881 = vpop.permute.xlu0 %880
  %882 = vrot.lane.b32.xlu0 %v743, 96
  %v883 = vpop.permute.xlu0 %882
  %884 = vrot.lane.b32.xlu0 %v744, 96
  %v885 = vpop.permute.xlu0 %884
  %886 = vrot.lane.b32.xlu0 %v745, 96
  %v887 = vpop.permute.xlu0 %886
  %v897 = vmul.f32 %v824, %v871
  %v898 = vmul.f32 %v827, %v873
  %v899 = vmul.f32 %v832, %v875
  %v900 = vmul.f32 %v835, %v877
  %v901 = vmul.f32 %v840, %v879
  %v902 = vmul.f32 %v843, %v881
  %v903 = vmul.f32 %v848, %v883
  %v904 = vmul.f32 %v851, %v885
  %v905 = vmul.f32 %v856, %v887
  %v906 = vadd.f32 %v755, %v897
  %v907 = vadd.f32 %v756, %v898
  %v908 = vadd.f32 %v757, %v899
  %v909 = vadd.f32 %v758, %v900
  %v910 = vadd.f32 %v759, %v901
  %v911 = vadd.f32 %v760, %v902
  %v912 = vadd.f32 %v761, %v903
  %v913 = vadd.f32 %v762, %v904
  %v914 = vadd.f32 %v763, %v905
  %915 = vrot.lane.b32.xlu0 %v57, 104
  %v916 = vpop.permute.xlu0 %915
  %917 = vrot.lane.b32.xlu0 %v58, 104
  %v918 = vpop.permute.xlu0 %917
  %919 = vrot.lane.b32.xlu0 %v59, 104
  %v920 = vpop.permute.xlu0 %919
  %921 = vrot.lane.b32.xlu0 %v60, 104
  %v922 = vpop.permute.xlu0 %921
  %923 = vrot.lane.b32.xlu0 %v61, 104
  %v924 = vpop.permute.xlu0 %923
  %v926 = vsel %vm63, %v916, 0
  %v929 = vsel %vm63, %v918, 0
  %v932 = vsel %vm63, %v920, 0
  %v935 = vsel %vm63, %v922, 0
  %v938 = vsel %vm63, %v924, 0
  %940 = vmatprep.subr.bf16.mxu0 0
  %941 = vmatpush1.bf16.msra.mxu0 %v81
  %942 = vmatprep.subr.bf16.mxu0 0
  %943 = vmatpush1.bf16.msra.mxu0 0
  %944 = vmatprep.subr.bf16.mxu0 0
  %945 = vmatpush1.bf16.msra.mxu0 0
  %946 = vmatprep.subr.bf16.mxu0 0
  %947 = vmatpush1.bf16.msra.mxu0 0
  %948 = vmatprep.subr.bf16.mxu0 0
  %949 = vmatpush1.bf16.msra.mxu0 0
  %950 = vmatprep.subr.bf16.mxu0 0
  %951 = vmatpush1.bf16.msra.mxu0 0
  %952 = vmatprep.subr.bf16.mxu0 0
  %953 = vmatpush1.bf16.msra.mxu0 0
  %954 = vmatprep.subr.bf16.mxu0 0
  %955 = vmatpush1.bf16.msra.mxu0 0
  %956 = vmatprep.subr.bf16.mxu0 0
  %957 = vmatpush1.bf16.msra.mxu0 0
  %958 = vmatprep.subr.bf16.mxu0 0
  %959 = vmatpush1.bf16.msra.mxu0 0
  %960 = vmatprep.subr.bf16.mxu0 0
  %961 = vmatpush1.bf16.msra.mxu0 0
  %962 = vmatprep.subr.bf16.mxu0 0
  %963 = vmatpush1.bf16.msra.mxu0 0
  %964 = vmatprep.subr.bf16.mxu0 0
  %965 = vmatpush1.bf16.msra.mxu0 0
  %966 = vmatprep.subr.bf16.mxu0 0
  %967 = vmatpush1.bf16.msra.mxu0 0
  %968 = vmatprep.subr.bf16.mxu0 0
  %969 = vmatpush1.bf16.msra.mxu0 0
  %970 = vmatprep.subr.bf16.mxu0 0
  %971 = vmatpush1.bf16.msra.mxu0 0
  %972 = vmatprep.mubr.bf16.mxu0 0
  %973 = vmatmul.mubr.bf16.gmra.mrb[0].mxu0 %v926
  %v974 = vpop.f32.mrb[0].mxu0
  %v975 = vadd.f32 0.0, %v974
  %v976 = vpop.f32.mrb[0].mxu0
  %v977 = vpop.f32.mrb[0].mxu0
  %v978 = vadd.f32 0.0, %v977
  %v979 = vpop.f32.mrb[0].mxu0
  %980 = vmatprep.mubr.bf16.mxu0 0
  %981 = vmatmul.mubr.bf16.gmra.mrb[0].mxu0 %v929
  %v982 = vpop.f32.mrb[0].mxu0
  %v983 = vadd.f32 0.0, %v982
  %v984 = vpop.f32.mrb[0].mxu0
  %v985 = vpop.f32.mrb[0].mxu0
  %v986 = vadd.f32 0.0, %v985
  %v987 = vpop.f32.mrb[0].mxu0
  %988 = vmatprep.mubr.bf16.mxu0 0
  %989 = vmatmul.mubr.bf16.gmra.mrb[0].mxu0 %v932
  %v990 = vpop.f32.mrb[0].mxu0
  %v991 = vadd.f32 0.0, %v990
  %v992 = vpop.f32.mrb[0].mxu0
  %v993 = vpop.f32.mrb[0].mxu0
  %v994 = vadd.f32 0.0, %v993
  %v995 = vpop.f32.mrb[0].mxu0
  %996 = vmatprep.mubr.bf16.mxu0 0
  %997 = vmatmul.mubr.bf16.gmra.mrb[0].mxu0 %v935
  %v998 = vpop.f32.mrb[0].mxu0
  %v999 = vadd.f32 0.0, %v998
  %v1000 = vpop.f32.mrb[0].mxu0
  %v1001 = vpop.f32.mrb[0].mxu0
  %v1002 = vadd.f32 0.0, %v1001
  %v1003 = vpop.f32.mrb[0].mxu0
  %1004 = vmatprep.mubr.bf16.mxu0 0
  %1005 = vmatmul.mubr.bf16.gmra.mrb[0].mxu0 %v938
  %v1006 = vpop.f32.mrb[0].mxu0
  %v1007 = vadd.f32 0.0, %v1006
  %v1008 = vpop.f32.mrb[0].mxu0
  %v1009 = vpop.f32.mrb[0].mxu0
  %v1010 = vpop.f32.mrb[0].mxu0
  %1011 = vdwg.mxu0
  %1012 = vrot.lane.b32.xlu0 %v737, 64
  %v1013 = vpop.permute.xlu0 %1012
  %1014 = vrot.lane.b32.xlu0 %v738, 64
  %v1015 = vpop.permute.xlu0 %1014
  %1016 = vrot.lane.b32.xlu0 %v739, 64
  %v1017 = vpop.permute.xlu0 %1016
  %1018 = vrot.lane.b32.xlu0 %v740, 64
  %v1019 = vpop.permute.xlu0 %1018
  %1020 = vrot.lane.b32.xlu0 %v741, 64
  %v1021 = vpop.permute.xlu0 %1020
  %1022 = vrot.lane.b32.xlu0 %v742, 64
  %v1023 = vpop.permute.xlu0 %1022
  %1024 = vrot.lane.b32.xlu0 %v743, 64
  %v1025 = vpop.permute.xlu0 %1024
  %1026 = vrot.lane.b32.xlu0 %v744, 64
  %v1027 = vpop.permute.xlu0 %1026
  %1028 = vrot.lane.b32.xlu0 %v745, 64
  %v1029 = vpop.permute.xlu0 %1028
  %v1039 = vmul.f32 %v975, %v1013
  %v1040 = vmul.f32 %v978, %v1015
  %v1041 = vmul.f32 %v983, %v1017
  %v1042 = vmul.f32 %v986, %v1019
  %v1043 = vmul.f32 %v991, %v1021
  %v1044 = vmul.f32 %v994, %v1023
  %v1045 = vmul.f32 %v999, %v1025
  %v1046 = vmul.f32 %v1002, %v1027
  %v1047 = vmul.f32 %v1007, %v1029
  %v1048 = vadd.f32 %v906, %v1039
  %v1049 = vadd.f32 %v907, %v1040
  %v1050 = vadd.f32 %v908, %v1041
  %v1051 = vadd.f32 %v909, %v1042
  %v1052 = vadd.f32 %v910, %v1043
  %v1053 = vadd.f32 %v911, %v1044
  %v1054 = vadd.f32 %v912, %v1045
  %v1055 = vadd.f32 %v913, %v1046
  %v1056 = vadd.f32 %v914, %v1047
  %1057 = vrot.lane.b32.xlu0 %v57, 100
  %v1058 = vpop.permute.xlu0 %1057
  %1059 = vrot.lane.b32.xlu0 %v58, 100
  %v1060 = vpop.permute.xlu0 %1059
  %1061 = vrot.lane.b32.xlu0 %v59, 100
  %v1062 = vpop.permute.xlu0 %1061
  %1063 = vrot.lane.b32.xlu0 %v60, 100
  %v1064 = vpop.permute.xlu0 %1063
  %1065 = vrot.lane.b32.xlu0 %v61, 100
  %v1066 = vpop.permute.xlu0 %1065
  %v1068 = vsel %vm63, %v1058, 0
  %v1071 = vsel %vm63, %v1060, 0
  %v1074 = vsel %vm63, %v1062, 0
  %v1077 = vsel %vm63, %v1064, 0
  %v1080 = vsel %vm63, %v1066, 0
  %1082 = vmatprep.subr.bf16.mxu0 0
  %1083 = vmatpush1.bf16.msra.mxu0 %v81
  %1084 = vmatprep.subr.bf16.mxu0 0
  %1085 = vmatpush1.bf16.msra.mxu0 0
  %1086 = vmatprep.subr.bf16.mxu0 0
  %1087 = vmatpush1.bf16.msra.mxu0 0
  %1088 = vmatprep.subr.bf16.mxu0 0
  %1089 = vmatpush1.bf16.msra.mxu0 0
  %1090 = vmatprep.subr.bf16.mxu0 0
  %1091 = vmatpush1.bf16.msra.mxu0 0
  %1092 = vmatprep.subr.bf16.mxu0 0
  %1093 = vmatpush1.bf16.msra.mxu0 0
  %1094 = vmatprep.subr.bf16.mxu0 0
  %1095 = vmatpush1.bf16.msra.mxu0 0
  %1096 = vmatprep.subr.bf16.mxu0 0
  %1097 = vmatpush1.bf16.msra.mxu0 0
  %1098 = vmatprep.subr.bf16.mxu0 0
  %1099 = vmatpush1.bf16.msra.mxu0 0
  %1100 = vmatprep.subr.bf16.mxu0 0
  %1101 = vmatpush1.bf16.msra.mxu0 0
  %1102 = vmatprep.subr.bf16.mxu0 0
  %1103 = vmatpush1.bf16.msra.mxu0 0
  %1104 = vmatprep.subr.bf16.mxu0 0
  %1105 = vmatpush1.bf16.msra.mxu0 0
  %1106 = vmatprep.subr.bf16.mxu0 0
  %1107 = vmatpush1.bf16.msra.mxu0 0
  %1108 = vmatprep.subr.bf16.mxu0 0
  %1109 = vmatpush1.bf16.msra.mxu0 0
  %1110 = vmatprep.subr.bf16.mxu0 0
  %1111 = vmatpush1.bf16.msra.mxu0 0
  %1112 = vmatprep.subr.bf16.mxu0 0
  %1113 = vmatpush1.bf16.msra.mxu0 0
  %1114 = vmatprep.mubr.bf16.mxu0 0
  %1115 = vmatmul.mubr.bf16.gmra.mrb[0].mxu0 %v1068
  %v1116 = vpop.f32.mrb[0].mxu0
  %v1117 = vadd.f32 0.0, %v1116
  %v1118 = vpop.f32.mrb[0].mxu0
  %v1119 = vpop.f32.mrb[0].mxu0
  %v1120 = vadd.f32 0.0, %v1119
  %v1121 = vpop.f32.mrb[0].mxu0
  %1122 = vmatprep.mubr.bf16.mxu0 0
  %1123 = vmatmul.mubr.bf16.gmra.mrb[0].mxu0 %v1071
  %v1124 = vpop.f32.mrb[0].mxu0
  %v1125 = vadd.f32 0.0, %v1124
  %v1126 = vpop.f32.mrb[0].mxu0
  %v1127 = vpop.f32.mrb[0].mxu0
  %v1128 = vadd.f32 0.0, %v1127
  %v1129 = vpop.f32.mrb[0].mxu0
  %1130 = vmatprep.mubr.bf16.mxu0 0
  %1131 = vmatmul.mubr.bf16.gmra.mrb[0].mxu0 %v1074
  %v1132 = vpop.f32.mrb[0].mxu0
  %v1133 = vadd.f32 0.0, %v1132
  %v1134 = vpop.f32.mrb[0].mxu0
  %v1135 = vpop.f32.mrb[0].mxu0
  %v1136 = vadd.f32 0.0, %v1135
  %v1137 = vpop.f32.mrb[0].mxu0
  %1138 = vmatprep.mubr.bf16.mxu0 0
  %1139 = vmatmul.mubr.bf16.gmra.mrb[0].mxu0 %v1077
  %v1140 = vpop.f32.mrb[0].mxu0
  %v1141 = vadd.f32 0.0, %v1140
  %v1142 = vpop.f32.mrb[0].mxu0
  %v1143 = vpop.f32.mrb[0].mxu0
  %v1144 = vadd.f32 0.0, %v1143
  %v1145 = vpop.f32.mrb[0].mxu0
  %1146 = vmatprep.mubr.bf16.mxu0 0
  %1147 = vmatmul.mubr.bf16.gmra.mrb[0].mxu0 %v1080
  %v1148 = vpop.f32.mrb[0].mxu0
  %v1149 = vadd.f32 0.0, %v1148
  %v1150 = vpop.f32.mrb[0].mxu0
  %v1151 = vpop.f32.mrb[0].mxu0
  %v1152 = vpop.f32.mrb[0].mxu0
  %1153 = vdwg.mxu0
  %1154 = vrot.lane.b32.xlu0 %v737, 32
  %v1155 = vpop.permute.xlu0 %1154
  %1156 = vrot.lane.b32.xlu0 %v738, 32
  %v1157 = vpop.permute.xlu0 %1156
  %1158 = vrot.lane.b32.xlu0 %v739, 32
  %v1159 = vpop.permute.xlu0 %1158
  %1160 = vrot.lane.b32.xlu0 %v740, 32
  %v1161 = vpop.permute.xlu0 %1160
  %1162 = vrot.lane.b32.xlu0 %v741, 32
  %v1163 = vpop.permute.xlu0 %1162
  %1164 = vrot.lane.b32.xlu0 %v742, 32
  %v1165 = vpop.permute.xlu0 %1164
  %1166 = vrot.lane.b32.xlu0 %v743, 32
  %v1167 = vpop.permute.xlu0 %1166
  %1168 = vrot.lane.b32.xlu0 %v744, 32
  %v1169 = vpop.permute.xlu0 %1168
  %1170 = vrot.lane.b32.xlu0 %v745, 32
  %v1171 = vpop.permute.xlu0 %1170
  %v1181 = vmul.f32 %v1117, %v1155
  %v1182 = vmul.f32 %v1120, %v1157
  %v1183 = vmul.f32 %v1125, %v1159
  %v1184 = vmul.f32 %v1128, %v1161
  %v1185 = vmul.f32 %v1133, %v1163
  %v1186 = vmul.f32 %v1136, %v1165
  %v1187 = vmul.f32 %v1141, %v1167
  %v1188 = vmul.f32 %v1144, %v1169
  %v1189 = vmul.f32 %v1149, %v1171
  %v1190 = vadd.f32 %v1048, %v1181
  %v1191 = vadd.f32 %v1049, %v1182
  %v1192 = vadd.f32 %v1050, %v1183
  %v1193 = vadd.f32 %v1051, %v1184
  %v1194 = vadd.f32 %v1052, %v1185
  %v1195 = vadd.f32 %v1053, %v1186
  %v1196 = vadd.f32 %v1054, %v1187
  %v1197 = vadd.f32 %v1055, %v1188
  %v1198 = vadd.f32 %v1056, %v1189
  %v1199 = vpack.c.bf16 %v1191, %v1190
  %v1200 = vpack.c.bf16 %v1193, %v1192
  %v1201 = vpack.c.bf16 %v1195, %v1194
  %v1202 = vpack.c.bf16 %v1197, %v1196
  %v1203 = vpack.c.bf16 %v1198, %v1198
  %v1204 = vld [vmem:[%s4] sm:$0xf]
  %v1205 = vld [vmem:[%s4 + $0x4] sm:$0xf]
  %v1206 = vld [vmem:[%s4 + $0x8] sm:$0xf]
  %v1207 = vld [vmem:[%s4 + $0xc] sm:$0xf]
  %v1208 = vld [vmem:[%s5] sm:$0x1]
  %v1210 = vlaneseq
  %v1211 = vshrl.u32 %v1210, 7
  %v1212 = vsub.s32 0, %v1211
  %v1213 = vrot.slane %v1208, %v1212
  %v1219 = vunpack.c.l.b16 %v1204
  %v1220 = vunpack.c.l.b16 %v1205
  %v1221 = vunpack.c.l.b16 %v1206
  %v1222 = vunpack.c.l.b16 %v1207
  %v1223 = vpack.c.b16 %v1220, %v1219
  %v1224 = vpack.c.b16 %v1222, %v1221
  %vm1227 = vcmask 261120
  %v1229 = vsel %vm1227, %v1199, 0
  %v1232 = vsel %vm1227, %v1200, 0
  %v1235 = vsel %vm1227, %v1201, 0
  %v1238 = vsel %vm1227, %v1202, 0
  %v1241 = vsel %vm1227, %v1203, 0
  %1243 = vmatprep.subr.bf16.mxu0 0
  %1244 = vmatpush1.bf16.msra.mxu0 %v1223
  %1245 = vmatprep.subr.bf16.mxu0 0
  %1246 = vmatpush1.bf16.msra.mxu0 %v1224
  %1247 = vmatprep.subr.bf16.mxu0 0
  %1248 = vmatpush1.bf16.msra.mxu0 0
  %1249 = vmatprep.subr.bf16.mxu0 0
  %1250 = vmatpush1.bf16.msra.mxu0 0
  %1251 = vmatprep.subr.bf16.mxu0 0
  %1252 = vmatpush1.bf16.msra.mxu0 0
  %1253 = vmatprep.subr.bf16.mxu0 0
  %1254 = vmatpush1.bf16.msra.mxu0 0
  %1255 = vmatprep.subr.bf16.mxu0 0
  %1256 = vmatpush1.bf16.msra.mxu0 0
  %1257 = vmatprep.subr.bf16.mxu0 0
  %1258 = vmatpush1.bf16.msra.mxu0 0
  %1259 = vmatprep.subr.bf16.mxu0 0
  %1260 = vmatpush1.bf16.msra.mxu0 0
  %1261 = vmatprep.subr.bf16.mxu0 0
  %1262 = vmatpush1.bf16.msra.mxu0 0
  %1263 = vmatprep.subr.bf16.mxu0 0
  %1264 = vmatpush1.bf16.msra.mxu0 0
  %1265 = vmatprep.subr.bf16.mxu0 0
  %1266 = vmatpush1.bf16.msra.mxu0 0
  %1267 = vmatprep.subr.bf16.mxu0 0
  %1268 = vmatpush1.bf16.msra.mxu0 0
  %1269 = vmatprep.subr.bf16.mxu0 0
  %1270 = vmatpush1.bf16.msra.mxu0 0
  %1271 = vmatprep.subr.bf16.mxu0 0
  %1272 = vmatpush1.bf16.msra.mxu0 0
  %1273 = vmatprep.subr.bf16.mxu0 0
  %1274 = vmatpush1.bf16.msra.mxu0 0
  %1275 = vmatprep.mubr.bf16.mxu0 0
  %1276 = vmatmul.mubr.bf16.gmra.mrb[0].mxu0 %v1229
  %v1277 = vpop.f32.mrb[0].mxu0
  %v1278 = vadd.f32 %v1213, %v1277
  %v1279 = vpop.f32.mrb[0].mxu0
  %v1280 = vpop.f32.mrb[0].mxu0
  %v1281 = vadd.f32 %v1213, %v1280
  %v1282 = vpop.f32.mrb[0].mxu0
  %1283 = vmatprep.mubr.bf16.mxu0 0
  %1284 = vmatmul.mubr.bf16.gmra.mrb[0].mxu0 %v1232
  %v1285 = vpop.f32.mrb[0].mxu0
  %v1286 = vadd.f32 %v1213, %v1285
  %v1287 = vpop.f32.mrb[0].mxu0
  %v1288 = vpop.f32.mrb[0].mxu0
  %v1289 = vadd.f32 %v1213, %v1288
  %v1290 = vpop.f32.mrb[0].mxu0
  %1291 = vmatprep.mubr.bf16.mxu0 0
  %1292 = vmatmul.mubr.bf16.gmra.mrb[0].mxu0 %v1235
  %v1293 = vpop.f32.mrb[0].mxu0
  %v1294 = vadd.f32 %v1213, %v1293
  %v1295 = vpop.f32.mrb[0].mxu0
  %v1296 = vpop.f32.mrb[0].mxu0
  %v1297 = vadd.f32 %v1213, %v1296
  %v1298 = vpop.f32.mrb[0].mxu0
  %1299 = vmatprep.mubr.bf16.mxu0 0
  %1300 = vmatmul.mubr.bf16.gmra.mrb[0].mxu0 %v1238
  %v1301 = vpop.f32.mrb[0].mxu0
  %v1302 = vadd.f32 %v1213, %v1301
  %v1303 = vpop.f32.mrb[0].mxu0
  %v1304 = vpop.f32.mrb[0].mxu0
  %v1305 = vadd.f32 %v1213, %v1304
  %v1306 = vpop.f32.mrb[0].mxu0
  %1307 = vmatprep.mubr.bf16.mxu0 0
  %1308 = vmatmul.mubr.bf16.gmra.mrb[0].mxu0 %v1241
  %v1309 = vpop.f32.mrb[0].mxu0
  %v1310 = vadd.f32 %v1213, %v1309
  %v1311 = vpop.f32.mrb[0].mxu0
  %v1312 = vpop.f32.mrb[0].mxu0
  %v1313 = vpop.f32.mrb[0].mxu0
  %1314 = vdwg.mxu0
  %v1315 = vld [vmem:[%s2] sm:$0xff]
  %v1316 = vld [vmem:[%s2 + $0x8] sm:$0xff]
  %v1317 = vld [vmem:[%s2 + $0x10] sm:$0xff]
  %v1318 = vld [vmem:[%s2 + $0x18] sm:$0xff]
  %v1319 = vld [vmem:[%s2 + $0x20] sm:$0xff]
  %v1320 = vld [vmem:[%s2 + $0x28] sm:$0xff]
  %v1321 = vld [vmem:[%s2 + $0x30] sm:$0xff]
  %v1322 = vld [vmem:[%s2 + $0x38] sm:$0xff]
  %v1323 = vld [vmem:[%s2 + $0x40] sm:$0xff]
  %v1324 = vadd.f32 %v1315, %v1278
  %v1325 = vadd.f32 %v1316, %v1281
  %v1326 = vadd.f32 %v1317, %v1286
  %v1327 = vadd.f32 %v1318, %v1289
  %v1328 = vadd.f32 %v1319, %v1294
  %v1329 = vadd.f32 %v1320, %v1297
  %v1330 = vadd.f32 %v1321, %v1302
  %v1331 = vadd.f32 %v1322, %v1305
  %v1332 = vadd.f32 %v1323, %v1310
  %v1333 = vsel %vm1227, %v1324, 0.0
  %1334 = vadd.xlane.f32.xlu0 %v1333
  %v1335 = vpop.xlane.xlu0 %1334
  %v1336 = vsel %vm1227, %v1325, 0.0
  %1337 = vadd.xlane.f32.xlu0 %v1336
  %v1338 = vpop.xlane.xlu0 %1337
  %v1339 = vsel %vm1227, %v1326, 0.0
  %1340 = vadd.xlane.f32.xlu0 %v1339
  %v1341 = vpop.xlane.xlu0 %1340
  %v1342 = vsel %vm1227, %v1327, 0.0
  %1343 = vadd.xlane.f32.xlu0 %v1342
  %v1344 = vpop.xlane.xlu0 %1343
  %v1345 = vsel %vm1227, %v1328, 0.0
  %1346 = vadd.xlane.f32.xlu0 %v1345
  %v1347 = vpop.xlane.xlu0 %1346
  %v1348 = vsel %vm1227, %v1329, 0.0
  %1349 = vadd.xlane.f32.xlu0 %v1348
  %v1350 = vpop.xlane.xlu0 %1349
  %v1351 = vsel %vm1227, %v1330, 0.0
  %1352 = vadd.xlane.f32.xlu0 %v1351
  %v1353 = vpop.xlane.xlu0 %1352
  %v1354 = vsel %vm1227, %v1331, 0.0
  %1355 = vadd.xlane.f32.xlu0 %v1354
  %v1356 = vpop.xlane.xlu0 %1355
  %v1357 = vsel %vm1227, %v1332, 0.0
  %1358 = vadd.xlane.f32.xlu0 %v1357
  %v1359 = vpop.xlane.xlu0 %1358
  %v1360 = vrcp.pop 32.0
  %v1361 = vmul.f32 %v1335, %v1360
  %v1362 = vmul.f32 %v1338, %v1360
  %v1363 = vmul.f32 %v1341, %v1360
  %v1364 = vmul.f32 %v1344, %v1360
  %v1365 = vmul.f32 %v1347, %v1360
  %v1366 = vmul.f32 %v1350, %v1360
  %v1367 = vmul.f32 %v1353, %v1360
  %v1368 = vmul.f32 %v1356, %v1360
  %v1369 = vmul.f32 %v1359, %v1360
  %v1370 = vsub.f32 %v1324, %v1361
  %v1371 = vsub.f32 %v1325, %v1362
  %v1372 = vsub.f32 %v1326, %v1363
  %v1373 = vsub.f32 %v1327, %v1364
  %v1374 = vsub.f32 %v1328, %v1365
  %v1375 = vsub.f32 %v1329, %v1366
  %v1376 = vsub.f32 %v1330, %v1367
  %v1377 = vsub.f32 %v1331, %v1368
  %v1378 = vsub.f32 %v1332, %v1369
  %v1379 = vmul.f32 %v1370, %v1370
  %v1380 = vmul.f32 %v1371, %v1371
  %v1381 = vmul.f32 %v1372, %v1372
  %v1382 = vmul.f32 %v1373, %v1373
  %v1383 = vmul.f32 %v1374, %v1374
  %v1384 = vmul.f32 %v1375, %v1375
  %v1385 = vmul.f32 %v1376, %v1376
  %v1386 = vmul.f32 %v1377, %v1377
  %v1387 = vmul.f32 %v1378, %v1378
  %v1388 = vsel %vm1227, %v1379, 0.0
  %1389 = vadd.xlane.f32.xlu0 %v1388
  %v1390 = vpop.xlane.xlu0 %1389
  %v1391 = vsel %vm1227, %v1380, 0.0
  %1392 = vadd.xlane.f32.xlu0 %v1391
  %v1393 = vpop.xlane.xlu0 %1392
  %v1394 = vsel %vm1227, %v1381, 0.0
  %1395 = vadd.xlane.f32.xlu0 %v1394
  %v1396 = vpop.xlane.xlu0 %1395
  %v1397 = vsel %vm1227, %v1382, 0.0
  %1398 = vadd.xlane.f32.xlu0 %v1397
  %v1399 = vpop.xlane.xlu0 %1398
  %v1400 = vsel %vm1227, %v1383, 0.0
  %1401 = vadd.xlane.f32.xlu0 %v1400
  %v1402 = vpop.xlane.xlu0 %1401
  %v1403 = vsel %vm1227, %v1384, 0.0
  %1404 = vadd.xlane.f32.xlu0 %v1403
  %v1405 = vpop.xlane.xlu0 %1404
  %v1406 = vsel %vm1227, %v1385, 0.0
  %1407 = vadd.xlane.f32.xlu0 %v1406
  %v1408 = vpop.xlane.xlu0 %1407
  %v1409 = vsel %vm1227, %v1386, 0.0
  %1410 = vadd.xlane.f32.xlu0 %v1409
  %v1411 = vpop.xlane.xlu0 %1410
  %v1412 = vsel %vm1227, %v1387, 0.0
  %1413 = vadd.xlane.f32.xlu0 %v1412
  %v1414 = vpop.xlane.xlu0 %1413
  %v1415 = vmul.f32 %v1390, %v1360
  %v1416 = vmul.f32 %v1393, %v1360
  %v1417 = vmul.f32 %v1396, %v1360
  %v1418 = vmul.f32 %v1399, %v1360
  %v1419 = vmul.f32 %v1402, %v1360
  %v1420 = vmul.f32 %v1405, %v1360
  %v1421 = vmul.f32 %v1408, %v1360
  %v1422 = vmul.f32 %v1411, %v1360
  %v1423 = vmul.f32 %v1414, %v1360
  %v1424 = vadd.f32 %v1415, 1e-05
  %v1425 = vadd.f32 %v1416, 1e-05
  %v1426 = vadd.f32 %v1417, 1e-05
  %v1427 = vadd.f32 %v1418, 1e-05
  %v1428 = vadd.f32 %v1419, 1e-05
  %v1429 = vadd.f32 %v1420, 1e-05
  %v1430 = vadd.f32 %v1421, 1e-05
  %v1431 = vadd.f32 %v1422, 1e-05
  %v1432 = vadd.f32 %v1423, 1e-05
  %v1433 = vrsqrt.pop %v1424
  %v1434 = vrsqrt.pop %v1425
  %v1435 = vrsqrt.pop %v1426
  %v1436 = vrsqrt.pop %v1427
  %v1437 = vrsqrt.pop %v1428
  %v1438 = vrsqrt.pop %v1429
  %v1439 = vrsqrt.pop %v1430
  %v1440 = vrsqrt.pop %v1431
  %v1441 = vrsqrt.pop %v1432
  %v1442 = vmul.f32 %v1370, %v1433
  %v1443 = vmul.f32 %v1371, %v1434
  %v1444 = vmul.f32 %v1372, %v1435
  %v1445 = vmul.f32 %v1373, %v1436
  %v1446 = vmul.f32 %v1374, %v1437
  %v1447 = vmul.f32 %v1375, %v1438
  %v1448 = vmul.f32 %v1376, %v1439
  %v1449 = vmul.f32 %v1377, %v1440
  %v1450 = vmul.f32 %v1378, %v1441
  %v1451 = vld [vmem:[%s6] sm:$0x1]
  %v1453 = vlaneseq
  %v1454 = vshrl.u32 %v1453, 7
  %v1455 = vsub.s32 0, %v1454
  %v1456 = vrot.slane %v1451, %v1455
  %v1458 = vmul.f32 %v1442, %v1456
  %v1459 = vmul.f32 %v1443, %v1456
  %v1460 = vmul.f32 %v1444, %v1456
  %v1461 = vmul.f32 %v1445, %v1456
  %v1462 = vmul.f32 %v1446, %v1456
  %v1463 = vmul.f32 %v1447, %v1456
  %v1464 = vmul.f32 %v1448, %v1456
  %v1465 = vmul.f32 %v1449, %v1456
  %v1466 = vmul.f32 %v1450, %v1456
  %v1467 = vld [vmem:[%s7] sm:$0x1]
  %v1469 = vlaneseq
  %v1470 = vshrl.u32 %v1469, 7
  %v1471 = vsub.s32 0, %v1470
  %v1472 = vrot.slane %v1467, %v1471
  %v1474 = vadd.f32 %v1458, %v1472
  %v1475 = vadd.f32 %v1459, %v1472
  %v1476 = vadd.f32 %v1460, %v1472
  %v1477 = vadd.f32 %v1461, %v1472
  %v1478 = vadd.f32 %v1462, %v1472
  %v1479 = vadd.f32 %v1463, %v1472
  %v1480 = vadd.f32 %v1464, %v1472
  %v1481 = vadd.f32 %v1465, %v1472
  %v1482 = vadd.f32 %v1466, %v1472
  %v1483 = vpack.c.bf16 %v1475, %v1474
  %v1484 = vpack.c.bf16 %v1477, %v1476
  %v1485 = vpack.c.bf16 %v1479, %v1478
  %v1486 = vpack.c.bf16 %v1481, %v1480
  %v1487 = vpack.c.bf16 %v1482, %v1482
  %v1488 = vld [vmem:[%s8] sm:$0xf]
  %v1489 = vld [vmem:[%s8 + $0x4] sm:$0xf]
  %v1490 = vld [vmem:[%s8 + $0x8] sm:$0xf]
  %v1491 = vld [vmem:[%s8 + $0xc] sm:$0xf]
  %v1492 = vld [vmem:[%s9] sm:$0x1]
  %v1494 = vlaneseq
  %v1495 = vshrl.u32 %v1494, 7
  %v1496 = vsub.s32 0, %v1495
  %v1497 = vrot.slane %v1492, %v1496
  %v1503 = vunpack.c.l.b16 %v1488
  %v1504 = vunpack.c.l.b16 %v1489
  %v1505 = vunpack.c.l.b16 %v1490
  %v1506 = vunpack.c.l.b16 %v1491
  %v1507 = vpack.c.b16 %v1504, %v1503
  %v1508 = vpack.c.b16 %v1506, %v1505
  %v1512 = vsel %vm1227, %v1483, 0
  %v1515 = vsel %vm1227, %v1484, 0
  %v1518 = vsel %vm1227, %v1485, 0
  %v1521 = vsel %vm1227, %v1486, 0
  %v1524 = vsel %vm1227, %v1487, 0
  %1526 = vmatprep.subr.bf16.mxu0 0
  %1527 = vmatpush1.bf16.msra.mxu0 %v1507
  %1528 = vmatprep.subr.bf16.mxu0 0
  %1529 = vmatpush1.bf16.msra.mxu0 %v1508
  %1530 = vmatprep.subr.bf16.mxu0 0
  %1531 = vmatpush1.bf16.msra.mxu0 0
  %1532 = vmatprep.subr.bf16.mxu0 0
  %1533 = vmatpush1.bf16.msra.mxu0 0
  %1534 = vmatprep.subr.bf16.mxu0 0
  %1535 = vmatpush1.bf16.msra.mxu0 0
  %1536 = vmatprep.subr.bf16.mxu0 0
  %1537 = vmatpush1.bf16.msra.mxu0 0
  %1538 = vmatprep.subr.bf16.mxu0 0
  %1539 = vmatpush1.bf16.msra.mxu0 0
  %1540 = vmatprep.subr.bf16.mxu0 0
  %1541 = vmatpush1.bf16.msra.mxu0 0
  %1542 = vmatprep.subr.bf16.mxu0 0
  %1543 = vmatpush1.bf16.msra.mxu0 0
  %1544 = vmatprep.subr.bf16.mxu0 0
  %1545 = vmatpush1.bf16.msra.mxu0 0
  %1546 = vmatprep.subr.bf16.mxu0 0
  %1547 = vmatpush1.bf16.msra.mxu0 0
  %1548 = vmatprep.subr.bf16.mxu0 0
  %1549 = vmatpush1.bf16.msra.mxu0 0
  %1550 = vmatprep.subr.bf16.mxu0 0
  %1551 = vmatpush1.bf16.msra.mxu0 0
  %1552 = vmatprep.subr.bf16.mxu0 0
  %1553 = vmatpush1.bf16.msra.mxu0 0
  %1554 = vmatprep.subr.bf16.mxu0 0
  %1555 = vmatpush1.bf16.msra.mxu0 0
  %1556 = vmatprep.subr.bf16.mxu0 0
  %1557 = vmatpush1.bf16.msra.mxu0 0
  %1558 = vmatprep.mubr.bf16.mxu0 0
  %1559 = vmatmul.mubr.bf16.gmra.mrb[0].mxu0 %v1512
  %v1560 = vpop.f32.mrb[0].mxu0
  %v1561 = vadd.f32 %v1497, %v1560
  %v1562 = vpop.f32.mrb[0].mxu0
  %v1563 = vpop.f32.mrb[0].mxu0
  %v1564 = vadd.f32 %v1497, %v1563
  %v1565 = vpop.f32.mrb[0].mxu0
  %1566 = vmatprep.mubr.bf16.mxu0 0
  %1567 = vmatmul.mubr.bf16.gmra.mrb[0].mxu0 %v1515
  %v1568 = vpop.f32.mrb[0].mxu0
  %v1569 = vadd.f32 %v1497, %v1568
  %v1570 = vpop.f32.mrb[0].mxu0
  %v1571 = vpop.f32.mrb[0].mxu0
  %v1572 = vadd.f32 %v1497, %v1571
  %v1573 = vpop.f32.mrb[0].mxu0
  %1574 = vmatprep.mubr.bf16.mxu0 0
  %1575 = vmatmul.mubr.bf16.gmra.mrb[0].mxu0 %v1518
  %v1576 = vpop.f32.mrb[0].mxu0
  %v1577 = vadd.f32 %v1497, %v1576
  %v1578 = vpop.f32.mrb[0].mxu0
  %v1579 = vpop.f32.mrb[0].mxu0
  %v1580 = vadd.f32 %v1497, %v1579
  %v1581 = vpop.f32.mrb[0].mxu0
  %1582 = vmatprep.mubr.bf16.mxu0 0
  %1583 = vmatmul.mubr.bf16.gmra.mrb[0].mxu0 %v1521
  %v1584 = vpop.f32.mrb[0].mxu0
  %v1585 = vadd.f32 %v1497, %v1584
  %v1586 = vpop.f32.mrb[0].mxu0
  %v1587 = vpop.f32.mrb[0].mxu0
  %v1588 = vadd.f32 %v1497, %v1587
  %v1589 = vpop.f32.mrb[0].mxu0
  %1590 = vmatprep.mubr.bf16.mxu0 0
  %1591 = vmatmul.mubr.bf16.gmra.mrb[0].mxu0 %v1524
  %v1592 = vpop.f32.mrb[0].mxu0
  %v1593 = vadd.f32 %v1497, %v1592
  %v1594 = vpop.f32.mrb[0].mxu0
  %v1595 = vpop.f32.mrb[0].mxu0
  %v1596 = vpop.f32.mrb[0].mxu0
  %1597 = vdwg.mxu0
  %v1598 = vmax.f32 %v1561, 0.0
  %v1599 = vmax.f32 %v1564, 0.0
  %v1600 = vmax.f32 %v1569, 0.0
  %v1601 = vmax.f32 %v1572, 0.0
  %v1602 = vmax.f32 %v1577, 0.0
  %v1603 = vmax.f32 %v1580, 0.0
  %v1604 = vmax.f32 %v1585, 0.0
  %v1605 = vmax.f32 %v1588, 0.0
  %v1606 = vmax.f32 %v1593, 0.0
  %v1607 = vpack.c.bf16 %v1599, %v1598
  %v1608 = vpack.c.bf16 %v1601, %v1600
  %v1609 = vpack.c.bf16 %v1603, %v1602
  %v1610 = vpack.c.bf16 %v1605, %v1604
  %v1611 = vpack.c.bf16 %v1606, %v1606
  %v1612 = vld [vmem:[%s10] sm:$0xf]
  %v1613 = vld [vmem:[%s10 + $0x4] sm:$0xf]
  %v1614 = vld [vmem:[%s10 + $0x8] sm:$0xf]
  %v1615 = vld [vmem:[%s10 + $0xc] sm:$0xf]
  %v1616 = vld [vmem:[%s10 + $0x10] sm:$0xf]
  %v1617 = vld [vmem:[%s10 + $0x14] sm:$0xf]
  %v1618 = vld [vmem:[%s10 + $0x18] sm:$0xf]
  %v1619 = vld [vmem:[%s10 + $0x1c] sm:$0xf]
  %v1620 = vld [vmem:[%s11] sm:$0x1]
  %v1622 = vlaneseq
  %v1623 = vshrl.u32 %v1622, 7
  %v1624 = vsub.s32 0, %v1623
  %v1625 = vrot.slane %v1620, %v1624
  %v1635 = vunpack.c.l.b16 %v1612
  %v1636 = vunpack.c.l.b16 %v1613
  %v1637 = vunpack.c.l.b16 %v1614
  %v1638 = vunpack.c.l.b16 %v1615
  %v1639 = vunpack.c.l.b16 %v1616
  %v1640 = vunpack.c.l.b16 %v1617
  %v1641 = vunpack.c.l.b16 %v1618
  %v1642 = vunpack.c.l.b16 %v1619
  %v1643 = vpack.c.b16 %v1636, %v1635
  %v1644 = vpack.c.b16 %v1638, %v1637
  %v1645 = vpack.c.b16 %v1640, %v1639
  %v1646 = vpack.c.b16 %v1642, %v1641
  %vm1651 = vcmask 523264
  %v1653 = vsel %vm1651, %v1607, 0
  %v1656 = vsel %vm1651, %v1608, 0
  %v1659 = vsel %vm1651, %v1609, 0
  %v1662 = vsel %vm1651, %v1610, 0
  %v1665 = vsel %vm1651, %v1611, 0
  %1667 = vmatprep.subr.bf16.mxu0 0
  %1668 = vmatpush1.bf16.msra.mxu0 %v1643
  %1669 = vmatprep.subr.bf16.mxu0 0
  %1670 = vmatpush1.bf16.msra.mxu0 %v1644
  %1671 = vmatprep.subr.bf16.mxu0 0
  %1672 = vmatpush1.bf16.msra.mxu0 %v1645
  %1673 = vmatprep.subr.bf16.mxu0 0
  %1674 = vmatpush1.bf16.msra.mxu0 %v1646
  %1675 = vmatprep.subr.bf16.mxu0 0
  %1676 = vmatpush1.bf16.msra.mxu0 0
  %1677 = vmatprep.subr.bf16.mxu0 0
  %1678 = vmatpush1.bf16.msra.mxu0 0
  %1679 = vmatprep.subr.bf16.mxu0 0
  %1680 = vmatpush1.bf16.msra.mxu0 0
  %1681 = vmatprep.subr.bf16.mxu0 0
  %1682 = vmatpush1.bf16.msra.mxu0 0
  %1683 = vmatprep.subr.bf16.mxu0 0
  %1684 = vmatpush1.bf16.msra.mxu0 0
  %1685 = vmatprep.subr.bf16.mxu0 0
  %1686 = vmatpush1.bf16.msra.mxu0 0
  %1687 = vmatprep.subr.bf16.mxu0 0
  %1688 = vmatpush1.bf16.msra.mxu0 0
  %1689 = vmatprep.subr.bf16.mxu0 0
  %1690 = vmatpush1.bf16.msra.mxu0 0
  %1691 = vmatprep.subr.bf16.mxu0 0
  %1692 = vmatpush1.bf16.msra.mxu0 0
  %1693 = vmatprep.subr.bf16.mxu0 0
  %1694 = vmatpush1.bf16.msra.mxu0 0
  %1695 = vmatprep.subr.bf16.mxu0 0
  %1696 = vmatpush1.bf16.msra.mxu0 0
  %1697 = vmatprep.subr.bf16.mxu0 0
  %1698 = vmatpush1.bf16.msra.mxu0 0
  %1699 = vmatprep.mubr.bf16.mxu0 0
  %1700 = vmatmul.mubr.bf16.gmra.mrb[0].mxu0 %v1653
  %v1701 = vpop.f32.mrb[0].mxu0
  %v1702 = vadd.f32 %v1625, %v1701
  %v1703 = vpop.f32.mrb[0].mxu0
  %v1704 = vpop.f32.mrb[0].mxu0
  %v1705 = vadd.f32 %v1625, %v1704
  %v1706 = vpop.f32.mrb[0].mxu0
  %1707 = vmatprep.mubr.bf16.mxu0 0
  %1708 = vmatmul.mubr.bf16.gmra.mrb[0].mxu0 %v1656
  %v1709 = vpop.f32.mrb[0].mxu0
  %v1710 = vadd.f32 %v1625, %v1709
  %v1711 = vpop.f32.mrb[0].mxu0
  %v1712 = vpop.f32.mrb[0].mxu0
  %v1713 = vadd.f32 %v1625, %v1712
  %v1714 = vpop.f32.mrb[0].mxu0
  %1715 = vmatprep.mubr.bf16.mxu0 0
  %1716 = vmatmul.mubr.bf16.gmra.mrb[0].mxu0 %v1659
  %v1717 = vpop.f32.mrb[0].mxu0
  %v1718 = vadd.f32 %v1625, %v1717
  %v1719 = vpop.f32.mrb[0].mxu0
  %v1720 = vpop.f32.mrb[0].mxu0
  %v1721 = vadd.f32 %v1625, %v1720
  %v1722 = vpop.f32.mrb[0].mxu0
  %1723 = vmatprep.mubr.bf16.mxu0 0
  %1724 = vmatmul.mubr.bf16.gmra.mrb[0].mxu0 %v1662
  %v1725 = vpop.f32.mrb[0].mxu0
  %v1726 = vadd.f32 %v1625, %v1725
  %v1727 = vpop.f32.mrb[0].mxu0
  %v1728 = vpop.f32.mrb[0].mxu0
  %v1729 = vadd.f32 %v1625, %v1728
  %v1730 = vpop.f32.mrb[0].mxu0
  %1731 = vmatprep.mubr.bf16.mxu0 0
  %1732 = vmatmul.mubr.bf16.gmra.mrb[0].mxu0 %v1665
  %v1733 = vpop.f32.mrb[0].mxu0
  %v1734 = vadd.f32 %v1625, %v1733
  %v1735 = vpop.f32.mrb[0].mxu0
  %v1736 = vpop.f32.mrb[0].mxu0
  %v1737 = vpop.f32.mrb[0].mxu0
  %1738 = vdwg.mxu0
  %v1739 = vadd.f32 %v1474, %v1702
  %v1740 = vadd.f32 %v1475, %v1705
  %v1741 = vadd.f32 %v1476, %v1710
  %v1742 = vadd.f32 %v1477, %v1713
  %v1743 = vadd.f32 %v1478, %v1718
  %v1744 = vadd.f32 %v1479, %v1721
  %v1745 = vadd.f32 %v1480, %v1726
  %v1746 = vadd.f32 %v1481, %v1729
  %v1747 = vadd.f32 %v1482, %v1734
  %v1748 = vsel %vm1227, %v1739, 0.0
  %1749 = vadd.xlane.f32.xlu0 %v1748
  %v1750 = vpop.xlane.xlu0 %1749
  %v1751 = vsel %vm1227, %v1740, 0.0
  %1752 = vadd.xlane.f32.xlu0 %v1751
  %v1753 = vpop.xlane.xlu0 %1752
  %v1754 = vsel %vm1227, %v1741, 0.0
  %1755 = vadd.xlane.f32.xlu0 %v1754
  %v1756 = vpop.xlane.xlu0 %1755
  %v1757 = vsel %vm1227, %v1742, 0.0
  %1758 = vadd.xlane.f32.xlu0 %v1757
  %v1759 = vpop.xlane.xlu0 %1758
  %v1760 = vsel %vm1227, %v1743, 0.0
  %1761 = vadd.xlane.f32.xlu0 %v1760
  %v1762 = vpop.xlane.xlu0 %1761
  %v1763 = vsel %vm1227, %v1744, 0.0
  %1764 = vadd.xlane.f32.xlu0 %v1763
  %v1765 = vpop.xlane.xlu0 %1764
  %v1766 = vsel %vm1227, %v1745, 0.0
  %1767 = vadd.xlane.f32.xlu0 %v1766
  %v1768 = vpop.xlane.xlu0 %1767
  %v1769 = vsel %vm1227, %v1746, 0.0
  %1770 = vadd.xlane.f32.xlu0 %v1769
  %v1771 = vpop.xlane.xlu0 %1770
  %v1772 = vsel %vm1227, %v1747, 0.0
  %1773 = vadd.xlane.f32.xlu0 %v1772
  %v1774 = vpop.xlane.xlu0 %1773
  %v1775 = vmul.f32 %v1750, %v1360
  %v1776 = vmul.f32 %v1753, %v1360
  %v1777 = vmul.f32 %v1756, %v1360
  %v1778 = vmul.f32 %v1759, %v1360
  %v1779 = vmul.f32 %v1762, %v1360
  %v1780 = vmul.f32 %v1765, %v1360
  %v1781 = vmul.f32 %v1768, %v1360
  %v1782 = vmul.f32 %v1771, %v1360
  %v1783 = vmul.f32 %v1774, %v1360
  %v1784 = vsub.f32 %v1739, %v1775
  %v1785 = vsub.f32 %v1740, %v1776
  %v1786 = vsub.f32 %v1741, %v1777
  %v1787 = vsub.f32 %v1742, %v1778
  %v1788 = vsub.f32 %v1743, %v1779
  %v1789 = vsub.f32 %v1744, %v1780
  %v1790 = vsub.f32 %v1745, %v1781
  %v1791 = vsub.f32 %v1746, %v1782
  %v1792 = vsub.f32 %v1747, %v1783
  %v1793 = vmul.f32 %v1784, %v1784
  %v1794 = vmul.f32 %v1785, %v1785
  %v1795 = vmul.f32 %v1786, %v1786
  %v1796 = vmul.f32 %v1787, %v1787
  %v1797 = vmul.f32 %v1788, %v1788
  %v1798 = vmul.f32 %v1789, %v1789
  %v1799 = vmul.f32 %v1790, %v1790
  %v1800 = vmul.f32 %v1791, %v1791
  %v1801 = vmul.f32 %v1792, %v1792
  %v1802 = vsel %vm1227, %v1793, 0.0
  %1803 = vadd.xlane.f32.xlu0 %v1802
  %v1804 = vpop.xlane.xlu0 %1803
  %v1805 = vsel %vm1227, %v1794, 0.0
  %1806 = vadd.xlane.f32.xlu0 %v1805
  %v1807 = vpop.xlane.xlu0 %1806
  %v1808 = vsel %vm1227, %v1795, 0.0
  %1809 = vadd.xlane.f32.xlu0 %v1808
  %v1810 = vpop.xlane.xlu0 %1809
  %v1811 = vsel %vm1227, %v1796, 0.0
  %1812 = vadd.xlane.f32.xlu0 %v1811
  %v1813 = vpop.xlane.xlu0 %1812
  %v1814 = vsel %vm1227, %v1797, 0.0
  %1815 = vadd.xlane.f32.xlu0 %v1814
  %v1816 = vpop.xlane.xlu0 %1815
  %v1817 = vsel %vm1227, %v1798, 0.0
  %1818 = vadd.xlane.f32.xlu0 %v1817
  %v1819 = vpop.xlane.xlu0 %1818
  %v1820 = vsel %vm1227, %v1799, 0.0
  %1821 = vadd.xlane.f32.xlu0 %v1820
  %v1822 = vpop.xlane.xlu0 %1821
  %v1823 = vsel %vm1227, %v1800, 0.0
  %1824 = vadd.xlane.f32.xlu0 %v1823
  %v1825 = vpop.xlane.xlu0 %1824
  %v1826 = vsel %vm1227, %v1801, 0.0
  %1827 = vadd.xlane.f32.xlu0 %v1826
  %v1828 = vpop.xlane.xlu0 %1827
  %v1829 = vmul.f32 %v1804, %v1360
  %v1830 = vmul.f32 %v1807, %v1360
  %v1831 = vmul.f32 %v1810, %v1360
  %v1832 = vmul.f32 %v1813, %v1360
  %v1833 = vmul.f32 %v1816, %v1360
  %v1834 = vmul.f32 %v1819, %v1360
  %v1835 = vmul.f32 %v1822, %v1360
  %v1836 = vmul.f32 %v1825, %v1360
  %v1837 = vmul.f32 %v1828, %v1360
  %v1838 = vadd.f32 %v1829, 1e-05
  %v1839 = vadd.f32 %v1830, 1e-05
  %v1840 = vadd.f32 %v1831, 1e-05
  %v1841 = vadd.f32 %v1832, 1e-05
  %v1842 = vadd.f32 %v1833, 1e-05
  %v1843 = vadd.f32 %v1834, 1e-05
  %v1844 = vadd.f32 %v1835, 1e-05
  %v1845 = vadd.f32 %v1836, 1e-05
  %v1846 = vadd.f32 %v1837, 1e-05
  %v1847 = vrsqrt.pop %v1838
  %v1848 = vrsqrt.pop %v1839
  %v1849 = vrsqrt.pop %v1840
  %v1850 = vrsqrt.pop %v1841
  %v1851 = vrsqrt.pop %v1842
  %v1852 = vrsqrt.pop %v1843
  %v1853 = vrsqrt.pop %v1844
  %v1854 = vrsqrt.pop %v1845
  %v1855 = vrsqrt.pop %v1846
  %v1856 = vmul.f32 %v1784, %v1847
  %v1857 = vmul.f32 %v1785, %v1848
  %v1858 = vmul.f32 %v1786, %v1849
  %v1859 = vmul.f32 %v1787, %v1850
  %v1860 = vmul.f32 %v1788, %v1851
  %v1861 = vmul.f32 %v1789, %v1852
  %v1862 = vmul.f32 %v1790, %v1853
  %v1863 = vmul.f32 %v1791, %v1854
  %v1864 = vmul.f32 %v1792, %v1855
  %v1865 = vld [vmem:[%s12] sm:$0x1]
  %v1867 = vlaneseq
  %v1868 = vshrl.u32 %v1867, 7
  %v1869 = vsub.s32 0, %v1868
  %v1870 = vrot.slane %v1865, %v1869
  %v1872 = vmul.f32 %v1856, %v1870
  %v1873 = vmul.f32 %v1857, %v1870
  %v1874 = vmul.f32 %v1858, %v1870
  %v1875 = vmul.f32 %v1859, %v1870
  %v1876 = vmul.f32 %v1860, %v1870
  %v1877 = vmul.f32 %v1861, %v1870
  %v1878 = vmul.f32 %v1862, %v1870
  %v1879 = vmul.f32 %v1863, %v1870
  %v1880 = vmul.f32 %v1864, %v1870
  %v1881 = vld [vmem:[%s13] sm:$0x1]
  %v1883 = vlaneseq
  %v1884 = vshrl.u32 %v1883, 7
  %v1885 = vsub.s32 0, %v1884
  %v1886 = vrot.slane %v1881, %v1885
  %v1888 = vadd.f32 %v1872, %v1886
  %v1889 = vadd.f32 %v1873, %v1886
  %v1890 = vadd.f32 %v1874, %v1886
  %v1891 = vadd.f32 %v1875, %v1886
  %v1892 = vadd.f32 %v1876, %v1886
  %v1893 = vadd.f32 %v1877, %v1886
  %v1894 = vadd.f32 %v1878, %v1886
  %v1895 = vadd.f32 %v1879, %v1886
  %v1896 = vadd.f32 %v1880, %v1886
  %1897 = vst.msk [vmem:[%s14] sm:$0xff] %vm1227, %v1888
  %1898 = vst.msk [vmem:[%s14 + $0x8] sm:$0xff] %vm1227, %v1889
  %1899 = vst.msk [vmem:[%s14 + $0x10] sm:$0xff] %vm1227, %v1890
  %1900 = vst.msk [vmem:[%s14 + $0x18] sm:$0xff] %vm1227, %v1891
  %1901 = vst.msk [vmem:[%s14 + $0x20] sm:$0xff] %vm1227, %v1892
  %1902 = vst.msk [vmem:[%s14 + $0x28] sm:$0xff] %vm1227, %v1893
  %1903 = vst.msk [vmem:[%s14 + $0x30] sm:$0xff] %vm1227, %v1894
  %1904 = vst.msk [vmem:[%s14 + $0x38] sm:$0xff] %vm1227, %v1895
  %1905 = vst.msk [vmem:[%s14 + $0x40] sm:$0xff] %vm1227, %v1896
  // Predicated region
  $region58: #{deformable_transformer_encoder_forward.5} parent=0 // pred_check
    _
  $region59: #{deformable_transformer_encoder_forward.5} parent=0 // pred_check_branch
    %1907 = sbr.rel (0) target = $region61
  $region60: #{deformable_transformer_encoder_forward.5} parent=0 // pred_region
    _
  $region61: #{deformable_transformer_encoder_forward.5} parent=0 // pred_fallthru
    _
  // Predicated region
  $region62: #{deformable_transformer_encoder_forward.5} parent=0 // pred_check
    _
  $region63: #{deformable_transformer_encoder_forward.5} parent=0 // pred_check_branch
    %1909 = sbr.rel (0) target = $region65
  $region64: #{deformable_transformer_encoder_forward.5} parent=0 // pred_region
    _
  $region65: #{deformable_transformer_encoder_forward.5} parent=0 // pred_fallthru
    _

</llo_original>
